<compile_context>
chip_gen: v5e
topology: v5e:2x2
jax: 0.10.0
libtpu: 0.0.40
codegen_flags: <defaults>
</compile_context>

<pallas_src>
import numpy as np
import jax
import jax.numpy as jnp
from jax.experimental import pallas as pl
from jax.experimental.pallas import tpu as pltpu

# GANArgs in the source is empty; use the canonical DCGAN-32 discriminator:
# nc=3 input channels, ndf=8, 32x32 input, output (N, 1, 1, 1).
NC, NDF = 3, 8
BN_EPS = 1e-5
SLOPE = 0.2

# Layer geometry:
#   L1: conv(3  ->  8, k4 s2 p3): 32 -> 18, LeakyReLU
#   L2: conv(8  -> 16, k4 s2 p1): 18 ->  9, BatchNorm + LeakyReLU
#   L3: conv(16 -> 32, k4 s2 p1):  9 ->  4, BatchNorm + LeakyReLU
#   L4: conv(32 ->  1, k4 s1 p0):  4 ->  1, Sigmoid
H1, P1 = 32, 3
O1, O2, O3 = 18, 9, 4
C1, C2, C3, C4 = NC, NDF, NDF * 2, NDF * 4          # 3, 8, 16, 32

# Per-spatial-row storage pitch, lane-aligned: round_up(W*C, 128).
PITCH1 = 128      # 32*3  = 96
PITCH2 = 256      # 18*8  = 144
PITCH3 = 256      # 9*16  = 144
PITCH4 = 128      # 4*32  = 128
# Row-pair layout: one stored row = two consecutive zero-padded spatial rows,
# so every stride-2 k=4 window is exactly two consecutive stored rows.
HPP1 = 19         # (32 + 2*3) / 2
HPP2 = 10         # (18 + 2*1) / 2
HPP3 = 6          # (9 + 1 + 2) / 2  (one extra zero row to keep it even)
COUT_PAD = 128    # lane-dense padding of the final Cout (=1)


# ---------------------------------------------------------------------------
# The single fused Pallas kernel
# ---------------------------------------------------------------------------
def _disc_kernel(x_ref, w1_ref, w2_ref, w3_ref, w4_ref,
                 g2_ref, b2_ref, g3_ref, b3_ref, bc2_ref, bc3_ref,
                 o_ref, a2_ref, a3_ref):
    f32 = jnp.float32
    nb = o_ref.shape[0]

    def lrelu(v):
        return jnp.maximum(v, SLOPE * v)

    # Rows never written below double as the convs' vertical zero padding.
    a2_ref[...] = jnp.zeros_like(a2_ref)
    a3_ref[...] = jnp.zeros_like(a3_ref)

    def build_lhs(src_ref, hpp, o):
        """im2col for a k=4 s=2 conv in the row-pair layout.

        Stored row q holds padded spatial rows (2q, 2q+1), so the window of
        output row oh (padded rows 2oh..2oh+3) is stored rows (oh, oh+1):
        two contiguous lane-aligned block slices per sample, concatenated
        along lanes.  Result: (nb*o, 4*pitch)."""
        parts = []
        for n in range(nb):
            r0 = n * hpp
            top = src_ref[r0:r0 + o, :]               # stored rows oh
            bot = src_ref[r0 + 1:r0 + 1 + o, :]       # stored rows oh + 1
            parts.append(jnp.concatenate([top, bot], axis=1))
        return jnp.concatenate(parts, axis=0)

    def store_paired(dst_ref, z, hpp_out, o, pitch_out):
        """Write conv output rows z (nb*o, pitch_out) into the consumer's
        row-pair, vertically zero-padded (pad=1) layout: stored row q holds
        [output row 2q-1 | output row 2q], zeros at the boundaries.  Every
        store is a single full-lane-width row write."""
        zero = jnp.zeros((1, pitch_out), f32)
        for n in range(nb):
            for q in range((o + 2) // 2):
                lo = zero if q == 0 else z[n * o + 2 * q - 1:n * o + 2 * q, :]
                hi = (z[n * o + 2 * q:n * o + 2 * q + 1, :]
                      if 2 * q < o else zero)
                r = n * hpp_out + q
                dst_ref[r:r + 1, :] = jnp.concatenate([lo, hi], axis=1)

    def batchnorm(z, g_ref, b_ref, bc_ref, count):
        """Training-mode BatchNorm (biased variance) on the conv-output value.

        bc (C, PITCH) is 1 at lane ow*C + c for valid ow, else 0: one
        dot_general contracting the lane axes gives per-channel sums (no
        transposed copy), and scale/shift @ bc broadcasts back while keeping
        padding lanes exactly zero."""
        bc = bc_ref[...]
        dims = (((1,), (1,)), ((), ()))
        s1 = jax.lax.dot_general(jnp.sum(z, axis=0, keepdims=True), bc, dims,
                                 preferred_element_type=f32)        # (1, C)
        s2 = jax.lax.dot_general(jnp.sum(z * z, axis=0, keepdims=True), bc,
                                 dims, preferred_element_type=f32)  # (1, C)
        mean = s1 / count
        var = s2 / count - mean * mean
        scale = g_ref[...] * jax.lax.rsqrt(var + BN_EPS)            # (1, C)
        shift = b_ref[...] - mean * scale
        scale_f = jnp.dot(scale, bc, preferred_element_type=f32)    # (1, P)
        shift_f = jnp.dot(shift, bc, preferred_element_type=f32)
        return z * scale_f + shift_f

    # TODO(synk): cast GEMM operands to bf16 on v6e/v7x (keep BN stats f32).

    # L1: one GEMM (M = nb*18) + LeakyReLU, stored into the padded L2 layout.
    l1 = build_lhs(x_ref, HPP1, O1)                                 # (nb*18, 512)
    z1 = lrelu(jnp.dot(l1, w1_ref[...], preferred_element_type=f32))
    store_paired(a2_ref, z1, HPP2, O1, PITCH2)

    # L2: one GEMM (M = nb*9), BatchNorm + LeakyReLU on the value, store.
    l2 = build_lhs(a2_ref, HPP2, O2)                                # (nb*9, 1024)
    z2 = jnp.dot(l2, w2_ref[...], preferred_element_type=f32)
    z2 = lrelu(batchnorm(z2, g2_ref, b2_ref, bc2_ref, float(nb * O2 * O2)))
    store_paired(a3_ref, z2, HPP3, O2, PITCH3)

    # L3: one GEMM (M = nb*4), BatchNorm + LeakyReLU, kept as a value.
    l3 = build_lhs(a3_ref, HPP3, O3)                                # (nb*4, 1024)
    z3 = jnp.dot(l3, w3_ref[...], preferred_element_type=f32)
    z3 = lrelu(batchnorm(z3, g3_ref, b3_ref, bc3_ref, float(nb * O3 * O3)))

    # L4: the 4x4 window covers the whole map -> per-sample lane-concat of the
    # 4 rows of z3, one GEMM, sigmoid.  Cout is lane-padded to 128 so the only
    # HBM store is a single unmasked full-lane write.
    l4 = jnp.concatenate(
        [jnp.concatenate([z3[n * O3 + r:n * O3 + r + 1, :] for r in range(4)],
                         axis=1) for n in range(nb)], axis=0)       # (nb, 512)
    z4 = jnp.dot(l4, w4_ref[...], preferred_element_type=f32)       # (nb, 128)
    o_ref[...] = 1.0 / (1.0 + jnp.exp(-z4))


# ---------------------------------------------------------------------------
# One-time host-side weight preparation (out of the hot path)
# ---------------------------------------------------------------------------
def _eff_weight(w_oihw, stride, pad, win, wout, pitch_in, pitch_out):
    """OIHW filter -> (4*pitch_in, pitch_out) GEMM matrix for the lane-aligned
    im2col layout.  LHS K index = kh*pitch_in + w*Cin + c (w = ACTUAL input
    column; horizontal zero padding is folded in by omitting out-of-range
    taps); output column = ow*Cout + co, zero-padded up to pitch_out."""
    w = np.asarray(w_oihw, np.float32)
    cout, cin, kh_n, kw_n = w.shape
    e = np.zeros((kh_n * pitch_in, pitch_out), np.float32)
    for kh in range(kh_n):
        for kw in range(kw_n):
            for ow in range(wout):
                col = stride * ow + kw - pad
                if 0 <= col < win:
                    r0 = kh * pitch_in + col * cin
                    e[r0:r0 + cin, ow * cout:(ow + 1) * cout] = w[:, :, kh, kw].T
    return jnp.asarray(e)


def _chan_bcast(c, wout, pitch):
    """(C, pitch) 0/1 matrix: channel c <-> lanes ow*C + c (valid ow only)."""
    b = np.zeros((c, pitch), np.float32)
    for w in range(wout):
        b[np.arange(c), w * c + np.arange(c)] = 1.0
    return jnp.asarray(b)


def prepare_params(params):
    """Convert PyTorch-layout (OIHW) weights into the kernel's GEMM operands."""
    return {
        "w1e": _eff_weight(params["w1"], 2, 3, 32, O1, PITCH1, PITCH2),
        "w2e": _eff_weight(params["w2"], 2, 1, 18, O2, PITCH2, PITCH3),
        "w3e": _eff_weight(params["w3"], 2, 1, 9, O3, PITCH3, PITCH4),
        "w4e": _eff_weight(params["w4"], 1, 0, 4, 1, PITCH4, COUT_PAD),
        "g2": jnp.asarray(params["g2"], jnp.float32).reshape(1, -1),
        "b2": jnp.asarray(params["b2"], jnp.float32).reshape(1, -1),
        "g3": jnp.asarray(params["g3"], jnp.float32).reshape(1, -1),
        "b3": jnp.asarray(params["b3"], jnp.float32).reshape(1, -1),
        "bc2": _chan_bcast(C3, O2, PITCH3),
        "bc3": _chan_bcast(C4, O3, PITCH4),
    }


# ---------------------------------------------------------------------------
# Forward wrapper (single pallas_call) and pure-JAX reference
# ---------------------------------------------------------------------------
def discriminator_forward(x, kp):
    n = x.shape[0]
    # NCHW -> (row-pair, lane-aligned) layout at the module boundary only:
    # (N,3,32,32) -> NHWC -> rows flattened (w,c) -> lane-pad to 128 ->
    # vertical zero-pad (3) -> pair rows -> (N*19, 256).
    xh = jnp.transpose(x, (0, 2, 3, 1)).reshape(n, H1, H1 * C1)
    xh = jnp.pad(xh, ((0, 0), (P1, P1), (0, PITCH1 - H1 * C1)))
    x_in = xh.reshape(n * HPP1, 2 * PITCH1)

    args = (x_in, kp["w1e"], kp["w2e"], kp["w3e"], kp["w4e"],
            kp["g2"], kp["b2"], kp["g3"], kp["b3"], kp["bc2"], kp["bc3"])

    def spec(shape):
        return pl.BlockSpec(shape, lambda i: (0,) * len(shape))

    # TODO(synk): batch-grid pipelining (and v7x dual-core sharding) needs a
    # cross-tile reduction of the BN sums; the whole batch is one tile here.
    out = pl.pallas_call(
        _disc_kernel,
        out_shape=jax.ShapeDtypeStruct((n, COUT_PAD), jnp.float32),
        grid=(1,),
        in_specs=[spec(a.shape) for a in args],
        out_specs=spec((n, COUT_PAD)),
        scratch_shapes=[
            pltpu.VMEM((n * HPP2, 2 * PITCH2), jnp.float32),  # padded L2 input
            pltpu.VMEM((n * HPP3, 2 * PITCH3), jnp.float32),  # padded L3 input
        ],
        compiler_params=pltpu.CompilerParams(
            dimension_semantics=("arbitrary",),
            vmem_limit_bytes=32 * 1024 * 1024),
    )(*args)

    return out[:, :1].reshape(n, 1, 1, 1)


def discriminator_ref(x, params):
    def conv(x, w, s, p):
        return jax.lax.conv_general_dilated(
            x, w, (s, s), ((p, p), (p, p)),
            dimension_numbers=("NCHW", "OIHW", "NCHW"))

    def lrelu(x):
        return jnp.where(x > 0, x, SLOPE * x)

    def bn(x, g, b):
        mean = jnp.mean(x, axis=(0, 2, 3), keepdims=True)
        var = jnp.mean((x - mean) ** 2, axis=(0, 2, 3), keepdims=True)
        xh = (x - mean) * jax.lax.rsqrt(var + BN_EPS)
        return xh * g.reshape(1, -1, 1, 1) + b.reshape(1, -1, 1, 1)

    x = lrelu(conv(x, params["w1"], 2, 3))
    x = lrelu(bn(conv(x, params["w2"], 2, 1), params["g2"], params["b2"]))
    x = lrelu(bn(conv(x, params["w3"], 2, 1), params["g3"], params["b3"]))
    x = jax.nn.sigmoid(conv(x, params["w4"], 1, 0))
    return x


def init_params(key):
    ks = jax.random.split(key, 8)

    def w(k, shape):  # DCGAN-style init
        return 0.02 * jax.random.normal(k, shape, jnp.float32)

    return {
        "w1": w(ks[0], (NDF, NC, 4, 4)),
        "w2": w(ks[1], (NDF * 2, NDF, 4, 4)),
        "g2": 1.0 + 0.1 * jax.random.normal(ks[2], (NDF * 2,), jnp.float32),
        "b2": 0.1 * jax.random.normal(ks[3], (NDF * 2,), jnp.float32),
        "w3": w(ks[4], (NDF * 4, NDF * 2, 4, 4)),
        "g3": 1.0 + 0.1 * jax.random.normal(ks[5], (NDF * 4,), jnp.float32),
        "b3": 0.1 * jax.random.normal(ks[6], (NDF * 4,), jnp.float32),
        "w4": w(ks[7], (1, NDF * 4, 4, 4)),
    }


if __name__ == "__main__":
    key = jax.random.PRNGKey(0)
    k_in, k_par = jax.random.split(key)
    x = jax.random.normal(k_in, (2, NC, 32, 32), jnp.float32)   # NCHW input
    params = init_params(k_par)
    kparams = prepare_params(params)      # one-time weight prep (not hot path)

    out = jax.block_until_ready(jax.jit(discriminator_forward)(x, kparams))
    ref = jax.block_until_ready(jax.jit(discriminator_ref)(x, params))

    assert out.shape == (2, 1, 1, 1), out.shape
    assert jnp.allclose(out, ref, atol=1e-4, rtol=1e-4), (out, ref)
    print("KERNEL_OK")
</pallas_src>

<mosaic_0001>
module attributes {stable_mosaic.version = 11 : i64} {
  func.func @_disc_kernel(%arg0: i32, %arg1: memref<38x256xf32, #tpu.memory_space<vmem>>, %arg2: memref<512x256xf32, #tpu.memory_space<vmem>>, %arg3: memref<1024x256xf32, #tpu.memory_space<vmem>>, %arg4: memref<1024x128xf32, #tpu.memory_space<vmem>>, %arg5: memref<512x128xf32, #tpu.memory_space<vmem>>, %arg6: memref<1x16xf32, #tpu.memory_space<vmem>>, %arg7: memref<1x16xf32, #tpu.memory_space<vmem>>, %arg8: memref<1x32xf32, #tpu.memory_space<vmem>>, %arg9: memref<1x32xf32, #tpu.memory_space<vmem>>, %arg10: memref<16x256xf32, #tpu.memory_space<vmem>>, %arg11: memref<32x128xf32, #tpu.memory_space<vmem>>, %arg12: memref<2x128xf32, #tpu.memory_space<vmem>>, %arg13: memref<20x512xf32, #tpu.memory_space<vmem>>, %arg14: memref<12x512xf32, #tpu.memory_space<vmem>>) attributes {dimension_semantics = [#tpu.dimension_semantics<arbitrary>], iteration_bounds = array<i64: 1>, scalar_prefetch = 0 : i64, scratch_operands = 2 : i64, tpu.core_type = #tpu.core_type<tc>, window_params = [{pipeline_mode = #tpu.pipeline_mode<synchronous>, transform_indices = @transform_0, window_bounds = array<i64: 38, 256>}, {pipeline_mode = #tpu.pipeline_mode<synchronous>, transform_indices = @transform_1, window_bounds = array<i64: 512, 256>}, {pipeline_mode = #tpu.pipeline_mode<synchronous>, transform_indices = @transform_2, window_bounds = array<i64: 1024, 256>}, {pipeline_mode = #tpu.pipeline_mode<synchronous>, transform_indices = @transform_3, window_bounds = array<i64: 1024, 128>}, {pipeline_mode = #tpu.pipeline_mode<synchronous>, transform_indices = @transform_4, window_bounds = array<i64: 512, 128>}, {pipeline_mode = #tpu.pipeline_mode<synchronous>, transform_indices = @transform_5, window_bounds = array<i64: 1, 16>}, {pipeline_mode = #tpu.pipeline_mode<synchronous>, transform_indices = @transform_6, window_bounds = array<i64: 1, 16>}, {pipeline_mode = #tpu.pipeline_mode<synchronous>, transform_indices = @transform_7, window_bounds = array<i64: 1, 32>}, {pipeline_mode = #tpu.pipeline_mode<synchronous>, transform_indices = @transform_8, window_bounds = array<i64: 1, 32>}, {pipeline_mode = #tpu.pipeline_mode<synchronous>, transform_indices = @transform_9, window_bounds = array<i64: 16, 256>}, {pipeline_mode = #tpu.pipeline_mode<synchronous>, transform_indices = @transform_10, window_bounds = array<i64: 32, 128>}, {pipeline_mode = #tpu.pipeline_mode<synchronous>, transform_indices = @transform_11, window_bounds = array<i64: 2, 128>}]} {
    %cst = arith.constant 0.000000e+00 : f32
    %0 = vector.broadcast %cst : f32 to vector<20x512xf32>
    %c0 = arith.constant 0 : index
    %c0_0 = arith.constant 0 : index
    %1 = vector.load %arg13[%c0, %c0_0] : memref<20x512xf32, #tpu.memory_space<vmem>>, vector<20x512xf32>
    tpu.vector_store %arg13[%c0, %c0_0], %0 {strides = array<i32>} : memref<20x512xf32, #tpu.memory_space<vmem>>, vector<20x512xf32>,
    %cst_1 = arith.constant 0.000000e+00 : f32
    %2 = vector.broadcast %cst_1 : f32 to vector<12x512xf32>
    %c0_2 = arith.constant 0 : index
    %c0_3 = arith.constant 0 : index
    %3 = vector.load %arg14[%c0_2, %c0_3] : memref<12x512xf32, #tpu.memory_space<vmem>>, vector<12x512xf32>
    tpu.vector_store %arg14[%c0_2, %c0_3], %2 {strides = array<i32>} : memref<12x512xf32, #tpu.memory_space<vmem>>, vector<12x512xf32>,
    %c0_4 = arith.constant 0 : index
    %c0_5 = arith.constant 0 : index
    %4 = vector.load %arg1[%c0_4, %c0_5] : memref<38x256xf32, #tpu.memory_space<vmem>>, vector<18x256xf32>
    %c1 = arith.constant 1 : index
    %c0_6 = arith.constant 0 : index
    %5 = vector.load %arg1[%c1, %c0_6] : memref<38x256xf32, #tpu.memory_space<vmem>>, vector<18x256xf32>
    %6 = tpu.concatenate %4, %5 in 1 : vector<18x256xf32>, vector<18x256xf32> -> vector<18x512xf32>
    %c19 = arith.constant 19 : index
    %c0_7 = arith.constant 0 : index
    %7 = vector.load %arg1[%c19, %c0_7] : memref<38x256xf32, #tpu.memory_space<vmem>>, vector<18x256xf32>
    %c20 = arith.constant 20 : index
    %c0_8 = arith.constant 0 : index
    %8 = vector.load %arg1[%c20, %c0_8] : memref<38x256xf32, #tpu.memory_space<vmem>>, vector<18x256xf32>
    %9 = tpu.concatenate %7, %8 in 1 : vector<18x256xf32>, vector<18x256xf32> -> vector<18x512xf32>
    %10 = tpu.concatenate %6, %9 in 0 : vector<18x512xf32>, vector<18x512xf32> -> vector<36x512xf32>
    %c0_9 = arith.constant 0 : index
    %c0_10 = arith.constant 0 : index
    %11 = vector.load %arg2[%c0_9, %c0_10] : memref<512x256xf32, #tpu.memory_space<vmem>>, vector<512x256xf32>
    %cst_11 = arith.constant dense<0.000000e+00> : vector<36x256xf32>
    %12 = tpu.matmul %10, %11, %cst_11 {dimension_numbers = #tpu.dot_dimension_numbers<[1], [0], [0], [1], [0, 0, 1, 1], [], []>} : vector<36x512xf32>, vector<512x256xf32>, vector<36x256xf32> -> vector<36x256xf32>
    %cst_12 = arith.constant 2.000000e-01 : f32
    %13 = vector.broadcast %cst_12 : f32 to vector<36x256xf32>
    %14 = arith.mulf %13, %12 : vector<36x256xf32>
    %15 = arith.maximumf %12, %14 : vector<36x256xf32>
    %cst_13 = arith.constant 0.000000e+00 : f32
    %16 = vector.broadcast %cst_13 : f32 to vector<1x256xf32>
    %17 = vector.extract_strided_slice %15 {offsets = [0, 0], sizes = [1, 256], strides = [1, 1]} : vector<36x256xf32> to vector<1x256xf32>
    %18 = tpu.concatenate %16, %17 in 1 : vector<1x256xf32>, vector<1x256xf32> -> vector<1x512xf32>
    %c0_14 = arith.constant 0 : index
    %c0_15 = arith.constant 0 : index
    %19 = vector.load %arg13[%c0_14, %c0_15] : memref<20x512xf32, #tpu.memory_space<vmem>>, vector<1x512xf32>
    tpu.vector_store %arg13[%c0_14, %c0_15], %18 {strides = array<i32>} : memref<20x512xf32, #tpu.memory_space<vmem>>, vector<1x512xf32>,
    %20 = vector.extract_strided_slice %15 {offsets = [1, 0], sizes = [1, 256], strides = [1, 1]} : vector<36x256xf32> to vector<1x256xf32>
    %21 = vector.extract_strided_slice %15 {offsets = [2, 0], sizes = [1, 256], strides = [1, 1]} : vector<36x256xf32> to vector<1x256xf32>
    %22 = tpu.concatenate %20, %21 in 1 : vector<1x256xf32>, vector<1x256xf32> -> vector<1x512xf32>
    %c1_16 = arith.constant 1 : index
    %c0_17 = arith.constant 0 : index
    %23 = vector.load %arg13[%c1_16, %c0_17] : memref<20x512xf32, #tpu.memory_space<vmem>>, vector<1x512xf32>
    tpu.vector_store %arg13[%c1_16, %c0_17], %22 {strides = array<i32>} : memref<20x512xf32, #tpu.memory_space<vmem>>, vector<1x512xf32>,
    %24 = vector.extract_strided_slice %15 {offsets = [3, 0], sizes = [1, 256], strides = [1, 1]} : vector<36x256xf32> to vector<1x256xf32>
    %25 = vector.extract_strided_slice %15 {offsets = [4, 0], sizes = [1, 256], strides = [1, 1]} : vector<36x256xf32> to vector<1x256xf32>
    %26 = tpu.concatenate %24, %25 in 1 : vector<1x256xf32>, vector<1x256xf32> -> vector<1x512xf32>
    %c2 = arith.constant 2 : index
    %c0_18 = arith.constant 0 : index
    %27 = vector.load %arg13[%c2, %c0_18] : memref<20x512xf32, #tpu.memory_space<vmem>>, vector<1x512xf32>
    tpu.vector_store %arg13[%c2, %c0_18], %26 {strides = array<i32>} : memref<20x512xf32, #tpu.memory_space<vmem>>, vector<1x512xf32>,
    %28 = vector.extract_strided_slice %15 {offsets = [5, 0], sizes = [1, 256], strides = [1, 1]} : vector<36x256xf32> to vector<1x256xf32>
    %29 = vector.extract_strided_slice %15 {offsets = [6, 0], sizes = [1, 256], strides = [1, 1]} : vector<36x256xf32> to vector<1x256xf32>
    %30 = tpu.concatenate %28, %29 in 1 : vector<1x256xf32>, vector<1x256xf32> -> vector<1x512xf32>
    %c3 = arith.constant 3 : index
    %c0_19 = arith.constant 0 : index
    %31 = vector.load %arg13[%c3, %c0_19] : memref<20x512xf32, #tpu.memory_space<vmem>>, vector<1x512xf32>
    tpu.vector_store %arg13[%c3, %c0_19], %30 {strides = array<i32>} : memref<20x512xf32, #tpu.memory_space<vmem>>, vector<1x512xf32>,
    %32 = vector.extract_strided_slice %15 {offsets = [7, 0], sizes = [1, 256], strides = [1, 1]} : vector<36x256xf32> to vector<1x256xf32>
    %33 = vector.extract_strided_slice %15 {offsets = [8, 0], sizes = [1, 256], strides = [1, 1]} : vector<36x256xf32> to vector<1x256xf32>
    %34 = tpu.concatenate %32, %33 in 1 : vector<1x256xf32>, vector<1x256xf32> -> vector<1x512xf32>
    %c4 = arith.constant 4 : index
    %c0_20 = arith.constant 0 : index
    %35 = vector.load %arg13[%c4, %c0_20] : memref<20x512xf32, #tpu.memory_space<vmem>>, vector<1x512xf32>
    tpu.vector_store %arg13[%c4, %c0_20], %34 {strides = array<i32>} : memref<20x512xf32, #tpu.memory_space<vmem>>, vector<1x512xf32>,
    %36 = vector.extract_strided_slice %15 {offsets = [9, 0], sizes = [1, 256], strides = [1, 1]} : vector<36x256xf32> to vector<1x256xf32>
    %37 = vector.extract_strided_slice %15 {offsets = [10, 0], sizes = [1, 256], strides = [1, 1]} : vector<36x256xf32> to vector<1x256xf32>
    %38 = tpu.concatenate %36, %37 in 1 : vector<1x256xf32>, vector<1x256xf32> -> vector<1x512xf32>
    %c5 = arith.constant 5 : index
    %c0_21 = arith.constant 0 : index
    %39 = vector.load %arg13[%c5, %c0_21] : memref<20x512xf32, #tpu.memory_space<vmem>>, vector<1x512xf32>
    tpu.vector_store %arg13[%c5, %c0_21], %38 {strides = array<i32>} : memref<20x512xf32, #tpu.memory_space<vmem>>, vector<1x512xf32>,
    %40 = vector.extract_strided_slice %15 {offsets = [11, 0], sizes = [1, 256], strides = [1, 1]} : vector<36x256xf32> to vector<1x256xf32>
    %41 = vector.extract_strided_slice %15 {offsets = [12, 0], sizes = [1, 256], strides = [1, 1]} : vector<36x256xf32> to vector<1x256xf32>
    %42 = tpu.concatenate %40, %41 in 1 : vector<1x256xf32>, vector<1x256xf32> -> vector<1x512xf32>
    %c6 = arith.constant 6 : index
    %c0_22 = arith.constant 0 : index
    %43 = vector.load %arg13[%c6, %c0_22] : memref<20x512xf32, #tpu.memory_space<vmem>>, vector<1x512xf32>
    tpu.vector_store %arg13[%c6, %c0_22], %42 {strides = array<i32>} : memref<20x512xf32, #tpu.memory_space<vmem>>, vector<1x512xf32>,
    %44 = vector.extract_strided_slice %15 {offsets = [13, 0], sizes = [1, 256], strides = [1, 1]} : vector<36x256xf32> to vector<1x256xf32>
    %45 = vector.extract_strided_slice %15 {offsets = [14, 0], sizes = [1, 256], strides = [1, 1]} : vector<36x256xf32> to vector<1x256xf32>
    %46 = tpu.concatenate %44, %45 in 1 : vector<1x256xf32>, vector<1x256xf32> -> vector<1x512xf32>
    %c7 = arith.constant 7 : index
    %c0_23 = arith.constant 0 : index
    %47 = vector.load %arg13[%c7, %c0_23] : memref<20x512xf32, #tpu.memory_space<vmem>>, vector<1x512xf32>
    tpu.vector_store %arg13[%c7, %c0_23], %46 {strides = array<i32>} : memref<20x512xf32, #tpu.memory_space<vmem>>, vector<1x512xf32>,
    %48 = vector.extract_strided_slice %15 {offsets = [15, 0], sizes = [1, 256], strides = [1, 1]} : vector<36x256xf32> to vector<1x256xf32>
    %49 = vector.extract_strided_slice %15 {offsets = [16, 0], sizes = [1, 256], strides = [1, 1]} : vector<36x256xf32> to vector<1x256xf32>
    %50 = tpu.concatenate %48, %49 in 1 : vector<1x256xf32>, vector<1x256xf32> -> vector<1x512xf32>
    %c8 = arith.constant 8 : index
    %c0_24 = arith.constant 0 : index
    %51 = vector.load %arg13[%c8, %c0_24] : memref<20x512xf32, #tpu.memory_space<vmem>>, vector<1x512xf32>
    tpu.vector_store %arg13[%c8, %c0_24], %50 {strides = array<i32>} : memref<20x512xf32, #tpu.memory_space<vmem>>, vector<1x512xf32>,
    %52 = vector.extract_strided_slice %15 {offsets = [17, 0], sizes = [1, 256], strides = [1, 1]} : vector<36x256xf32> to vector<1x256xf32>
    %53 = tpu.concatenate %52, %16 in 1 : vector<1x256xf32>, vector<1x256xf32> -> vector<1x512xf32>
    %c9 = arith.constant 9 : index
    %c0_25 = arith.constant 0 : index
    %54 = vector.load %arg13[%c9, %c0_25] : memref<20x512xf32, #tpu.memory_space<vmem>>, vector<1x512xf32>
    tpu.vector_store %arg13[%c9, %c0_25], %53 {strides = array<i32>} : memref<20x512xf32, #tpu.memory_space<vmem>>, vector<1x512xf32>,
    %55 = vector.extract_strided_slice %15 {offsets = [18, 0], sizes = [1, 256], strides = [1, 1]} : vector<36x256xf32> to vector<1x256xf32>
    %56 = tpu.concatenate %16, %55 in 1 : vector<1x256xf32>, vector<1x256xf32> -> vector<1x512xf32>
    %c10 = arith.constant 10 : index
    %c0_26 = arith.constant 0 : index
    %57 = vector.load %arg13[%c10, %c0_26] : memref<20x512xf32, #tpu.memory_space<vmem>>, vector<1x512xf32>
    tpu.vector_store %arg13[%c10, %c0_26], %56 {strides = array<i32>} : memref<20x512xf32, #tpu.memory_space<vmem>>, vector<1x512xf32>,
    %58 = vector.extract_strided_slice %15 {offsets = [19, 0], sizes = [1, 256], strides = [1, 1]} : vector<36x256xf32> to vector<1x256xf32>
    %59 = vector.extract_strided_slice %15 {offsets = [20, 0], sizes = [1, 256], strides = [1, 1]} : vector<36x256xf32> to vector<1x256xf32>
    %60 = tpu.concatenate %58, %59 in 1 : vector<1x256xf32>, vector<1x256xf32> -> vector<1x512xf32>
    %c11 = arith.constant 11 : index
    %c0_27 = arith.constant 0 : index
    %61 = vector.load %arg13[%c11, %c0_27] : memref<20x512xf32, #tpu.memory_space<vmem>>, vector<1x512xf32>
    tpu.vector_store %arg13[%c11, %c0_27], %60 {strides = array<i32>} : memref<20x512xf32, #tpu.memory_space<vmem>>, vector<1x512xf32>,
    %62 = vector.extract_strided_slice %15 {offsets = [21, 0], sizes = [1, 256], strides = [1, 1]} : vector<36x256xf32> to vector<1x256xf32>
    %63 = vector.extract_strided_slice %15 {offsets = [22, 0], sizes = [1, 256], strides = [1, 1]} : vector<36x256xf32> to vector<1x256xf32>
    %64 = tpu.concatenate %62, %63 in 1 : vector<1x256xf32>, vector<1x256xf32> -> vector<1x512xf32>
    %c12 = arith.constant 12 : index
    %c0_28 = arith.constant 0 : index
    %65 = vector.load %arg13[%c12, %c0_28] : memref<20x512xf32, #tpu.memory_space<vmem>>, vector<1x512xf32>
    tpu.vector_store %arg13[%c12, %c0_28], %64 {strides = array<i32>} : memref<20x512xf32, #tpu.memory_space<vmem>>, vector<1x512xf32>,
    %66 = vector.extract_strided_slice %15 {offsets = [23, 0], sizes = [1, 256], strides = [1, 1]} : vector<36x256xf32> to vector<1x256xf32>
    %67 = vector.extract_strided_slice %15 {offsets = [24, 0], sizes = [1, 256], strides = [1, 1]} : vector<36x256xf32> to vector<1x256xf32>
    %68 = tpu.concatenate %66, %67 in 1 : vector<1x256xf32>, vector<1x256xf32> -> vector<1x512xf32>
    %c13 = arith.constant 13 : index
    %c0_29 = arith.constant 0 : index
    %69 = vector.load %arg13[%c13, %c0_29] : memref<20x512xf32, #tpu.memory_space<vmem>>, vector<1x512xf32>
    tpu.vector_store %arg13[%c13, %c0_29], %68 {strides = array<i32>} : memref<20x512xf32, #tpu.memory_space<vmem>>, vector<1x512xf32>,
    %70 = vector.extract_strided_slice %15 {offsets = [25, 0], sizes = [1, 256], strides = [1, 1]} : vector<36x256xf32> to vector<1x256xf32>
    %71 = vector.extract_strided_slice %15 {offsets = [26, 0], sizes = [1, 256], strides = [1, 1]} : vector<36x256xf32> to vector<1x256xf32>
    %72 = tpu.concatenate %70, %71 in 1 : vector<1x256xf32>, vector<1x256xf32> -> vector<1x512xf32>
    %c14 = arith.constant 14 : index
    %c0_30 = arith.constant 0 : index
    %73 = vector.load %arg13[%c14, %c0_30] : memref<20x512xf32, #tpu.memory_space<vmem>>, vector<1x512xf32>
    tpu.vector_store %arg13[%c14, %c0_30], %72 {strides = array<i32>} : memref<20x512xf32, #tpu.memory_space<vmem>>, vector<1x512xf32>,
    %74 = vector.extract_strided_slice %15 {offsets = [27, 0], sizes = [1, 256], strides = [1, 1]} : vector<36x256xf32> to vector<1x256xf32>
    %75 = vector.extract_strided_slice %15 {offsets = [28, 0], sizes = [1, 256], strides = [1, 1]} : vector<36x256xf32> to vector<1x256xf32>
    %76 = tpu.concatenate %74, %75 in 1 : vector<1x256xf32>, vector<1x256xf32> -> vector<1x512xf32>
    %c15 = arith.constant 15 : index
    %c0_31 = arith.constant 0 : index
    %77 = vector.load %arg13[%c15, %c0_31] : memref<20x512xf32, #tpu.memory_space<vmem>>, vector<1x512xf32>
    tpu.vector_store %arg13[%c15, %c0_31], %76 {strides = array<i32>} : memref<20x512xf32, #tpu.memory_space<vmem>>, vector<1x512xf32>,
    %78 = vector.extract_strided_slice %15 {offsets = [29, 0], sizes = [1, 256], strides = [1, 1]} : vector<36x256xf32> to vector<1x256xf32>
    %79 = vector.extract_strided_slice %15 {offsets = [30, 0], sizes = [1, 256], strides = [1, 1]} : vector<36x256xf32> to vector<1x256xf32>
    %80 = tpu.concatenate %78, %79 in 1 : vector<1x256xf32>, vector<1x256xf32> -> vector<1x512xf32>
    %c16 = arith.constant 16 : index
    %c0_32 = arith.constant 0 : index
    %81 = vector.load %arg13[%c16, %c0_32] : memref<20x512xf32, #tpu.memory_space<vmem>>, vector<1x512xf32>
    tpu.vector_store %arg13[%c16, %c0_32], %80 {strides = array<i32>} : memref<20x512xf32, #tpu.memory_space<vmem>>, vector<1x512xf32>,
    %82 = vector.extract_strided_slice %15 {offsets = [31, 0], sizes = [1, 256], strides = [1, 1]} : vector<36x256xf32> to vector<1x256xf32>
    %83 = vector.extract_strided_slice %15 {offsets = [32, 0], sizes = [1, 256], strides = [1, 1]} : vector<36x256xf32> to vector<1x256xf32>
    %84 = tpu.concatenate %82, %83 in 1 : vector<1x256xf32>, vector<1x256xf32> -> vector<1x512xf32>
    %c17 = arith.constant 17 : index
    %c0_33 = arith.constant 0 : index
    %85 = vector.load %arg13[%c17, %c0_33] : memref<20x512xf32, #tpu.memory_space<vmem>>, vector<1x512xf32>
    tpu.vector_store %arg13[%c17, %c0_33], %84 {strides = array<i32>} : memref<20x512xf32, #tpu.memory_space<vmem>>, vector<1x512xf32>,
    %86 = vector.extract_strided_slice %15 {offsets = [33, 0], sizes = [1, 256], strides = [1, 1]} : vector<36x256xf32> to vector<1x256xf32>
    %87 = vector.extract_strided_slice %15 {offsets = [34, 0], sizes = [1, 256], strides = [1, 1]} : vector<36x256xf32> to vector<1x256xf32>
    %88 = tpu.concatenate %86, %87 in 1 : vector<1x256xf32>, vector<1x256xf32> -> vector<1x512xf32>
    %c18 = arith.constant 18 : index
    %c0_34 = arith.constant 0 : index
    %89 = vector.load %arg13[%c18, %c0_34] : memref<20x512xf32, #tpu.memory_space<vmem>>, vector<1x512xf32>
    tpu.vector_store %arg13[%c18, %c0_34], %88 {strides = array<i32>} : memref<20x512xf32, #tpu.memory_space<vmem>>, vector<1x512xf32>,
    %90 = vector.extract_strided_slice %15 {offsets = [35, 0], sizes = [1, 256], strides = [1, 1]} : vector<36x256xf32> to vector<1x256xf32>
    %91 = tpu.concatenate %90, %16 in 1 : vector<1x256xf32>, vector<1x256xf32> -> vector<1x512xf32>
    %c19_35 = arith.constant 19 : index
    %c0_36 = arith.constant 0 : index
    %92 = vector.load %arg13[%c19_35, %c0_36] : memref<20x512xf32, #tpu.memory_space<vmem>>, vector<1x512xf32>
    tpu.vector_store %arg13[%c19_35, %c0_36], %91 {strides = array<i32>} : memref<20x512xf32, #tpu.memory_space<vmem>>, vector<1x512xf32>,
    %c0_37 = arith.constant 0 : index
    %c0_38 = arith.constant 0 : index
    %93 = vector.load %arg13[%c0_37, %c0_38] : memref<20x512xf32, #tpu.memory_space<vmem>>, vector<9x512xf32>
    %c1_39 = arith.constant 1 : index
    %c0_40 = arith.constant 0 : index
    %94 = vector.load %arg13[%c1_39, %c0_40] : memref<20x512xf32, #tpu.memory_space<vmem>>, vector<9x512xf32>
    %95 = tpu.concatenate %93, %94 in 1 : vector<9x512xf32>, vector<9x512xf32> -> vector<9x1024xf32>
    %c10_41 = arith.constant 10 : index
    %c0_42 = arith.constant 0 : index
    %96 = vector.load %arg13[%c10_41, %c0_42] : memref<20x512xf32, #tpu.memory_space<vmem>>, vector<9x512xf32>
    %c11_43 = arith.constant 11 : index
    %c0_44 = arith.constant 0 : index
    %97 = vector.load %arg13[%c11_43, %c0_44] : memref<20x512xf32, #tpu.memory_space<vmem>>, vector<9x512xf32>
    %98 = tpu.concatenate %96, %97 in 1 : vector<9x512xf32>, vector<9x512xf32> -> vector<9x1024xf32>
    %99 = tpu.concatenate %95, %98 in 0 : vector<9x1024xf32>, vector<9x1024xf32> -> vector<18x1024xf32>
    %c0_45 = arith.constant 0 : index
    %c0_46 = arith.constant 0 : index
    %100 = vector.load %arg3[%c0_45, %c0_46] : memref<1024x256xf32, #tpu.memory_space<vmem>>, vector<1024x256xf32>
    %cst_47 = arith.constant dense<0.000000e+00> : vector<18x256xf32>
    %101 = tpu.matmul %99, %100, %cst_47 {dimension_numbers = #tpu.dot_dimension_numbers<[1], [0], [0], [1], [0, 0, 1, 1], [], []>} : vector<18x1024xf32>, vector<1024x256xf32>, vector<18x256xf32> -> vector<18x256xf32>
    %c0_48 = arith.constant 0 : index
    %c0_49 = arith.constant 0 : index
    %102 = vector.load %arg10[%c0_48, %c0_49] : memref<16x256xf32, #tpu.memory_space<vmem>>, vector<16x256xf32>
    %cst_50 = arith.constant dense<0.000000e+00> : vector<256xf32>
    %103 = vector.multi_reduction <add>, %101, %cst_50 [0] : vector<18x256xf32> to vector<256xf32>
    %104 = vector.shape_cast %103 : vector<256xf32> to vector<1x256xf32>
    %cst_51 = arith.constant dense<0.000000e+00> : vector<1x16xf32>
    %105 = tpu.matmul %104, %102, %cst_51 {dimension_numbers = #tpu.dot_dimension_numbers<[1], [1], [0], [0], [0, 0, 1, 0], [], []>} : vector<1x256xf32>, vector<16x256xf32>, vector<1x16xf32> -> vector<1x16xf32>
    %106 = arith.mulf %101, %101 : vector<18x256xf32>
    %cst_52 = arith.constant dense<0.000000e+00> : vector<256xf32>
    %107 = vector.multi_reduction <add>, %106, %cst_52 [0] : vector<18x256xf32> to vector<256xf32>
    %108 = vector.shape_cast %107 : vector<256xf32> to vector<1x256xf32>
    %cst_53 = arith.constant dense<0.000000e+00> : vector<1x16xf32>
    %109 = tpu.matmul %108, %102, %cst_53 {dimension_numbers = #tpu.dot_dimension_numbers<[1], [1], [0], [0], [0, 0, 1, 0], [], []>} : vector<1x256xf32>, vector<16x256xf32>, vector<1x16xf32> -> vector<1x16xf32>
    %cst_54 = arith.constant 1.620000e+02 : f32
    %110 = vector.broadcast %cst_54 : f32 to vector<1x16xf32>
    %111 = arith.divf %105, %110 : vector<1x16xf32>
    %cst_55 = arith.constant 1.620000e+02 : f32
    %112 = vector.broadcast %cst_55 : f32 to vector<1x16xf32>
    %113 = arith.divf %109, %112 : vector<1x16xf32>
    %114 = arith.mulf %111, %111 : vector<1x16xf32>
    %115 = arith.subf %113, %114 : vector<1x16xf32>
    %c0_56 = arith.constant 0 : index
    %c0_57 = arith.constant 0 : index
    %116 = vector.load %arg6[%c0_56, %c0_57] : memref<1x16xf32, #tpu.memory_space<vmem>>, vector<1x16xf32>
    %cst_58 = arith.constant 9.99999974E-6 : f32
    %117 = vector.broadcast %cst_58 : f32 to vector<1x16xf32>
    %118 = arith.addf %115, %117 : vector<1x16xf32>
    %119 = math.rsqrt %118 : vector<1x16xf32>
    %120 = arith.mulf %116, %119 : vector<1x16xf32>
    %c0_59 = arith.constant 0 : index
    %c0_60 = arith.constant 0 : index
    %121 = vector.load %arg7[%c0_59, %c0_60] : memref<1x16xf32, #tpu.memory_space<vmem>>, vector<1x16xf32>
    %122 = arith.mulf %111, %120 : vector<1x16xf32>
    %123 = arith.subf %121, %122 : vector<1x16xf32>
    %cst_61 = arith.constant dense<0.000000e+00> : vector<1x256xf32>
    %124 = tpu.matmul %120, %102, %cst_61 {dimension_numbers = #tpu.dot_dimension_numbers<[1], [0], [0], [1], [0, 0, 1, 1], [], []>} : vector<1x16xf32>, vector<16x256xf32>, vector<1x256xf32> -> vector<1x256xf32>
    %cst_62 = arith.constant dense<0.000000e+00> : vector<1x256xf32>
    %125 = tpu.matmul %123, %102, %cst_62 {dimension_numbers = #tpu.dot_dimension_numbers<[1], [0], [0], [1], [0, 0, 1, 1], [], []>} : vector<1x16xf32>, vector<16x256xf32>, vector<1x256xf32> -> vector<1x256xf32>
    %126 = vector.broadcast %124 : vector<1x256xf32> to vector<18x256xf32>
    %127 = arith.mulf %101, %126 : vector<18x256xf32>
    %128 = vector.broadcast %125 : vector<1x256xf32> to vector<18x256xf32>
    %129 = arith.addf %127, %128 : vector<18x256xf32>
    %cst_63 = arith.constant 2.000000e-01 : f32
    %130 = vector.broadcast %cst_63 : f32 to vector<18x256xf32>
    %131 = arith.mulf %130, %129 : vector<18x256xf32>
    %132 = arith.maximumf %129, %131 : vector<18x256xf32>
    %cst_64 = arith.constant 0.000000e+00 : f32
    %133 = vector.broadcast %cst_64 : f32 to vector<1x256xf32>
    %134 = vector.extract_strided_slice %132 {offsets = [0, 0], sizes = [1, 256], strides = [1, 1]} : vector<18x256xf32> to vector<1x256xf32>
    %135 = tpu.concatenate %133, %134 in 1 : vector<1x256xf32>, vector<1x256xf32> -> vector<1x512xf32>
    %c0_65 = arith.constant 0 : index
    %c0_66 = arith.constant 0 : index
    %136 = vector.load %arg14[%c0_65, %c0_66] : memref<12x512xf32, #tpu.memory_space<vmem>>, vector<1x512xf32>
    tpu.vector_store %arg14[%c0_65, %c0_66], %135 {strides = array<i32>} : memref<12x512xf32, #tpu.memory_space<vmem>>, vector<1x512xf32>,
    %137 = vector.extract_strided_slice %132 {offsets = [1, 0], sizes = [1, 256], strides = [1, 1]} : vector<18x256xf32> to vector<1x256xf32>
    %138 = vector.extract_strided_slice %132 {offsets = [2, 0], sizes = [1, 256], strides = [1, 1]} : vector<18x256xf32> to vector<1x256xf32>
    %139 = tpu.concatenate %137, %138 in 1 : vector<1x256xf32>, vector<1x256xf32> -> vector<1x512xf32>
    %c1_67 = arith.constant 1 : index
    %c0_68 = arith.constant 0 : index
    %140 = vector.load %arg14[%c1_67, %c0_68] : memref<12x512xf32, #tpu.memory_space<vmem>>, vector<1x512xf32>
    tpu.vector_store %arg14[%c1_67, %c0_68], %139 {strides = array<i32>} : memref<12x512xf32, #tpu.memory_space<vmem>>, vector<1x512xf32>,
    %141 = vector.extract_strided_slice %132 {offsets = [3, 0], sizes = [1, 256], strides = [1, 1]} : vector<18x256xf32> to vector<1x256xf32>
    %142 = vector.extract_strided_slice %132 {offsets = [4, 0], sizes = [1, 256], strides = [1, 1]} : vector<18x256xf32> to vector<1x256xf32>
    %143 = tpu.concatenate %141, %142 in 1 : vector<1x256xf32>, vector<1x256xf32> -> vector<1x512xf32>
    %c2_69 = arith.constant 2 : index
    %c0_70 = arith.constant 0 : index
    %144 = vector.load %arg14[%c2_69, %c0_70] : memref<12x512xf32, #tpu.memory_space<vmem>>, vector<1x512xf32>
    tpu.vector_store %arg14[%c2_69, %c0_70], %143 {strides = array<i32>} : memref<12x512xf32, #tpu.memory_space<vmem>>, vector<1x512xf32>,
    %145 = vector.extract_strided_slice %132 {offsets = [5, 0], sizes = [1, 256], strides = [1, 1]} : vector<18x256xf32> to vector<1x256xf32>
    %146 = vector.extract_strided_slice %132 {offsets = [6, 0], sizes = [1, 256], strides = [1, 1]} : vector<18x256xf32> to vector<1x256xf32>
    %147 = tpu.concatenate %145, %146 in 1 : vector<1x256xf32>, vector<1x256xf32> -> vector<1x512xf32>
    %c3_71 = arith.constant 3 : index
    %c0_72 = arith.constant 0 : index
    %148 = vector.load %arg14[%c3_71, %c0_72] : memref<12x512xf32, #tpu.memory_space<vmem>>, vector<1x512xf32>
    tpu.vector_store %arg14[%c3_71, %c0_72], %147 {strides = array<i32>} : memref<12x512xf32, #tpu.memory_space<vmem>>, vector<1x512xf32>,
    %149 = vector.extract_strided_slice %132 {offsets = [7, 0], sizes = [1, 256], strides = [1, 1]} : vector<18x256xf32> to vector<1x256xf32>
    %150 = vector.extract_strided_slice %132 {offsets = [8, 0], sizes = [1, 256], strides = [1, 1]} : vector<18x256xf32> to vector<1x256xf32>
    %151 = tpu.concatenate %149, %150 in 1 : vector<1x256xf32>, vector<1x256xf32> -> vector<1x512xf32>
    %c4_73 = arith.constant 4 : index
    %c0_74 = arith.constant 0 : index
    %152 = vector.load %arg14[%c4_73, %c0_74] : memref<12x512xf32, #tpu.memory_space<vmem>>, vector<1x512xf32>
    tpu.vector_store %arg14[%c4_73, %c0_74], %151 {strides = array<i32>} : memref<12x512xf32, #tpu.memory_space<vmem>>, vector<1x512xf32>,
    %153 = vector.extract_strided_slice %132 {offsets = [9, 0], sizes = [1, 256], strides = [1, 1]} : vector<18x256xf32> to vector<1x256xf32>
    %154 = tpu.concatenate %133, %153 in 1 : vector<1x256xf32>, vector<1x256xf32> -> vector<1x512xf32>
    %c6_75 = arith.constant 6 : index
    %c0_76 = arith.constant 0 : index
    %155 = vector.load %arg14[%c6_75, %c0_76] : memref<12x512xf32, #tpu.memory_space<vmem>>, vector<1x512xf32>
    tpu.vector_store %arg14[%c6_75, %c0_76], %154 {strides = array<i32>} : memref<12x512xf32, #tpu.memory_space<vmem>>, vector<1x512xf32>,
    %156 = vector.extract_strided_slice %132 {offsets = [10, 0], sizes = [1, 256], strides = [1, 1]} : vector<18x256xf32> to vector<1x256xf32>
    %157 = vector.extract_strided_slice %132 {offsets = [11, 0], sizes = [1, 256], strides = [1, 1]} : vector<18x256xf32> to vector<1x256xf32>
    %158 = tpu.concatenate %156, %157 in 1 : vector<1x256xf32>, vector<1x256xf32> -> vector<1x512xf32>
    %c7_77 = arith.constant 7 : index
    %c0_78 = arith.constant 0 : index
    %159 = vector.load %arg14[%c7_77, %c0_78] : memref<12x512xf32, #tpu.memory_space<vmem>>, vector<1x512xf32>
    tpu.vector_store %arg14[%c7_77, %c0_78], %158 {strides = array<i32>} : memref<12x512xf32, #tpu.memory_space<vmem>>, vector<1x512xf32>,
    %160 = vector.extract_strided_slice %132 {offsets = [12, 0], sizes = [1, 256], strides = [1, 1]} : vector<18x256xf32> to vector<1x256xf32>
    %161 = vector.extract_strided_slice %132 {offsets = [13, 0], sizes = [1, 256], strides = [1, 1]} : vector<18x256xf32> to vector<1x256xf32>
    %162 = tpu.concatenate %160, %161 in 1 : vector<1x256xf32>, vector<1x256xf32> -> vector<1x512xf32>
    %c8_79 = arith.constant 8 : index
    %c0_80 = arith.constant 0 : index
    %163 = vector.load %arg14[%c8_79, %c0_80] : memref<12x512xf32, #tpu.memory_space<vmem>>, vector<1x512xf32>
    tpu.vector_store %arg14[%c8_79, %c0_80], %162 {strides = array<i32>} : memref<12x512xf32, #tpu.memory_space<vmem>>, vector<1x512xf32>,
    %164 = vector.extract_strided_slice %132 {offsets = [14, 0], sizes = [1, 256], strides = [1, 1]} : vector<18x256xf32> to vector<1x256xf32>
    %165 = vector.extract_strided_slice %132 {offsets = [15, 0], sizes = [1, 256], strides = [1, 1]} : vector<18x256xf32> to vector<1x256xf32>
    %166 = tpu.concatenate %164, %165 in 1 : vector<1x256xf32>, vector<1x256xf32> -> vector<1x512xf32>
    %c9_81 = arith.constant 9 : index
    %c0_82 = arith.constant 0 : index
    %167 = vector.load %arg14[%c9_81, %c0_82] : memref<12x512xf32, #tpu.memory_space<vmem>>, vector<1x512xf32>
    tpu.vector_store %arg14[%c9_81, %c0_82], %166 {strides = array<i32>} : memref<12x512xf32, #tpu.memory_space<vmem>>, vector<1x512xf32>,
    %168 = vector.extract_strided_slice %132 {offsets = [16, 0], sizes = [1, 256], strides = [1, 1]} : vector<18x256xf32> to vector<1x256xf32>
    %169 = vector.extract_strided_slice %132 {offsets = [17, 0], sizes = [1, 256], strides = [1, 1]} : vector<18x256xf32> to vector<1x256xf32>
    %170 = tpu.concatenate %168, %169 in 1 : vector<1x256xf32>, vector<1x256xf32> -> vector<1x512xf32>
    %c10_83 = arith.constant 10 : index
    %c0_84 = arith.constant 0 : index
    %171 = vector.load %arg14[%c10_83, %c0_84] : memref<12x512xf32, #tpu.memory_space<vmem>>, vector<1x512xf32>
    tpu.vector_store %arg14[%c10_83, %c0_84], %170 {strides = array<i32>} : memref<12x512xf32, #tpu.memory_space<vmem>>, vector<1x512xf32>,
    %c0_85 = arith.constant 0 : index
    %c0_86 = arith.constant 0 : index
    %172 = vector.load %arg14[%c0_85, %c0_86] : memref<12x512xf32, #tpu.memory_space<vmem>>, vector<4x512xf32>
    %c1_87 = arith.constant 1 : index
    %c0_88 = arith.constant 0 : index
    %173 = vector.load %arg14[%c1_87, %c0_88] : memref<12x512xf32, #tpu.memory_space<vmem>>, vector<4x512xf32>
    %174 = tpu.concatenate %172, %173 in 1 : vector<4x512xf32>, vector<4x512xf32> -> vector<4x1024xf32>
    %c6_89 = arith.constant 6 : index
    %c0_90 = arith.constant 0 : index
    %175 = vector.load %arg14[%c6_89, %c0_90] : memref<12x512xf32, #tpu.memory_space<vmem>>, vector<4x512xf32>
    %c7_91 = arith.constant 7 : index
    %c0_92 = arith.constant 0 : index
    %176 = vector.load %arg14[%c7_91, %c0_92] : memref<12x512xf32, #tpu.memory_space<vmem>>, vector<4x512xf32>
    %177 = tpu.concatenate %175, %176 in 1 : vector<4x512xf32>, vector<4x512xf32> -> vector<4x1024xf32>
    %178 = tpu.concatenate %174, %177 in 0 : vector<4x1024xf32>, vector<4x1024xf32> -> vector<8x1024xf32>
    %c0_93 = arith.constant 0 : index
    %c0_94 = arith.constant 0 : index
    %179 = vector.load %arg4[%c0_93, %c0_94] : memref<1024x128xf32, #tpu.memory_space<vmem>>, vector<1024x128xf32>
    %cst_95 = arith.constant dense<0.000000e+00> : vector<8x128xf32>
    %180 = tpu.matmul %178, %179, %cst_95 {dimension_numbers = #tpu.dot_dimension_numbers<[1], [0], [0], [1], [0, 0, 1, 1], [], []>} : vector<8x1024xf32>, vector<1024x128xf32>, vector<8x128xf32> -> vector<8x128xf32>
    %c0_96 = arith.constant 0 : index
    %c0_97 = arith.constant 0 : index
    %181 = vector.load %arg11[%c0_96, %c0_97] : memref<32x128xf32, #tpu.memory_space<vmem>>, vector<32x128xf32>
    %cst_98 = arith.constant dense<0.000000e+00> : vector<128xf32>
    %182 = vector.multi_reduction <add>, %180, %cst_98 [0] : vector<8x128xf32> to vector<128xf32>
    %183 = vector.shape_cast %182 : vector<128xf32> to vector<1x128xf32>
    %cst_99 = arith.constant dense<0.000000e+00> : vector<1x32xf32>
    %184 = tpu.matmul %183, %181, %cst_99 {dimension_numbers = #tpu.dot_dimension_numbers<[1], [1], [0], [0], [0, 0, 1, 0], [], []>} : vector<1x128xf32>, vector<32x128xf32>, vector<1x32xf32> -> vector<1x32xf32>
    %185 = arith.mulf %180, %180 : vector<8x128xf32>
    %cst_100 = arith.constant dense<0.000000e+00> : vector<128xf32>
    %186 = vector.multi_reduction <add>, %185, %cst_100 [0] : vector<8x128xf32> to vector<128xf32>
    %187 = vector.shape_cast %186 : vector<128xf32> to vector<1x128xf32>
    %cst_101 = arith.constant dense<0.000000e+00> : vector<1x32xf32>
    %188 = tpu.matmul %187, %181, %cst_101 {dimension_numbers = #tpu.dot_dimension_numbers<[1], [1], [0], [0], [0, 0, 1, 0], [], []>} : vector<1x128xf32>, vector<32x128xf32>, vector<1x32xf32> -> vector<1x32xf32>
    %cst_102 = arith.constant 3.200000e+01 : f32
    %189 = vector.broadcast %cst_102 : f32 to vector<1x32xf32>
    %190 = arith.divf %184, %189 : vector<1x32xf32>
    %cst_103 = arith.constant 3.200000e+01 : f32
    %191 = vector.broadcast %cst_103 : f32 to vector<1x32xf32>
    %192 = arith.divf %188, %191 : vector<1x32xf32>
    %193 = arith.mulf %190, %190 : vector<1x32xf32>
    %194 = arith.subf %192, %193 : vector<1x32xf32>
    %c0_104 = arith.constant 0 : index
    %c0_105 = arith.constant 0 : index
    %195 = vector.load %arg8[%c0_104, %c0_105] : memref<1x32xf32, #tpu.memory_space<vmem>>, vector<1x32xf32>
    %cst_106 = arith.constant 9.99999974E-6 : f32
    %196 = vector.broadcast %cst_106 : f32 to vector<1x32xf32>
    %197 = arith.addf %194, %196 : vector<1x32xf32>
    %198 = math.rsqrt %197 : vector<1x32xf32>
    %199 = arith.mulf %195, %198 : vector<1x32xf32>
    %c0_107 = arith.constant 0 : index
    %c0_108 = arith.constant 0 : index
    %200 = vector.load %arg9[%c0_107, %c0_108] : memref<1x32xf32, #tpu.memory_space<vmem>>, vector<1x32xf32>
    %201 = arith.mulf %190, %199 : vector<1x32xf32>
    %202 = arith.subf %200, %201 : vector<1x32xf32>
    %cst_109 = arith.constant dense<0.000000e+00> : vector<1x128xf32>
    %203 = tpu.matmul %199, %181, %cst_109 {dimension_numbers = #tpu.dot_dimension_numbers<[1], [0], [0], [1], [0, 0, 1, 1], [], []>} : vector<1x32xf32>, vector<32x128xf32>, vector<1x128xf32> -> vector<1x128xf32>
    %cst_110 = arith.constant dense<0.000000e+00> : vector<1x128xf32>
    %204 = tpu.matmul %202, %181, %cst_110 {dimension_numbers = #tpu.dot_dimension_numbers<[1], [0], [0], [1], [0, 0, 1, 1], [], []>} : vector<1x32xf32>, vector<32x128xf32>, vector<1x128xf32> -> vector<1x128xf32>
    %205 = vector.broadcast %203 : vector<1x128xf32> to vector<8x128xf32>
    %206 = arith.mulf %180, %205 : vector<8x128xf32>
    %207 = vector.broadcast %204 : vector<1x128xf32> to vector<8x128xf32>
    %208 = arith.addf %206, %207 : vector<8x128xf32>
    %cst_111 = arith.constant 2.000000e-01 : f32
    %209 = vector.broadcast %cst_111 : f32 to vector<8x128xf32>
    %210 = arith.mulf %209, %208 : vector<8x128xf32>
    %211 = arith.maximumf %208, %210 : vector<8x128xf32>
    %212 = vector.extract_strided_slice %211 {offsets = [0, 0], sizes = [1, 128], strides = [1, 1]} : vector<8x128xf32> to vector<1x128xf32>
    %213 = vector.extract_strided_slice %211 {offsets = [1, 0], sizes = [1, 128], strides = [1, 1]} : vector<8x128xf32> to vector<1x128xf32>
    %214 = vector.extract_strided_slice %211 {offsets = [2, 0], sizes = [1, 128], strides = [1, 1]} : vector<8x128xf32> to vector<1x128xf32>
    %215 = vector.extract_strided_slice %211 {offsets = [3, 0], sizes = [1, 128], strides = [1, 1]} : vector<8x128xf32> to vector<1x128xf32>
    %216 = tpu.concatenate %212, %213, %214, %215 in 1 : vector<1x128xf32>, vector<1x128xf32>, vector<1x128xf32>, vector<1x128xf32> -> vector<1x512xf32>
    %217 = vector.extract_strided_slice %211 {offsets = [4, 0], sizes = [1, 128], strides = [1, 1]} : vector<8x128xf32> to vector<1x128xf32>
    %218 = vector.extract_strided_slice %211 {offsets = [5, 0], sizes = [1, 128], strides = [1, 1]} : vector<8x128xf32> to vector<1x128xf32>
    %219 = vector.extract_strided_slice %211 {offsets = [6, 0], sizes = [1, 128], strides = [1, 1]} : vector<8x128xf32> to vector<1x128xf32>
    %220 = vector.extract_strided_slice %211 {offsets = [7, 0], sizes = [1, 128], strides = [1, 1]} : vector<8x128xf32> to vector<1x128xf32>
    %221 = tpu.concatenate %217, %218, %219, %220 in 1 : vector<1x128xf32>, vector<1x128xf32>, vector<1x128xf32>, vector<1x128xf32> -> vector<1x512xf32>
    %222 = tpu.concatenate %216, %221 in 0 : vector<1x512xf32>, vector<1x512xf32> -> vector<2x512xf32>
    %c0_112 = arith.constant 0 : index
    %c0_113 = arith.constant 0 : index
    %223 = vector.load %arg5[%c0_112, %c0_113] : memref<512x128xf32, #tpu.memory_space<vmem>>, vector<512x128xf32>
    %cst_114 = arith.constant dense<0.000000e+00> : vector<2x128xf32>
    %224 = tpu.matmul %222, %223, %cst_114 {dimension_numbers = #tpu.dot_dimension_numbers<[1], [0], [0], [1], [0, 0, 1, 1], [], []>} : vector<2x512xf32>, vector<512x128xf32>, vector<2x128xf32> -> vector<2x128xf32>
    %cst_115 = arith.constant 0.000000e+00 : f32
    %225 = vector.broadcast %cst_115 : f32 to vector<2x128xf32>
    %226 = arith.subf %225, %224 : vector<2x128xf32>
    %227 = math.exp %226 : vector<2x128xf32>
    %cst_116 = arith.constant 1.000000e+00 : f32
    %228 = vector.broadcast %cst_116 : f32 to vector<2x128xf32>
    %229 = arith.addf %228, %227 : vector<2x128xf32>
    %cst_117 = arith.constant 1.000000e+00 : f32
    %230 = vector.broadcast %cst_117 : f32 to vector<2x128xf32>
    %231 = arith.divf %230, %229 : vector<2x128xf32>
    %c0_118 = arith.constant 0 : index
    %c0_119 = arith.constant 0 : index
    %232 = vector.load %arg12[%c0_118, %c0_119] : memref<2x128xf32, #tpu.memory_space<vmem>>, vector<2x128xf32>
    tpu.vector_store %arg12[%c0_118, %c0_119], %231 {strides = array<i32>} : memref<2x128xf32, #tpu.memory_space<vmem>>, vector<2x128xf32>,
    return
  }
  func.func @transform_0(%arg0: i32) -> (i32, i32) {
    %c0_i32 = arith.constant 0 : i32
    %c0_i32_0 = arith.constant 0 : i32
    %c0_i32_1 = arith.constant 0 : i32
    return %c0_i32, %c0_i32_0 : i32, i32
  }
  func.func @transform_1(%arg0: i32) -> (i32, i32) {
    %c0_i32 = arith.constant 0 : i32
    %c0_i32_0 = arith.constant 0 : i32
    %c0_i32_1 = arith.constant 0 : i32
    return %c0_i32, %c0_i32_0 : i32, i32
  }
  func.func @transform_2(%arg0: i32) -> (i32, i32) {
    %c0_i32 = arith.constant 0 : i32
    %c0_i32_0 = arith.constant 0 : i32
    %c0_i32_1 = arith.constant 0 : i32
    return %c0_i32, %c0_i32_0 : i32, i32
  }
  func.func @transform_3(%arg0: i32) -> (i32, i32) {
    %c0_i32 = arith.constant 0 : i32
    %c0_i32_0 = arith.constant 0 : i32
    %c0_i32_1 = arith.constant 0 : i32
    return %c0_i32, %c0_i32_0 : i32, i32
  }
  func.func @transform_4(%arg0: i32) -> (i32, i32) {
    %c0_i32 = arith.constant 0 : i32
    %c0_i32_0 = arith.constant 0 : i32
    %c0_i32_1 = arith.constant 0 : i32
    return %c0_i32, %c0_i32_0 : i32, i32
  }
  func.func @transform_5(%arg0: i32) -> (i32, i32) {
    %c0_i32 = arith.constant 0 : i32
    %c0_i32_0 = arith.constant 0 : i32
    %c0_i32_1 = arith.constant 0 : i32
    return %c0_i32, %c0_i32_0 : i32, i32
  }
  func.func @transform_6(%arg0: i32) -> (i32, i32) {
    %c0_i32 = arith.constant 0 : i32
    %c0_i32_0 = arith.constant 0 : i32
    %c0_i32_1 = arith.constant 0 : i32
    return %c0_i32, %c0_i32_0 : i32, i32
  }
  func.func @transform_7(%arg0: i32) -> (i32, i32) {
    %c0_i32 = arith.constant 0 : i32
    %c0_i32_0 = arith.constant 0 : i32
    %c0_i32_1 = arith.constant 0 : i32
    return %c0_i32, %c0_i32_0 : i32, i32
  }
  func.func @transform_8(%arg0: i32) -> (i32, i32) {
    %c0_i32 = arith.constant 0 : i32
    %c0_i32_0 = arith.constant 0 : i32
    %c0_i32_1 = arith.constant 0 : i32
    return %c0_i32, %c0_i32_0 : i32, i32
  }
  func.func @transform_9(%arg0: i32) -> (i32, i32) {
    %c0_i32 = arith.constant 0 : i32
    %c0_i32_0 = arith.constant 0 : i32
    %c0_i32_1 = arith.constant 0 : i32
    return %c0_i32, %c0_i32_0 : i32, i32
  }
  func.func @transform_10(%arg0: i32) -> (i32, i32) {
    %c0_i32 = arith.constant 0 : i32
    %c0_i32_0 = arith.constant 0 : i32
    %c0_i32_1 = arith.constant 0 : i32
    return %c0_i32, %c0_i32_0 : i32, i32
  }
  func.func @transform_11(%arg0: i32) -> (i32, i32) {
    %c0_i32 = arith.constant 0 : i32
    %c0_i32_0 = arith.constant 0 : i32
    %c0_i32_1 = arith.constant 0 : i32
    return %c0_i32, %c0_i32_0 : i32, i32
  }
}

</mosaic_0001>

<llo_original>
// kernel: discriminator_forward.1
$region0: #{discriminator_forward.1}
  #allocation0 [shape = 'u32[]', space=smem, size = 0x4, offset = 0x4, fixed_abs, tag = 'smem constant byte address 0x4 - core index']
  #allocation1 [shape = 'u32[72,128]{1,0:T(1,128)}', space=vmem, size = 0x9000, scoped, tag = 'internal scratch']
  #allocation2 [shape = 'f32[20,512]{1,0:T(8,128)}', space=vmem, size = 0xc000, scoped, tag = 'scratch operand']
  #allocation3 [shape = 'f32[12,512]{1,0:T(8,128)}', space=vmem, size = 0x8000, scoped, tag = 'scratch operand']
  %s0 = inlined_call_operand.vmem [shape: f32[38,256], index: 0, kind: input, shape index: {}]
  %s1 = inlined_call_operand.hbm [shape: f32[512,256], index: 1, kind: input, shape index: {}]
  %s2 = inlined_call_operand.hbm [shape: f32[1024,256], index: 2, kind: input, shape index: {}]
  %s3 = inlined_call_operand.hbm [shape: f32[1024,128], index: 3, kind: input, shape index: {}]
  %s4 = inlined_call_operand.vmem [shape: f32[512,128], index: 4, kind: input, shape index: {}]
  %s5 = inlined_call_operand.vmem [shape: f32[1,16], index: 5, kind: input, shape index: {}]
  %s6 = inlined_call_operand.vmem [shape: f32[1,16], index: 6, kind: input, shape index: {}]
  %s7 = inlined_call_operand.vmem [shape: f32[1,32], index: 7, kind: input, shape index: {}]
  %s8 = inlined_call_operand.vmem [shape: f32[1,32], index: 8, kind: input, shape index: {}]
  %s9 = inlined_call_operand.vmem [shape: f32[16,256], index: 9, kind: input, shape index: {}]
  %s10 = inlined_call_operand.vmem [shape: f32[32,128], index: 10, kind: input, shape index: {}]
  %s11 = inlined_call_operand.vmem [shape: f32[2,128], index: 11, kind: output, shape index: {}]
  %s12 = sld [smem:[#allocation0]]
  $region66: #{discriminator_forward.1} parent=0
    _
  %s14 = ssub.s32 1, %s12
  %s15 = scalar_select 0, %s14, %s12
  $region1: #{discriminator_forward.1} parent=0
    #allocation4 [shape = 'u8[524288]{0}', space=vmem, size = 0x80000, scoped, tag = 'input window, operand 1, single buffered']
    #allocation5 [shape = 's32[1]{0}', space=sflag, size = 0x4, scoped, tag = 'scoped memory for discriminator_forward.1']
    #allocation6 [shape = 'u8[1048576]{0}', space=vmem, size = 0x100000, scoped, tag = 'input window, operand 2, single buffered']
    #allocation7 [shape = 's32[1]{0}', space=sflag, size = 0x4, scoped, tag = 'scoped memory for discriminator_forward.1']
    #allocation8 [shape = 'u8[524288]{0}', space=vmem, size = 0x80000, scoped, tag = 'input window, operand 3, single buffered']
    %16 = vsyncpa [#allocation5], 0
    %17 = vsyncpa [#allocation7], 0
    // Predicated region
    $region2: #{discriminator_forward.1} parent=1 // pred_check
      _
    $region3: #{discriminator_forward.1} parent=1 // pred_check_branch
      %19 = sbr.rel (0) target = $region5
    $region4: #{discriminator_forward.1} parent=1 // pred_region
      _
    $region5: #{discriminator_forward.1} parent=1 // pred_fallthru
      _
    // Predicated region
    $region6: #{discriminator_forward.1} parent=1 // pred_check
      _
    $region7: #{discriminator_forward.1} parent=1 // pred_check_branch
      %21 = sbr.rel (0) target = $region9
    $region8: #{discriminator_forward.1} parent=1 // pred_region
      %23 = vsyncadd [#allocation5], 0
      %s24 = sshll.u32 %s1, 4
      %s25 = int_to_ptr.hbm [resolvable:$true] %s24
      %s26 = sshll.u32 [#allocation4], 4
      %s27 = int_to_ptr.vmem [resolvable:$true] %s26
      %32 = dma.hbm_to_vmem [thread:$0]  %s25, 16384, %s27, [#allocation5], 256, 256, 16
    $region9: #{discriminator_forward.1} parent=1 // pred_fallthru
      _
    // Predicated region
    $region10: #{discriminator_forward.1} parent=1 // pred_check
      _
    $region11: #{discriminator_forward.1} parent=1 // pred_check_branch
      %34 = sbr.rel (0) target = $region13
    $region12: #{discriminator_forward.1} parent=1 // pred_region
      %36 = vsyncadd [#allocation7], 0
      %s37 = sshll.u32 %s2, 4
      %s38 = int_to_ptr.hbm [resolvable:$true] %s37
      %s39 = sshll.u32 [#allocation6], 4
      %s40 = int_to_ptr.vmem [resolvable:$true] %s39
      %45 = dma.hbm_to_vmem [thread:$0]  %s38, 32768, %s40, [#allocation7], 256, 256, 16
    $region13: #{discriminator_forward.1} parent=1 // pred_fallthru
      _
    // Predicated region
    $region14: #{discriminator_forward.1} parent=1 // pred_check
      _
    $region15: #{discriminator_forward.1} parent=1 // pred_check_branch
      %47 = sbr.rel (0) target = $region17
    $region16: #{discriminator_forward.1} parent=1 // pred_region
      %49 = vsyncadd [#allocation7], 0
      %s50 = sshll.u32 %s3, 4
      %s51 = int_to_ptr.hbm [resolvable:$true] %s50
      %s52 = sshll.u32 [#allocation8], 4
      %s53 = int_to_ptr.vmem [resolvable:$true] %s52
      %58 = dma.hbm_to_vmem [thread:$0]  %s51, 16384, %s53, [#allocation7], 128, 128, 8
    $region17: #{discriminator_forward.1} parent=1 // pred_fallthru
      _
    // Predicated region
    $region18: #{discriminator_forward.1} parent=1 // pred_check
      _
    $region19: #{discriminator_forward.1} parent=1 // pred_check_branch
      %60 = sbr.rel (0) target = $region21
    $region20: #{discriminator_forward.1} parent=1 // pred_region
      _
    $region21: #{discriminator_forward.1} parent=1 // pred_fallthru
      _
    // Predicated region
    $region22: #{discriminator_forward.1} parent=1 // pred_check
      _
    $region23: #{discriminator_forward.1} parent=1 // pred_check_branch
      %62 = sbr.rel (0) target = $region25
    $region24: #{discriminator_forward.1} parent=1 // pred_region
      _
    $region25: #{discriminator_forward.1} parent=1 // pred_fallthru
      _
    // Predicated region
    $region26: #{discriminator_forward.1} parent=1 // pred_check
      _
    $region27: #{discriminator_forward.1} parent=1 // pred_check_branch
      %64 = sbr.rel (0) target = $region29
    $region28: #{discriminator_forward.1} parent=1 // pred_region
      _
    $region29: #{discriminator_forward.1} parent=1 // pred_fallthru
      _
    // Predicated region
    $region30: #{discriminator_forward.1} parent=1 // pred_check
      _
    $region31: #{discriminator_forward.1} parent=1 // pred_check_branch
      %66 = sbr.rel (0) target = $region33
    $region32: #{discriminator_forward.1} parent=1 // pred_region
      _
    $region33: #{discriminator_forward.1} parent=1 // pred_fallthru
      _
    // Predicated region
    $region34: #{discriminator_forward.1} parent=1 // pred_check
      _
    $region35: #{discriminator_forward.1} parent=1 // pred_check_branch
      %68 = sbr.rel (0) target = $region37
    $region36: #{discriminator_forward.1} parent=1 // pred_region
      _
    $region37: #{discriminator_forward.1} parent=1 // pred_fallthru
      _
    // Predicated region
    $region38: #{discriminator_forward.1} parent=1 // pred_check
      _
    $region39: #{discriminator_forward.1} parent=1 // pred_check_branch
      %70 = sbr.rel (0) target = $region41
    $region40: #{discriminator_forward.1} parent=1 // pred_region
      _
    $region41: #{discriminator_forward.1} parent=1 // pred_fallthru
      _
    // Predicated region
    $region42: #{discriminator_forward.1} parent=1 // pred_check
      _
    $region43: #{discriminator_forward.1} parent=1 // pred_check_branch
      %72 = sbr.rel (0) target = $region45
    $region44: #{discriminator_forward.1} parent=1 // pred_region
      _
    $region45: #{discriminator_forward.1} parent=1 // pred_fallthru
      _
    // Predicated region
    $region46: #{discriminator_forward.1} parent=1 // pred_check
      _
    $region47: #{discriminator_forward.1} parent=1 // pred_check_branch
      %74 = sbr.rel (0) target = $region49
    $region48: #{discriminator_forward.1} parent=1 // pred_region
      %76 = dma.done [#allocation5], 16384
    $region49: #{discriminator_forward.1} parent=1 // pred_fallthru
      _
    // Predicated region
    $region50: #{discriminator_forward.1} parent=1 // pred_check
      _
    $region51: #{discriminator_forward.1} parent=1 // pred_check_branch
      %78 = sbr.rel (0) target = $region53
    $region52: #{discriminator_forward.1} parent=1 // pred_region
      %80 = dma.done [#allocation7], 32768
    $region53: #{discriminator_forward.1} parent=1 // pred_fallthru
      _
    // Predicated region
    $region54: #{discriminator_forward.1} parent=1 // pred_check
      _
    $region55: #{discriminator_forward.1} parent=1 // pred_check_branch
      %82 = sbr.rel (0) target = $region57
    $region56: #{discriminator_forward.1} parent=1 // pred_region
      %84 = dma.done [#allocation7], 16384
    $region57: #{discriminator_forward.1} parent=1 // pred_fallthru
      _
    %85 = vst [vmem:[#allocation2] sm:$0xff] 0.0
    %86 = vst [vmem:[#allocation2 + $0x8] sm:$0xff] 0.0
    %87 = vst [vmem:[#allocation2 + $0x10] sm:$0xff] 0.0
    %88 = vst [vmem:[#allocation2 + $0x18] sm:$0xff] 0.0
    %89 = vst [vmem:[#allocation2 + $0x20] sm:$0xff] 0.0
    %90 = vst [vmem:[#allocation2 + $0x28] sm:$0xff] 0.0
    %91 = vst [vmem:[#allocation2 + $0x30] sm:$0xff] 0.0
    %92 = vst [vmem:[#allocation2 + $0x38] sm:$0xff] 0.0
    %93 = vst [vmem:[#allocation2 + $0x40] sm:$0xf] 0.0
    %94 = vst [vmem:[#allocation2 + $0x48] sm:$0xf] 0.0
    %95 = vst [vmem:[#allocation2 + $0x50] sm:$0xf] 0.0
    %96 = vst [vmem:[#allocation2 + $0x58] sm:$0xf] 0.0
    %97 = vst [vmem:[#allocation3] sm:$0xff] 0.0
    %98 = vst [vmem:[#allocation3 + $0x8] sm:$0xff] 0.0
    %99 = vst [vmem:[#allocation3 + $0x10] sm:$0xff] 0.0
    %100 = vst [vmem:[#allocation3 + $0x18] sm:$0xff] 0.0
    %101 = vst [vmem:[#allocation3 + $0x20] sm:$0xf] 0.0
    %102 = vst [vmem:[#allocation3 + $0x28] sm:$0xf] 0.0
    %103 = vst [vmem:[#allocation3 + $0x30] sm:$0xf] 0.0
    %104 = vst [vmem:[#allocation3 + $0x38] sm:$0xf] 0.0
    %v105 = vld [vmem:[%s0] sm:$0xff]
    %v106 = vld [vmem:[%s0 + $0x8] sm:$0xff]
    %v107 = vld [vmem:[%s0 + $0x10] sm:$0xff]
    %v108 = vld [vmem:[%s0 + $0x18] sm:$0xff]
    %v109 = vld [vmem:[%s0 + $0x20] sm:$0x3]
    %v110 = vld [vmem:[%s0 + $0x28] sm:$0x3]
    %v111 = vld [vmem:[%s0] sm:$0xfe]
    %v112 = vld [vmem:[%s0 + $0x8] sm:$0xfe]
    %v113 = vld [vmem:[%s0 + $0x20] sm:$0x7]
    %v114 = vld [vmem:[%s0 + $0x28] sm:$0x7]
    %vm121 = vcmask 1046528
    %v122 = vrot.slane %v111, 1
    %v123 = vrot.slane %v107, 1
    %v124 = vsel %vm121, %v122, %v123
    %v125 = vrot.slane %v112, 1
    %v126 = vrot.slane %v108, 1
    %v127 = vsel %vm121, %v125, %v126
    %v128 = vrot.slane %v113, 1
    %v129 = vsel %vm121, %v123, %v128
    %v130 = vrot.slane %v114, 1
    %v131 = vsel %vm121, %v126, %v130
    %v138 = vld [vmem:[%s0 + $0x20] sm:$0xf8]
    %v139 = vld [vmem:[%s0 + $0x28] sm:$0xf8]
    %v140 = vld [vmem:[%s0 + $0x30] sm:$0xff]
    %v141 = vld [vmem:[%s0 + $0x38] sm:$0xff]
    %v142 = vld [vmem:[%s0 + $0x40] sm:$0x1f]
    %v143 = vld [vmem:[%s0 + $0x48] sm:$0x1f]
    %v144 = vld [vmem:[%s0 + $0x20] sm:$0xf0]
    %v145 = vld [vmem:[%s0 + $0x28] sm:$0xf0]
    %v146 = vld [vmem:[%s0 + $0x40] sm:$0x3f]
    %v147 = vld [vmem:[%s0 + $0x48] sm:$0x3f]
    %v154 = vrot.slane %v144, 1
    %v155 = vrot.slane %v140, 1
    %v156 = vsel %vm121, %v154, %v155
    %v157 = vrot.slane %v145, 1
    %v158 = vrot.slane %v141, 1
    %v159 = vsel %vm121, %v157, %v158
    %v160 = vrot.slane %v146, 1
    %v161 = vsel %vm121, %v155, %v160
    %v162 = vrot.slane %v147, 1
    %v163 = vsel %vm121, %v158, %v162
    %v168 = vrot.slane %v138, 1
    %v169 = vsel %vm121, %v168, %v155
    %v170 = vrot.slane %v139, 1
    %v171 = vsel %vm121, %v170, %v158
    %v172 = vrot.slane %v156, 1
    %v173 = vrot.slane %v161, 1
    %v174 = vsel %vm121, %v172, %v173
    %v175 = vrot.slane %v159, 1
    %v176 = vrot.slane %v163, 1
    %v177 = vsel %vm121, %v175, %v176
    %v178 = vrot.slane %v142, 1
    %v179 = vsel %vm121, %v155, %v178
    %v180 = vrot.slane %v143, 1
    %v181 = vsel %vm121, %v158, %v180
    %v182 = vrot.slane %v160, 1
    %v183 = vsel %vm121, %v173, %v182
    %v184 = vrot.slane %v162, 1
    %v185 = vsel %vm121, %v176, %v184
    %vm198 = vcmask 1041408
    %v199 = vsel %vm198, %v109, %v169
    %v200 = vsel %vm198, %v110, %v171
    %v201 = vsel %vm198, %v128, %v174
    %v202 = vsel %vm198, %v130, %v177
    %v203 = vld [vmem:[#allocation4] sm:$0xff]
    %v204 = vld [vmem:[#allocation4 + $0x8] sm:$0xff]
    %v205 = vld [vmem:[#allocation4 + $0x10] sm:$0xff]
    %v206 = vld [vmem:[#allocation4 + $0x18] sm:$0xff]
    %v207 = vld [vmem:[#allocation4 + $0x20] sm:$0xff]
    %v208 = vld [vmem:[#allocation4 + $0x28] sm:$0xff]
    %v209 = vld [vmem:[#allocation4 + $0x30] sm:$0xff]
    %v210 = vld [vmem:[#allocation4 + $0x38] sm:$0xff]
    %v211 = vld [vmem:[#allocation4 + $0x40] sm:$0xff]
    %v212 = vld [vmem:[#allocation4 + $0x48] sm:$0xff]
    %v213 = vld [vmem:[#allocation4 + $0x50] sm:$0xff]
    %v214 = vld [vmem:[#allocation4 + $0x58] sm:$0xff]
    %v215 = vld [vmem:[#allocation4 + $0x60] sm:$0xff]
    %v216 = vld [vmem:[#allocation4 + $0x68] sm:$0xff]
    %v217 = vld [vmem:[#allocation4 + $0x70] sm:$0xff]
    %v218 = vld [vmem:[#allocation4 + $0x78] sm:$0xff]
    %v219 = vld [vmem:[#allocation4 + $0x80] sm:$0xff]
    %v220 = vld [vmem:[#allocation4 + $0x88] sm:$0xff]
    %v221 = vld [vmem:[#allocation4 + $0x90] sm:$0xff]
    %v222 = vld [vmem:[#allocation4 + $0x98] sm:$0xff]
    %v223 = vld [vmem:[#allocation4 + $0xa0] sm:$0xff]
    %v224 = vld [vmem:[#allocation4 + $0xa8] sm:$0xff]
    %v225 = vld [vmem:[#allocation4 + $0xb0] sm:$0xff]
    %v226 = vld [vmem:[#allocation4 + $0xb8] sm:$0xff]
    %v227 = vld [vmem:[#allocation4 + $0xc0] sm:$0xff]
    %v228 = vld [vmem:[#allocation4 + $0xc8] sm:$0xff]
    %v229 = vld [vmem:[#allocation4 + $0xd0] sm:$0xff]
    %v230 = vld [vmem:[#allocation4 + $0xd8] sm:$0xff]
    %v231 = vld [vmem:[#allocation4 + $0xe0] sm:$0xff]
    %v232 = vld [vmem:[#allocation4 + $0xe8] sm:$0xff]
    %v233 = vld [vmem:[#allocation4 + $0xf0] sm:$0xff]
    %v234 = vld [vmem:[#allocation4 + $0xf8] sm:$0xff]
    %v235 = vld [vmem:[#allocation4 + $0x100] sm:$0xff]
    %v236 = vld [vmem:[#allocation4 + $0x108] sm:$0xff]
    %v237 = vld [vmem:[#allocation4 + $0x110] sm:$0xff]
    %v238 = vld [vmem:[#allocation4 + $0x118] sm:$0xff]
    %v239 = vld [vmem:[#allocation4 + $0x120] sm:$0xff]
    %v240 = vld [vmem:[#allocation4 + $0x128] sm:$0xff]
    %v241 = vld [vmem:[#allocation4 + $0x130] sm:$0xff]
    %v242 = vld [vmem:[#allocation4 + $0x138] sm:$0xff]
    %v243 = vld [vmem:[#allocation4 + $0x140] sm:$0xff]
    %v244 = vld [vmem:[#allocation4 + $0x148] sm:$0xff]
    %v245 = vld [vmem:[#allocation4 + $0x150] sm:$0xff]
    %v246 = vld [vmem:[#allocation4 + $0x158] sm:$0xff]
    %v247 = vld [vmem:[#allocation4 + $0x160] sm:$0xff]
    %v248 = vld [vmem:[#allocation4 + $0x168] sm:$0xff]
    %v249 = vld [vmem:[#allocation4 + $0x170] sm:$0xff]
    %v250 = vld [vmem:[#allocation4 + $0x178] sm:$0xff]
    %v251 = vld [vmem:[#allocation4 + $0x180] sm:$0xff]
    %v252 = vld [vmem:[#allocation4 + $0x188] sm:$0xff]
    %v253 = vld [vmem:[#allocation4 + $0x190] sm:$0xff]
    %v254 = vld [vmem:[#allocation4 + $0x198] sm:$0xff]
    %v255 = vld [vmem:[#allocation4 + $0x1a0] sm:$0xff]
    %v256 = vld [vmem:[#allocation4 + $0x1a8] sm:$0xff]
    %v257 = vld [vmem:[#allocation4 + $0x1b0] sm:$0xff]
    %v258 = vld [vmem:[#allocation4 + $0x1b8] sm:$0xff]
    %v259 = vld [vmem:[#allocation4 + $0x1c0] sm:$0xff]
    %v260 = vld [vmem:[#allocation4 + $0x1c8] sm:$0xff]
    %v261 = vld [vmem:[#allocation4 + $0x1d0] sm:$0xff]
    %v262 = vld [vmem:[#allocation4 + $0x1d8] sm:$0xff]
    %v263 = vld [vmem:[#allocation4 + $0x1e0] sm:$0xff]
    %v264 = vld [vmem:[#allocation4 + $0x1e8] sm:$0xff]
    %v265 = vld [vmem:[#allocation4 + $0x1f0] sm:$0xff]
    %v266 = vld [vmem:[#allocation4 + $0x1f8] sm:$0xff]
    %v267 = vld [vmem:[#allocation4 + $0x200] sm:$0xff]
    %v268 = vld [vmem:[#allocation4 + $0x208] sm:$0xff]
    %v269 = vld [vmem:[#allocation4 + $0x210] sm:$0xff]
    %v270 = vld [vmem:[#allocation4 + $0x218] sm:$0xff]
    %v271 = vld [vmem:[#allocation4 + $0x220] sm:$0xff]
    %v272 = vld [vmem:[#allocation4 + $0x228] sm:$0xff]
    %v273 = vld [vmem:[#allocation4 + $0x230] sm:$0xff]
    %v274 = vld [vmem:[#allocation4 + $0x238] sm:$0xff]
    %v275 = vld [vmem:[#allocation4 + $0x240] sm:$0xff]
    %v276 = vld [vmem:[#allocation4 + $0x248] sm:$0xff]
    %v277 = vld [vmem:[#allocation4 + $0x250] sm:$0xff]
    %v278 = vld [vmem:[#allocation4 + $0x258] sm:$0xff]
    %v279 = vld [vmem:[#allocation4 + $0x260] sm:$0xff]
    %v280 = vld [vmem:[#allocation4 + $0x268] sm:$0xff]
    %v281 = vld [vmem:[#allocation4 + $0x270] sm:$0xff]
    %v282 = vld [vmem:[#allocation4 + $0x278] sm:$0xff]
    %v283 = vld [vmem:[#allocation4 + $0x280] sm:$0xff]
    %v284 = vld [vmem:[#allocation4 + $0x288] sm:$0xff]
    %v285 = vld [vmem:[#allocation4 + $0x290] sm:$0xff]
    %v286 = vld [vmem:[#allocation4 + $0x298] sm:$0xff]
    %v287 = vld [vmem:[#allocation4 + $0x2a0] sm:$0xff]
    %v288 = vld [vmem:[#allocation4 + $0x2a8] sm:$0xff]
    %v289 = vld [vmem:[#allocation4 + $0x2b0] sm:$0xff]
    %v290 = vld [vmem:[#allocation4 + $0x2b8] sm:$0xff]
    %v291 = vld [vmem:[#allocation4 + $0x2c0] sm:$0xff]
    %v292 = vld [vmem:[#allocation4 + $0x2c8] sm:$0xff]
    %v293 = vld [vmem:[#allocation4 + $0x2d0] sm:$0xff]
    %v294 = vld [vmem:[#allocation4 + $0x2d8] sm:$0xff]
    %v295 = vld [vmem:[#allocation4 + $0x2e0] sm:$0xff]
    %v296 = vld [vmem:[#allocation4 + $0x2e8] sm:$0xff]
    %v297 = vld [vmem:[#allocation4 + $0x2f0] sm:$0xff]
    %v298 = vld [vmem:[#allocation4 + $0x2f8] sm:$0xff]
    %v299 = vld [vmem:[#allocation4 + $0x300] sm:$0xff]
    %v300 = vld [vmem:[#allocation4 + $0x308] sm:$0xff]
    %v301 = vld [vmem:[#allocation4 + $0x310] sm:$0xff]
    %v302 = vld [vmem:[#allocation4 + $0x318] sm:$0xff]
    %v303 = vld [vmem:[#allocation4 + $0x320] sm:$0xff]
    %v304 = vld [vmem:[#allocation4 + $0x328] sm:$0xff]
    %v305 = vld [vmem:[#allocation4 + $0x330] sm:$0xff]
    %v306 = vld [vmem:[#allocation4 + $0x338] sm:$0xff]
    %v307 = vld [vmem:[#allocation4 + $0x340] sm:$0xff]
    %v308 = vld [vmem:[#allocation4 + $0x348] sm:$0xff]
    %v309 = vld [vmem:[#allocation4 + $0x350] sm:$0xff]
    %v310 = vld [vmem:[#allocation4 + $0x358] sm:$0xff]
    %v311 = vld [vmem:[#allocation4 + $0x360] sm:$0xff]
    %v312 = vld [vmem:[#allocation4 + $0x368] sm:$0xff]
    %v313 = vld [vmem:[#allocation4 + $0x370] sm:$0xff]
    %v314 = vld [vmem:[#allocation4 + $0x378] sm:$0xff]
    %v315 = vld [vmem:[#allocation4 + $0x380] sm:$0xff]
    %v316 = vld [vmem:[#allocation4 + $0x388] sm:$0xff]
    %v317 = vld [vmem:[#allocation4 + $0x390] sm:$0xff]
    %v318 = vld [vmem:[#allocation4 + $0x398] sm:$0xff]
    %v319 = vld [vmem:[#allocation4 + $0x3a0] sm:$0xff]
    %v320 = vld [vmem:[#allocation4 + $0x3a8] sm:$0xff]
    %v321 = vld [vmem:[#allocation4 + $0x3b0] sm:$0xff]
    %v322 = vld [vmem:[#allocation4 + $0x3b8] sm:$0xff]
    %v323 = vld [vmem:[#allocation4 + $0x3c0] sm:$0xff]
    %v324 = vld [vmem:[#allocation4 + $0x3c8] sm:$0xff]
    %v325 = vld [vmem:[#allocation4 + $0x3d0] sm:$0xff]
    %v326 = vld [vmem:[#allocation4 + $0x3d8] sm:$0xff]
    %v327 = vld [vmem:[#allocation4 + $0x3e0] sm:$0xff]
    %v328 = vld [vmem:[#allocation4 + $0x3e8] sm:$0xff]
    %v329 = vld [vmem:[#allocation4 + $0x3f0] sm:$0xff]
    %v330 = vld [vmem:[#allocation4 + $0x3f8] sm:$0xff]
    %331 = vmatpush.msra.mxu0 %v233
    %332 = vmatpush.msra.mxu0 %v231
    %333 = vmatpush.msra.mxu0 %v229
    %334 = vmatpush.msra.mxu0 %v227
    %335 = vmatpush.msra.mxu0 %v225
    %336 = vmatpush.msra.mxu0 %v223
    %337 = vmatpush.msra.mxu0 %v221
    %338 = vmatpush.msra.mxu0 %v219
    %339 = vmatpush.msra.mxu0 %v217
    %340 = vmatpush.msra.mxu0 %v215
    %341 = vmatpush.msra.mxu0 %v213
    %342 = vmatpush.msra.mxu0 %v211
    %343 = vmatpush.msra.mxu0 %v209
    %344 = vmatpush.msra.mxu0 %v207
    %345 = vmatpush.msra.mxu0 %v205
    %346 = vmatpush.msra.mxu0 %v203
    %347 = vmatmul.f32.gmra.mxu0 %v105
    %v348 = vpop.f32.mrf.mxu0
    %v349 = vadd.f32 0.0, %v348
    %350 = vmatmul.f32.gmra.mxu0 %v107
    %v351 = vpop.f32.mrf.mxu0
    %v352 = vadd.f32 0.0, %v351
    %353 = vmatmul.f32.gmra.mxu0 %v199
    %v354 = vpop.f32.mrf.mxu0
    %v355 = vadd.f32 0.0, %v354
    %356 = vmatmul.f32.gmra.mxu0 %v179
    %v357 = vpop.f32.mrf.mxu0
    %v358 = vadd.f32 0.0, %v357
    %359 = vmatmul.f32.gmra.mxu0 %v178
    %v360 = vpop.f32.mrf.mxu0
    %v361 = vadd.f32 0.0, %v360
    %362 = vdwg.mxu0
    %363 = vmatpush.msra.mxu0 %v265
    %364 = vmatpush.msra.mxu0 %v263
    %365 = vmatpush.msra.mxu0 %v261
    %366 = vmatpush.msra.mxu0 %v259
    %367 = vmatpush.msra.mxu0 %v257
    %368 = vmatpush.msra.mxu0 %v255
    %369 = vmatpush.msra.mxu0 %v253
    %370 = vmatpush.msra.mxu0 %v251
    %371 = vmatpush.msra.mxu0 %v249
    %372 = vmatpush.msra.mxu0 %v247
    %373 = vmatpush.msra.mxu0 %v245
    %374 = vmatpush.msra.mxu0 %v243
    %375 = vmatpush.msra.mxu0 %v241
    %376 = vmatpush.msra.mxu0 %v239
    %377 = vmatpush.msra.mxu0 %v237
    %378 = vmatpush.msra.mxu0 %v235
    %379 = vmatmul.f32.gmra.mxu0 %v106
    %v380 = vpop.f32.mrf.mxu0
    %v381 = vadd.f32 %v349, %v380
    %382 = vmatmul.f32.gmra.mxu0 %v108
    %v383 = vpop.f32.mrf.mxu0
    %v384 = vadd.f32 %v352, %v383
    %385 = vmatmul.f32.gmra.mxu0 %v200
    %v386 = vpop.f32.mrf.mxu0
    %v387 = vadd.f32 %v355, %v386
    %388 = vmatmul.f32.gmra.mxu0 %v181
    %v389 = vpop.f32.mrf.mxu0
    %v390 = vadd.f32 %v358, %v389
    %391 = vmatmul.f32.gmra.mxu0 %v180
    %v392 = vpop.f32.mrf.mxu0
    %v393 = vadd.f32 %v361, %v392
    %394 = vdwg.mxu0
    %395 = vmatpush.msra.mxu0 %v297
    %396 = vmatpush.msra.mxu0 %v295
    %397 = vmatpush.msra.mxu0 %v293
    %398 = vmatpush.msra.mxu0 %v291
    %399 = vmatpush.msra.mxu0 %v289
    %400 = vmatpush.msra.mxu0 %v287
    %401 = vmatpush.msra.mxu0 %v285
    %402 = vmatpush.msra.mxu0 %v283
    %403 = vmatpush.msra.mxu0 %v281
    %404 = vmatpush.msra.mxu0 %v279
    %405 = vmatpush.msra.mxu0 %v277
    %406 = vmatpush.msra.mxu0 %v275
    %407 = vmatpush.msra.mxu0 %v273
    %408 = vmatpush.msra.mxu0 %v271
    %409 = vmatpush.msra.mxu0 %v269
    %410 = vmatpush.msra.mxu0 %v267
    %411 = vmatmul.f32.gmra.mxu0 %v124
    %v412 = vpop.f32.mrf.mxu0
    %v413 = vadd.f32 %v381, %v412
    %414 = vmatmul.f32.gmra.mxu0 %v129
    %v415 = vpop.f32.mrf.mxu0
    %v416 = vadd.f32 %v384, %v415
    %417 = vmatmul.f32.gmra.mxu0 %v201
    %v418 = vpop.f32.mrf.mxu0
    %v419 = vadd.f32 %v387, %v418
    %420 = vmatmul.f32.gmra.mxu0 %v183
    %v421 = vpop.f32.mrf.mxu0
    %v422 = vadd.f32 %v390, %v421
    %423 = vmatmul.f32.gmra.mxu0 %v182
    %v424 = vpop.f32.mrf.mxu0
    %v425 = vadd.f32 %v393, %v424
    %426 = vdwg.mxu0
    %427 = vmatpush.msra.mxu0 %v329
    %428 = vmatpush.msra.mxu0 %v327
    %429 = vmatpush.msra.mxu0 %v325
    %430 = vmatpush.msra.mxu0 %v323
    %431 = vmatpush.msra.mxu0 %v321
    %432 = vmatpush.msra.mxu0 %v319
    %433 = vmatpush.msra.mxu0 %v317
    %434 = vmatpush.msra.mxu0 %v315
    %435 = vmatpush.msra.mxu0 %v313
    %436 = vmatpush.msra.mxu0 %v311
    %437 = vmatpush.msra.mxu0 %v309
    %438 = vmatpush.msra.mxu0 %v307
    %439 = vmatpush.msra.mxu0 %v305
    %440 = vmatpush.msra.mxu0 %v303
    %441 = vmatpush.msra.mxu0 %v301
    %442 = vmatpush.msra.mxu0 %v299
    %443 = vmatmul.f32.gmra.mxu0 %v127
    %v444 = vpop.f32.mrf.mxu0
    %v445 = vadd.f32 %v413, %v444
    %446 = vmatmul.f32.gmra.mxu0 %v131
    %v447 = vpop.f32.mrf.mxu0
    %v448 = vadd.f32 %v416, %v447
    %449 = vmatmul.f32.gmra.mxu0 %v202
    %v450 = vpop.f32.mrf.mxu0
    %v451 = vadd.f32 %v419, %v450
    %452 = vmatmul.f32.gmra.mxu0 %v185
    %v453 = vpop.f32.mrf.mxu0
    %v454 = vadd.f32 %v422, %v453
    %455 = vmatmul.f32.gmra.mxu0 %v184
    %v456 = vpop.f32.mrf.mxu0
    %v457 = vadd.f32 %v425, %v456
    %458 = vdwg.mxu0
    %459 = vmatpush.msra.mxu0 %v234
    %460 = vmatpush.msra.mxu0 %v232
    %461 = vmatpush.msra.mxu0 %v230
    %462 = vmatpush.msra.mxu0 %v228
    %463 = vmatpush.msra.mxu0 %v226
    %464 = vmatpush.msra.mxu0 %v224
    %465 = vmatpush.msra.mxu0 %v222
    %466 = vmatpush.msra.mxu0 %v220
    %467 = vmatpush.msra.mxu0 %v218
    %468 = vmatpush.msra.mxu0 %v216
    %469 = vmatpush.msra.mxu0 %v214
    %470 = vmatpush.msra.mxu0 %v212
    %471 = vmatpush.msra.mxu0 %v210
    %472 = vmatpush.msra.mxu0 %v208
    %473 = vmatpush.msra.mxu0 %v206
    %474 = vmatpush.msra.mxu0 %v204
    %475 = vmatmul.f32.gmra.mxu0 %v105
    %v476 = vpop.f32.mrf.mxu0
    %v477 = vadd.f32 0.0, %v476
    %478 = vmatmul.f32.gmra.mxu0 %v107
    %v479 = vpop.f32.mrf.mxu0
    %v480 = vadd.f32 0.0, %v479
    %481 = vmatmul.f32.gmra.mxu0 %v199
    %v482 = vpop.f32.mrf.mxu0
    %v483 = vadd.f32 0.0, %v482
    %484 = vmatmul.f32.gmra.mxu0 %v179
    %v485 = vpop.f32.mrf.mxu0
    %v486 = vadd.f32 0.0, %v485
    %487 = vmatmul.f32.gmra.mxu0 %v178
    %v488 = vpop.f32.mrf.mxu0
    %v489 = vadd.f32 0.0, %v488
    %490 = vdwg.mxu0
    %491 = vmatpush.msra.mxu0 %v266
    %492 = vmatpush.msra.mxu0 %v264
    %493 = vmatpush.msra.mxu0 %v262
    %494 = vmatpush.msra.mxu0 %v260
    %495 = vmatpush.msra.mxu0 %v258
    %496 = vmatpush.msra.mxu0 %v256
    %497 = vmatpush.msra.mxu0 %v254
    %498 = vmatpush.msra.mxu0 %v252
    %499 = vmatpush.msra.mxu0 %v250
    %500 = vmatpush.msra.mxu0 %v248
    %501 = vmatpush.msra.mxu0 %v246
    %502 = vmatpush.msra.mxu0 %v244
    %503 = vmatpush.msra.mxu0 %v242
    %504 = vmatpush.msra.mxu0 %v240
    %505 = vmatpush.msra.mxu0 %v238
    %506 = vmatpush.msra.mxu0 %v236
    %507 = vmatmul.f32.gmra.mxu0 %v106
    %v508 = vpop.f32.mrf.mxu0
    %v509 = vadd.f32 %v477, %v508
    %510 = vmatmul.f32.gmra.mxu0 %v108
    %v511 = vpop.f32.mrf.mxu0
    %v512 = vadd.f32 %v480, %v511
    %513 = vmatmul.f32.gmra.mxu0 %v200
    %v514 = vpop.f32.mrf.mxu0
    %v515 = vadd.f32 %v483, %v514
    %516 = vmatmul.f32.gmra.mxu0 %v181
    %v517 = vpop.f32.mrf.mxu0
    %v518 = vadd.f32 %v486, %v517
    %519 = vmatmul.f32.gmra.mxu0 %v180
    %v520 = vpop.f32.mrf.mxu0
    %v521 = vadd.f32 %v489, %v520
    %522 = vdwg.mxu0
    %523 = vmatpush.msra.mxu0 %v298
    %524 = vmatpush.msra.mxu0 %v296
    %525 = vmatpush.msra.mxu0 %v294
    %526 = vmatpush.msra.mxu0 %v292
    %527 = vmatpush.msra.mxu0 %v290
    %528 = vmatpush.msra.mxu0 %v288
    %529 = vmatpush.msra.mxu0 %v286
    %530 = vmatpush.msra.mxu0 %v284
    %531 = vmatpush.msra.mxu0 %v282
    %532 = vmatpush.msra.mxu0 %v280
    %533 = vmatpush.msra.mxu0 %v278
    %534 = vmatpush.msra.mxu0 %v276
    %535 = vmatpush.msra.mxu0 %v274
    %536 = vmatpush.msra.mxu0 %v272
    %537 = vmatpush.msra.mxu0 %v270
    %538 = vmatpush.msra.mxu0 %v268
    %539 = vmatmul.f32.gmra.mxu0 %v124
    %v540 = vpop.f32.mrf.mxu0
    %v541 = vadd.f32 %v509, %v540
    %542 = vmatmul.f32.gmra.mxu0 %v129
    %v543 = vpop.f32.mrf.mxu0
    %v544 = vadd.f32 %v512, %v543
    %545 = vmatmul.f32.gmra.mxu0 %v201
    %v546 = vpop.f32.mrf.mxu0
    %v547 = vadd.f32 %v515, %v546
    %548 = vmatmul.f32.gmra.mxu0 %v183
    %v549 = vpop.f32.mrf.mxu0
    %v550 = vadd.f32 %v518, %v549
    %551 = vmatmul.f32.gmra.mxu0 %v182
    %v552 = vpop.f32.mrf.mxu0
    %v553 = vadd.f32 %v521, %v552
    %554 = vdwg.mxu0
    %555 = vmatpush.msra.mxu0 %v330
    %556 = vmatpush.msra.mxu0 %v328
    %557 = vmatpush.msra.mxu0 %v326
    %558 = vmatpush.msra.mxu0 %v324
    %559 = vmatpush.msra.mxu0 %v322
    %560 = vmatpush.msra.mxu0 %v320
    %561 = vmatpush.msra.mxu0 %v318
    %562 = vmatpush.msra.mxu0 %v316
    %563 = vmatpush.msra.mxu0 %v314
    %564 = vmatpush.msra.mxu0 %v312
    %565 = vmatpush.msra.mxu0 %v310
    %566 = vmatpush.msra.mxu0 %v308
    %567 = vmatpush.msra.mxu0 %v306
    %568 = vmatpush.msra.mxu0 %v304
    %569 = vmatpush.msra.mxu0 %v302
    %570 = vmatpush.msra.mxu0 %v300
    %571 = vmatmul.f32.gmra.mxu0 %v127
    %v572 = vpop.f32.mrf.mxu0
    %v573 = vadd.f32 %v541, %v572
    %574 = vmatmul.f32.gmra.mxu0 %v131
    %v575 = vpop.f32.mrf.mxu0
    %v576 = vadd.f32 %v544, %v575
    %577 = vmatmul.f32.gmra.mxu0 %v202
    %v578 = vpop.f32.mrf.mxu0
    %v579 = vadd.f32 %v547, %v578
    %580 = vmatmul.f32.gmra.mxu0 %v185
    %v581 = vpop.f32.mrf.mxu0
    %v582 = vadd.f32 %v550, %v581
    %583 = vmatmul.f32.gmra.mxu0 %v184
    %v584 = vpop.f32.mrf.mxu0
    %v585 = vadd.f32 %v553, %v584
    %586 = vdwg.mxu0
    %v587 = vmul.f32 %v445, 0.2
    %v588 = vmul.f32 %v573, 0.2
    %v589 = vmul.f32 %v448, 0.2
    %v590 = vmul.f32 %v576, 0.2
    %v591 = vmul.f32 %v451, 0.2
    %v592 = vmul.f32 %v579, 0.2
    %v593 = vmul.f32 %v454, 0.2
    %v594 = vmul.f32 %v582, 0.2
    %v595 = vmul.f32 %v457, 0.2
    %v596 = vmul.f32 %v585, 0.2
    %v597 = vmax.f32 %v445, %v587
    %v598 = vmax.f32 %v573, %v588
    %v599 = vmax.f32 %v448, %v589
    %v600 = vmax.f32 %v576, %v590
    %v601 = vmax.f32 %v451, %v591
    %v602 = vmax.f32 %v579, %v592
    %v603 = vmax.f32 %v454, %v593
    %v604 = vmax.f32 %v582, %v594
    %v605 = vmax.f32 %v457, %v595
    %v606 = vmax.f32 %v585, %v596
    %v610 = vrot.slane 0.0, 7
    %v611 = vrot.slane %v597, 6
    %v612 = vrot.slane %v598, 5
    %vm613 = vcmask 1040384
    %v614 = vsel %vm613, 0.0, %v610
    %vm615 = vcmask 1042434
    %v616 = vsel %vm615, %v611, %v612
    %v617 = vsel %vm198, %v614, %v616
    %v619 = vlaneseq
    %vm620 = vcmp.ge.s32.totalorder %v619, 0
    %vm621 = vcmp.lt.s32.totalorder %v619, 512
    %vm622 = vmand %vm620, %vm621
    %623 = vst.msk [vmem:[#allocation2] ss:$8 sm:$0xf] %vm622, %v617
    %624 = vst.msk [vmem:[#allocation2] ss:$8 sm:$0x0] %vm622, %v617
    %v625 = vrot.slane %v597, 1
    %v626 = vrot.slane %v598, 1
    %627 = vst [vmem:[#allocation1] sm:$0xff] %v597
    %628 = vst [vmem:[#allocation1 + $0x9] sm:$0xff] %v598
    %629 = vst [vmem:[#allocation1 + $0x12] sm:$0xff] %v625
    %630 = vst [vmem:[#allocation1 + $0x1b] sm:$0xff] %v626
    %s631 = scalar_lea.vmem [#allocation1], 1
    %v632 = vld [vmem:[%s631] ss:$9 sm:$0xff]
    %s634 = scalar_lea.vmem [#allocation2], 1
    %635 = vst.msk [vmem:[%s634] ss:$8 sm:$0xf] %vm622, %v632
    %636 = vst.msk [vmem:[%s634] ss:$8 sm:$0x0] %vm622, %v632
    %637 = vst [vmem:[#allocation1] sm:$0xff] %v597
    %638 = vst [vmem:[#allocation1 + $0x9] sm:$0xff] %v598
    %639 = vst [vmem:[#allocation1 + $0x12] sm:$0xff] %v625
    %640 = vst [vmem:[#allocation1 + $0x1b] sm:$0xff] %v626
    %s641 = scalar_lea.vmem [#allocation1], 3
    %v642 = vld [vmem:[%s641] ss:$9 sm:$0xff]
    %s644 = scalar_lea.vmem [#allocation2], 2
    %645 = vst.msk [vmem:[%s644] ss:$8 sm:$0xf] %vm622, %v642
    %646 = vst.msk [vmem:[%s644] ss:$8 sm:$0x0] %vm622, %v642
    %647 = vst [vmem:[#allocation1] sm:$0xff] %v597
    %648 = vst [vmem:[#allocation1 + $0x9] sm:$0xff] %v598
    %649 = vst [vmem:[#allocation1 + $0x12] sm:$0xff] %v625
    %650 = vst [vmem:[#allocation1 + $0x1b] sm:$0xff] %v626
    %s651 = scalar_lea.vmem [#allocation1], 5
    %v652 = vld [vmem:[%s651] ss:$9 sm:$0xff]
    %s654 = scalar_lea.vmem [#allocation2], 3
    %655 = vst.msk [vmem:[%s654] ss:$8 sm:$0xf] %vm622, %v652
    %656 = vst.msk [vmem:[%s654] ss:$8 sm:$0x0] %vm622, %v652
    %v659 = vrot.slane %v599, 1
    %v660 = vrot.slane %v600, 1
    %661 = vst [vmem:[#allocation1] sm:$0xff] %v597
    %662 = vst [vmem:[#allocation1 + $0x9] sm:$0xff] %v598
    %663 = vst [vmem:[#allocation1 + $0x12] sm:$0xff] %v659
    %664 = vst [vmem:[#allocation1 + $0x1b] sm:$0xff] %v660
    %s665 = scalar_lea.vmem [#allocation1], 7
    %v666 = vld [vmem:[%s665] ss:$9 sm:$0xff]
    %s668 = scalar_lea.vmem [#allocation2], 4
    %669 = vst.msk [vmem:[%s668] ss:$8 sm:$0xf] %vm622, %v666
    %670 = vst.msk [vmem:[%s668] ss:$8 sm:$0x0] %vm622, %v666
    %671 = vst [vmem:[#allocation1] sm:$0xff] %v599
    %672 = vst [vmem:[#allocation1 + $0x9] sm:$0xff] %v600
    %673 = vst [vmem:[#allocation1 + $0x12] sm:$0xff] %v659
    %674 = vst [vmem:[#allocation1 + $0x1b] sm:$0xff] %v660
    %s675 = scalar_lea.vmem [#allocation1], 1
    %v676 = vld [vmem:[%s675] ss:$9 sm:$0xff]
    %s678 = scalar_lea.vmem [#allocation2], 5
    %679 = vst.msk [vmem:[%s678] ss:$8 sm:$0xf] %vm622, %v676
    %680 = vst.msk [vmem:[%s678] ss:$8 sm:$0x0] %vm622, %v676
    %681 = vst [vmem:[#allocation1] sm:$0xff] %v599
    %682 = vst [vmem:[#allocation1 + $0x9] sm:$0xff] %v600
    %683 = vst [vmem:[#allocation1 + $0x12] sm:$0xff] %v659
    %684 = vst [vmem:[#allocation1 + $0x1b] sm:$0xff] %v660
    %s685 = scalar_lea.vmem [#allocation1], 3
    %v686 = vld [vmem:[%s685] ss:$9 sm:$0xff]
    %s688 = scalar_lea.vmem [#allocation2], 6
    %689 = vst.msk [vmem:[%s688] ss:$8 sm:$0xf] %vm622, %v686
    %690 = vst.msk [vmem:[%s688] ss:$8 sm:$0x0] %vm622, %v686
    %691 = vst [vmem:[#allocation1] sm:$0xff] %v599
    %692 = vst [vmem:[#allocation1 + $0x9] sm:$0xff] %v600
    %693 = vst [vmem:[#allocation1 + $0x12] sm:$0xff] %v659
    %694 = vst [vmem:[#allocation1 + $0x1b] sm:$0xff] %v660
    %s695 = scalar_lea.vmem [#allocation1], 5
    %v696 = vld [vmem:[%s695] ss:$9 sm:$0xff]
    %s698 = scalar_lea.vmem [#allocation2], 7
    %699 = vst.msk [vmem:[%s698] ss:$8 sm:$0xf] %vm622, %v696
    %700 = vst.msk [vmem:[%s698] ss:$8 sm:$0x0] %vm622, %v696
    %v703 = vrot.slane %v601, 1
    %v704 = vrot.slane %v602, 1
    %705 = vst [vmem:[#allocation1] sm:$0xff] %v599
    %706 = vst [vmem:[#allocation1 + $0x9] sm:$0xff] %v600
    %707 = vst [vmem:[#allocation1 + $0x12] sm:$0xff] %v703
    %708 = vst [vmem:[#allocation1 + $0x1b] sm:$0xff] %v704
    %s709 = scalar_lea.vmem [#allocation1], 7
    %v710 = vld [vmem:[%s709] ss:$9 sm:$0xff]
    %s712 = scalar_lea.vmem [#allocation2], 32
    %713 = vst.msk [vmem:[%s712] ss:$8 sm:$0xf] %vm622, %v710
    %714 = vst.msk [vmem:[%s712] ss:$8 sm:$0x0] %vm622, %v710
    %715 = vst [vmem:[#allocation1] sm:$0xff] %v601
    %716 = vst [vmem:[#allocation1 + $0x9] sm:$0xff] %v602
    %717 = vst [vmem:[#allocation1 + $0x12] sm:$0xff] 0.0
    %718 = vst [vmem:[#allocation1 + $0x1b] sm:$0xff] 0.0
    %s719 = scalar_lea.vmem [#allocation1], 1
    %v720 = vld [vmem:[%s719] ss:$9 sm:$0xff]
    %s722 = scalar_lea.vmem [#allocation2], 33
    %723 = vst.msk [vmem:[%s722] ss:$8 sm:$0xf] %vm622, %v720
    %724 = vst.msk [vmem:[%s722] ss:$8 sm:$0x0] %vm622, %v720
    %v725 = vrot.slane %v601, 2
    %v726 = vrot.slane %v602, 2
    %v727 = vrot.slane %v725, 6
    %v728 = vrot.slane %v726, 5
    %v729 = vsel %vm615, %v727, %v728
    %v730 = vsel %vm198, %v614, %v729
    %s732 = scalar_lea.vmem [#allocation2], 34
    %733 = vst.msk [vmem:[%s732] ss:$8 sm:$0xf] %vm622, %v730
    %734 = vst.msk [vmem:[%s732] ss:$8 sm:$0x0] %vm622, %v730
    %735 = vst [vmem:[#allocation1] sm:$0xff] %v601
    %736 = vst [vmem:[#allocation1 + $0x9] sm:$0xff] %v602
    %737 = vst [vmem:[#allocation1 + $0x12] sm:$0xff] %v703
    %738 = vst [vmem:[#allocation1 + $0x1b] sm:$0xff] %v704
    %s739 = scalar_lea.vmem [#allocation1], 3
    %v740 = vld [vmem:[%s739] ss:$9 sm:$0xff]
    %s742 = scalar_lea.vmem [#allocation2], 35
    %743 = vst.msk [vmem:[%s742] ss:$8 sm:$0xf] %vm622, %v740
    %744 = vst.msk [vmem:[%s742] ss:$8 sm:$0x0] %vm622, %v740
    %745 = vst [vmem:[#allocation1] sm:$0xff] %v601
    %746 = vst [vmem:[#allocation1 + $0x9] sm:$0xff] %v602
    %747 = vst [vmem:[#allocation1 + $0x12] sm:$0xff] %v703
    %748 = vst [vmem:[#allocation1 + $0x1b] sm:$0xff] %v704
    %s749 = scalar_lea.vmem [#allocation1], 5
    %v750 = vld [vmem:[%s749] ss:$9 sm:$0xff]
    %s752 = scalar_lea.vmem [#allocation2], 36
    %753 = vst.msk [vmem:[%s752] ss:$8 sm:$0xf] %vm622, %v750
    %754 = vst.msk [vmem:[%s752] ss:$8 sm:$0x0] %vm622, %v750
    %v757 = vrot.slane %v603, 1
    %v758 = vrot.slane %v604, 1
    %759 = vst [vmem:[#allocation1] sm:$0xff] %v601
    %760 = vst [vmem:[#allocation1 + $0x9] sm:$0xff] %v602
    %761 = vst [vmem:[#allocation1 + $0x12] sm:$0xff] %v757
    %762 = vst [vmem:[#allocation1 + $0x1b] sm:$0xff] %v758
    %s763 = scalar_lea.vmem [#allocation1], 7
    %v764 = vld [vmem:[%s763] ss:$9 sm:$0xff]
    %s766 = scalar_lea.vmem [#allocation2], 37
    %767 = vst.msk [vmem:[%s766] ss:$8 sm:$0xf] %vm622, %v764
    %768 = vst.msk [vmem:[%s766] ss:$8 sm:$0x0] %vm622, %v764
    %769 = vst [vmem:[#allocation1] sm:$0xff] %v603
    %770 = vst [vmem:[#allocation1 + $0x9] sm:$0xff] %v604
    %771 = vst [vmem:[#allocation1 + $0x12] sm:$0xff] %v757
    %772 = vst [vmem:[#allocation1 + $0x1b] sm:$0xff] %v758
    %s773 = scalar_lea.vmem [#allocation1], 1
    %v774 = vld [vmem:[%s773] ss:$9 sm:$0xff]
    %s776 = scalar_lea.vmem [#allocation2], 38
    %777 = vst.msk [vmem:[%s776] ss:$8 sm:$0xf] %vm622, %v774
    %778 = vst.msk [vmem:[%s776] ss:$8 sm:$0x0] %vm622, %v774
    %779 = vst [vmem:[#allocation1] sm:$0xff] %v603
    %780 = vst [vmem:[#allocation1 + $0x9] sm:$0xff] %v604
    %781 = vst [vmem:[#allocation1 + $0x12] sm:$0xff] %v757
    %782 = vst [vmem:[#allocation1 + $0x1b] sm:$0xff] %v758
    %s783 = scalar_lea.vmem [#allocation1], 3
    %v784 = vld [vmem:[%s783] ss:$9 sm:$0xff]
    %s786 = scalar_lea.vmem [#allocation2], 39
    %787 = vst.msk [vmem:[%s786] ss:$8 sm:$0xf] %vm622, %v784
    %788 = vst.msk [vmem:[%s786] ss:$8 sm:$0x0] %vm622, %v784
    %789 = vst [vmem:[#allocation1] sm:$0xff] %v603
    %790 = vst [vmem:[#allocation1 + $0x9] sm:$0xff] %v604
    %791 = vst [vmem:[#allocation1 + $0x12] sm:$0xff] %v757
    %792 = vst [vmem:[#allocation1 + $0x1b] sm:$0xff] %v758
    %s793 = scalar_lea.vmem [#allocation1], 5
    %v794 = vld [vmem:[%s793] ss:$9 sm:$0xff]
    %s796 = scalar_lea.vmem [#allocation2], 64
    %797 = vst.msk [vmem:[%s796] ss:$8 sm:$0xf] %vm622, %v794
    %798 = vst.msk [vmem:[%s796] ss:$8 sm:$0x0] %vm622, %v794
    %v801 = vrot.slane %v605, 1
    %v802 = vrot.slane %v606, 1
    %803 = vst [vmem:[#allocation1] sm:$0xff] %v603
    %804 = vst [vmem:[#allocation1 + $0x9] sm:$0xff] %v604
    %805 = vst [vmem:[#allocation1 + $0x12] sm:$0xff] %v801
    %806 = vst [vmem:[#allocation1 + $0x1b] sm:$0xff] %v802
    %s807 = scalar_lea.vmem [#allocation1], 7
    %v808 = vld [vmem:[%s807] ss:$9 sm:$0xff]
    %s810 = scalar_lea.vmem [#allocation2], 65
    %811 = vst.msk [vmem:[%s810] ss:$8 sm:$0xf] %vm622, %v808
    %812 = vst.msk [vmem:[%s810] ss:$8 sm:$0x0] %vm622, %v808
    %813 = vst [vmem:[#allocation1] sm:$0xff] %v605
    %814 = vst [vmem:[#allocation1 + $0x9] sm:$0xff] %v606
    %815 = vst [vmem:[#allocation1 + $0x12] sm:$0xff] %v801
    %816 = vst [vmem:[#allocation1 + $0x1b] sm:$0xff] %v802
    %s817 = scalar_lea.vmem [#allocation1], 1
    %v818 = vld [vmem:[%s817] ss:$9 sm:$0xff]
    %s820 = scalar_lea.vmem [#allocation2], 66
    %821 = vst.msk [vmem:[%s820] ss:$8 sm:$0xf] %vm622, %v818
    %822 = vst.msk [vmem:[%s820] ss:$8 sm:$0x0] %vm622, %v818
    %823 = vst [vmem:[#allocation1] sm:$0xff] %v605
    %824 = vst [vmem:[#allocation1 + $0x9] sm:$0xff] %v606
    %825 = vst [vmem:[#allocation1 + $0x12] sm:$0xff] 0.0
    %826 = vst [vmem:[#allocation1 + $0x1b] sm:$0xff] 0.0
    %s827 = scalar_lea.vmem [#allocation1], 3
    %v828 = vld [vmem:[%s827] ss:$9 sm:$0xff]
    %s830 = scalar_lea.vmem [#allocation2], 67
    %831 = vst.msk [vmem:[%s830] ss:$8 sm:$0xf] %vm622, %v828
    %832 = vst.msk [vmem:[%s830] ss:$8 sm:$0x0] %vm622, %v828
    %v833 = vld [vmem:[#allocation2] sm:$0xff]
    %v834 = vld [vmem:[#allocation2 + $0x8] sm:$0xff]
    %v835 = vld [vmem:[#allocation2 + $0x10] sm:$0xff]
    %v836 = vld [vmem:[#allocation2 + $0x18] sm:$0xff]
    %v837 = vld [vmem:[#allocation2 + $0x20] sm:$0x1]
    %v838 = vld [vmem:[#allocation2 + $0x28] sm:$0x1]
    %v839 = vld [vmem:[#allocation2 + $0x30] sm:$0x1]
    %v840 = vld [vmem:[#allocation2 + $0x38] sm:$0x1]
    %v841 = vld [vmem:[#allocation2] sm:$0xfe]
    %v842 = vld [vmem:[#allocation2 + $0x8] sm:$0xfe]
    %v843 = vld [vmem:[#allocation2 + $0x10] sm:$0xfe]
    %v844 = vld [vmem:[#allocation2 + $0x18] sm:$0xfe]
    %v845 = vld [vmem:[#allocation2 + $0x20] sm:$0x3]
    %v846 = vld [vmem:[#allocation2 + $0x28] sm:$0x3]
    %v847 = vld [vmem:[#allocation2 + $0x30] sm:$0x3]
    %v848 = vld [vmem:[#allocation2 + $0x38] sm:$0x3]
    %v857 = vrot.slane %v841, 1
    %v858 = vrot.slane %v845, 1
    %v859 = vsel %vm121, %v857, %v858
    %v860 = vrot.slane %v842, 1
    %v861 = vrot.slane %v846, 1
    %v862 = vsel %vm121, %v860, %v861
    %v863 = vrot.slane %v843, 1
    %v864 = vrot.slane %v847, 1
    %v865 = vsel %vm121, %v863, %v864
    %v866 = vrot.slane %v844, 1
    %v867 = vrot.slane %v848, 1
    %v868 = vsel %vm121, %v866, %v867
    %v877 = vld [vmem:[#allocation2 + $0x20] sm:$0xfc]
    %v878 = vld [vmem:[#allocation2 + $0x28] sm:$0xfc]
    %v879 = vld [vmem:[#allocation2 + $0x30] sm:$0xfc]
    %v880 = vld [vmem:[#allocation2 + $0x38] sm:$0xfc]
    %v881 = vld [vmem:[#allocation2 + $0x40] sm:$0x7]
    %v882 = vld [vmem:[#allocation2 + $0x48] sm:$0x7]
    %v883 = vld [vmem:[#allocation2 + $0x50] sm:$0x7]
    %v884 = vld [vmem:[#allocation2 + $0x58] sm:$0x7]
    %v885 = vld [vmem:[#allocation2 + $0x20] sm:$0xf8]
    %v886 = vld [vmem:[#allocation2 + $0x28] sm:$0xf8]
    %v887 = vld [vmem:[#allocation2 + $0x30] sm:$0xf8]
    %v888 = vld [vmem:[#allocation2 + $0x38] sm:$0xf8]
    %v889 = vld [vmem:[#allocation2 + $0x40] sm:$0xf]
    %v890 = vld [vmem:[#allocation2 + $0x48] sm:$0xf]
    %v891 = vld [vmem:[#allocation2 + $0x50] sm:$0xf]
    %v892 = vld [vmem:[#allocation2 + $0x58] sm:$0xf]
    %v901 = vrot.slane %v885, 1
    %v902 = vrot.slane %v889, 1
    %v903 = vsel %vm121, %v901, %v902
    %v904 = vrot.slane %v886, 1
    %v905 = vrot.slane %v890, 1
    %v906 = vsel %vm121, %v904, %v905
    %v907 = vrot.slane %v887, 1
    %v908 = vrot.slane %v891, 1
    %v909 = vsel %vm121, %v907, %v908
    %v910 = vrot.slane %v888, 1
    %v911 = vrot.slane %v892, 1
    %v912 = vsel %vm121, %v910, %v911
    %v921 = vrot.slane %v877, 1
    %v922 = vrot.slane %v881, 1
    %v923 = vsel %vm121, %v921, %v922
    %v924 = vrot.slane %v878, 1
    %v925 = vrot.slane %v882, 1
    %v926 = vsel %vm121, %v924, %v925
    %v927 = vrot.slane %v879, 1
    %v928 = vrot.slane %v883, 1
    %v929 = vsel %vm121, %v927, %v928
    %v930 = vrot.slane %v880, 1
    %v931 = vrot.slane %v884, 1
    %v932 = vsel %vm121, %v930, %v931
    %v933 = vrot.slane %v903, 1
    %v934 = vrot.slane %v902, 1
    %v935 = vsel %vm121, %v933, %v934
    %v936 = vrot.slane %v906, 1
    %v937 = vrot.slane %v905, 1
    %v938 = vsel %vm121, %v936, %v937
    %v939 = vrot.slane %v909, 1
    %v940 = vrot.slane %v908, 1
    %v941 = vsel %vm121, %v939, %v940
    %v942 = vrot.slane %v912, 1
    %v943 = vrot.slane %v911, 1
    %v944 = vsel %vm121, %v942, %v943
    %v961 = vsel %vm613, %v837, %v923
    %v962 = vsel %vm613, %v838, %v926
    %v963 = vsel %vm613, %v839, %v929
    %v964 = vsel %vm613, %v840, %v932
    %v965 = vsel %vm613, %v858, %v935
    %v966 = vsel %vm613, %v861, %v938
    %v967 = vsel %vm613, %v864, %v941
    %v968 = vsel %vm613, %v867, %v944
    %v969 = vld [vmem:[#allocation6] sm:$0xff]
    %v970 = vld [vmem:[#allocation6 + $0x8] sm:$0xff]
    %v971 = vld [vmem:[#allocation6 + $0x10] sm:$0xff]
    %v972 = vld [vmem:[#allocation6 + $0x18] sm:$0xff]
    %v973 = vld [vmem:[#allocation6 + $0x20] sm:$0xff]
    %v974 = vld [vmem:[#allocation6 + $0x28] sm:$0xff]
    %v975 = vld [vmem:[#allocation6 + $0x30] sm:$0xff]
    %v976 = vld [vmem:[#allocation6 + $0x38] sm:$0xff]
    %v977 = vld [vmem:[#allocation6 + $0x40] sm:$0xff]
    %v978 = vld [vmem:[#allocation6 + $0x48] sm:$0xff]
    %v979 = vld [vmem:[#allocation6 + $0x50] sm:$0xff]
    %v980 = vld [vmem:[#allocation6 + $0x58] sm:$0xff]
    %v981 = vld [vmem:[#allocation6 + $0x60] sm:$0xff]
    %v982 = vld [vmem:[#allocation6 + $0x68] sm:$0xff]
    %v983 = vld [vmem:[#allocation6 + $0x70] sm:$0xff]
    %v984 = vld [vmem:[#allocation6 + $0x78] sm:$0xff]
    %v985 = vld [vmem:[#allocation6 + $0x80] sm:$0xff]
    %v986 = vld [vmem:[#allocation6 + $0x88] sm:$0xff]
    %v987 = vld [vmem:[#allocation6 + $0x90] sm:$0xff]
    %v988 = vld [vmem:[#allocation6 + $0x98] sm:$0xff]
    %v989 = vld [vmem:[#allocation6 + $0xa0] sm:$0xff]
    %v990 = vld [vmem:[#allocation6 + $0xa8] sm:$0xff]
    %v991 = vld [vmem:[#allocation6 + $0xb0] sm:$0xff]
    %v992 = vld [vmem:[#allocation6 + $0xb8] sm:$0xff]
    %v993 = vld [vmem:[#allocation6 + $0xc0] sm:$0xff]
    %v994 = vld [vmem:[#allocation6 + $0xc8] sm:$0xff]
    %v995 = vld [vmem:[#allocation6 + $0xd0] sm:$0xff]
    %v996 = vld [vmem:[#allocation6 + $0xd8] sm:$0xff]
    %v997 = vld [vmem:[#allocation6 + $0xe0] sm:$0xff]
    %v998 = vld [vmem:[#allocation6 + $0xe8] sm:$0xff]
    %v999 = vld [vmem:[#allocation6 + $0xf0] sm:$0xff]
    %v1000 = vld [vmem:[#allocation6 + $0xf8] sm:$0xff]
    %v1001 = vld [vmem:[#allocation6 + $0x100] sm:$0xff]
    %v1002 = vld [vmem:[#allocation6 + $0x108] sm:$0xff]
    %v1003 = vld [vmem:[#allocation6 + $0x110] sm:$0xff]
    %v1004 = vld [vmem:[#allocation6 + $0x118] sm:$0xff]
    %v1005 = vld [vmem:[#allocation6 + $0x120] sm:$0xff]
    %v1006 = vld [vmem:[#allocation6 + $0x128] sm:$0xff]
    %v1007 = vld [vmem:[#allocation6 + $0x130] sm:$0xff]
    %v1008 = vld [vmem:[#allocation6 + $0x138] sm:$0xff]
    %v1009 = vld [vmem:[#allocation6 + $0x140] sm:$0xff]
    %v1010 = vld [vmem:[#allocation6 + $0x148] sm:$0xff]
    %v1011 = vld [vmem:[#allocation6 + $0x150] sm:$0xff]
    %v1012 = vld [vmem:[#allocation6 + $0x158] sm:$0xff]
    %v1013 = vld [vmem:[#allocation6 + $0x160] sm:$0xff]
    %v1014 = vld [vmem:[#allocation6 + $0x168] sm:$0xff]
    %v1015 = vld [vmem:[#allocation6 + $0x170] sm:$0xff]
    %v1016 = vld [vmem:[#allocation6 + $0x178] sm:$0xff]
    %v1017 = vld [vmem:[#allocation6 + $0x180] sm:$0xff]
    %v1018 = vld [vmem:[#allocation6 + $0x188] sm:$0xff]
    %v1019 = vld [vmem:[#allocation6 + $0x190] sm:$0xff]
    %v1020 = vld [vmem:[#allocation6 + $0x198] sm:$0xff]
    %v1021 = vld [vmem:[#allocation6 + $0x1a0] sm:$0xff]
    %v1022 = vld [vmem:[#allocation6 + $0x1a8] sm:$0xff]
    %v1023 = vld [vmem:[#allocation6 + $0x1b0] sm:$0xff]
    %v1024 = vld [vmem:[#allocation6 + $0x1b8] sm:$0xff]
    %v1025 = vld [vmem:[#allocation6 + $0x1c0] sm:$0xff]
    %v1026 = vld [vmem:[#allocation6 + $0x1c8] sm:$0xff]
    %v1027 = vld [vmem:[#allocation6 + $0x1d0] sm:$0xff]
    %v1028 = vld [vmem:[#allocation6 + $0x1d8] sm:$0xff]
    %v1029 = vld [vmem:[#allocation6 + $0x1e0] sm:$0xff]
    %v1030 = vld [vmem:[#allocation6 + $0x1e8] sm:$0xff]
    %v1031 = vld [vmem:[#allocation6 + $0x1f0] sm:$0xff]
    %v1032 = vld [vmem:[#allocation6 + $0x1f8] sm:$0xff]
    %v1033 = vld [vmem:[#allocation6 + $0x200] sm:$0xff]
    %v1034 = vld [vmem:[#allocation6 + $0x208] sm:$0xff]
    %v1035 = vld [vmem:[#allocation6 + $0x210] sm:$0xff]
    %v1036 = vld [vmem:[#allocation6 + $0x218] sm:$0xff]
    %v1037 = vld [vmem:[#allocation6 + $0x220] sm:$0xff]
    %v1038 = vld [vmem:[#allocation6 + $0x228] sm:$0xff]
    %v1039 = vld [vmem:[#allocation6 + $0x230] sm:$0xff]
    %v1040 = vld [vmem:[#allocation6 + $0x238] sm:$0xff]
    %v1041 = vld [vmem:[#allocation6 + $0x240] sm:$0xff]
    %v1042 = vld [vmem:[#allocation6 + $0x248] sm:$0xff]
    %v1043 = vld [vmem:[#allocation6 + $0x250] sm:$0xff]
    %v1044 = vld [vmem:[#allocation6 + $0x258] sm:$0xff]
    %v1045 = vld [vmem:[#allocation6 + $0x260] sm:$0xff]
    %v1046 = vld [vmem:[#allocation6 + $0x268] sm:$0xff]
    %v1047 = vld [vmem:[#allocation6 + $0x270] sm:$0xff]
    %v1048 = vld [vmem:[#allocation6 + $0x278] sm:$0xff]
    %v1049 = vld [vmem:[#allocation6 + $0x280] sm:$0xff]
    %v1050 = vld [vmem:[#allocation6 + $0x288] sm:$0xff]
    %v1051 = vld [vmem:[#allocation6 + $0x290] sm:$0xff]
    %v1052 = vld [vmem:[#allocation6 + $0x298] sm:$0xff]
    %v1053 = vld [vmem:[#allocation6 + $0x2a0] sm:$0xff]
    %v1054 = vld [vmem:[#allocation6 + $0x2a8] sm:$0xff]
    %v1055 = vld [vmem:[#allocation6 + $0x2b0] sm:$0xff]
    %v1056 = vld [vmem:[#allocation6 + $0x2b8] sm:$0xff]
    %v1057 = vld [vmem:[#allocation6 + $0x2c0] sm:$0xff]
    %v1058 = vld [vmem:[#allocation6 + $0x2c8] sm:$0xff]
    %v1059 = vld [vmem:[#allocation6 + $0x2d0] sm:$0xff]
    %v1060 = vld [vmem:[#allocation6 + $0x2d8] sm:$0xff]
    %v1061 = vld [vmem:[#allocation6 + $0x2e0] sm:$0xff]
    %v1062 = vld [vmem:[#allocation6 + $0x2e8] sm:$0xff]
    %v1063 = vld [vmem:[#allocation6 + $0x2f0] sm:$0xff]
    %v1064 = vld [vmem:[#allocation6 + $0x2f8] sm:$0xff]
    %v1065 = vld [vmem:[#allocation6 + $0x300] sm:$0xff]
    %v1066 = vld [vmem:[#allocation6 + $0x308] sm:$0xff]
    %v1067 = vld [vmem:[#allocation6 + $0x310] sm:$0xff]
    %v1068 = vld [vmem:[#allocation6 + $0x318] sm:$0xff]
    %v1069 = vld [vmem:[#allocation6 + $0x320] sm:$0xff]
    %v1070 = vld [vmem:[#allocation6 + $0x328] sm:$0xff]
    %v1071 = vld [vmem:[#allocation6 + $0x330] sm:$0xff]
    %v1072 = vld [vmem:[#allocation6 + $0x338] sm:$0xff]
    %v1073 = vld [vmem:[#allocation6 + $0x340] sm:$0xff]
    %v1074 = vld [vmem:[#allocation6 + $0x348] sm:$0xff]
    %v1075 = vld [vmem:[#allocation6 + $0x350] sm:$0xff]
    %v1076 = vld [vmem:[#allocation6 + $0x358] sm:$0xff]
    %v1077 = vld [vmem:[#allocation6 + $0x360] sm:$0xff]
    %v1078 = vld [vmem:[#allocation6 + $0x368] sm:$0xff]
    %v1079 = vld [vmem:[#allocation6 + $0x370] sm:$0xff]
    %v1080 = vld [vmem:[#allocation6 + $0x378] sm:$0xff]
    %v1081 = vld [vmem:[#allocation6 + $0x380] sm:$0xff]
    %v1082 = vld [vmem:[#allocation6 + $0x388] sm:$0xff]
    %v1083 = vld [vmem:[#allocation6 + $0x390] sm:$0xff]
    %v1084 = vld [vmem:[#allocation6 + $0x398] sm:$0xff]
    %v1085 = vld [vmem:[#allocation6 + $0x3a0] sm:$0xff]
    %v1086 = vld [vmem:[#allocation6 + $0x3a8] sm:$0xff]
    %v1087 = vld [vmem:[#allocation6 + $0x3b0] sm:$0xff]
    %v1088 = vld [vmem:[#allocation6 + $0x3b8] sm:$0xff]
    %v1089 = vld [vmem:[#allocation6 + $0x3c0] sm:$0xff]
    %v1090 = vld [vmem:[#allocation6 + $0x3c8] sm:$0xff]
    %v1091 = vld [vmem:[#allocation6 + $0x3d0] sm:$0xff]
    %v1092 = vld [vmem:[#allocation6 + $0x3d8] sm:$0xff]
    %v1093 = vld [vmem:[#allocation6 + $0x3e0] sm:$0xff]
    %v1094 = vld [vmem:[#allocation6 + $0x3e8] sm:$0xff]
    %v1095 = vld [vmem:[#allocation6 + $0x3f0] sm:$0xff]
    %v1096 = vld [vmem:[#allocation6 + $0x3f8] sm:$0xff]
    %v1097 = vld [vmem:[#allocation6 + $0x400] sm:$0xff]
    %v1098 = vld [vmem:[#allocation6 + $0x408] sm:$0xff]
    %v1099 = vld [vmem:[#allocation6 + $0x410] sm:$0xff]
    %v1100 = vld [vmem:[#allocation6 + $0x418] sm:$0xff]
    %v1101 = vld [vmem:[#allocation6 + $0x420] sm:$0xff]
    %v1102 = vld [vmem:[#allocation6 + $0x428] sm:$0xff]
    %v1103 = vld [vmem:[#allocation6 + $0x430] sm:$0xff]
    %v1104 = vld [vmem:[#allocation6 + $0x438] sm:$0xff]
    %v1105 = vld [vmem:[#allocation6 + $0x440] sm:$0xff]
    %v1106 = vld [vmem:[#allocation6 + $0x448] sm:$0xff]
    %v1107 = vld [vmem:[#allocation6 + $0x450] sm:$0xff]
    %v1108 = vld [vmem:[#allocation6 + $0x458] sm:$0xff]
    %v1109 = vld [vmem:[#allocation6 + $0x460] sm:$0xff]
    %v1110 = vld [vmem:[#allocation6 + $0x468] sm:$0xff]
    %v1111 = vld [vmem:[#allocation6 + $0x470] sm:$0xff]
    %v1112 = vld [vmem:[#allocation6 + $0x478] sm:$0xff]
    %v1113 = vld [vmem:[#allocation6 + $0x480] sm:$0xff]
    %v1114 = vld [vmem:[#allocation6 + $0x488] sm:$0xff]
    %v1115 = vld [vmem:[#allocation6 + $0x490] sm:$0xff]
    %v1116 = vld [vmem:[#allocation6 + $0x498] sm:$0xff]
    %v1117 = vld [vmem:[#allocation6 + $0x4a0] sm:$0xff]
    %v1118 = vld [vmem:[#allocation6 + $0x4a8] sm:$0xff]
    %v1119 = vld [vmem:[#allocation6 + $0x4b0] sm:$0xff]
    %v1120 = vld [vmem:[#allocation6 + $0x4b8] sm:$0xff]
    %v1121 = vld [vmem:[#allocation6 + $0x4c0] sm:$0xff]
    %v1122 = vld [vmem:[#allocation6 + $0x4c8] sm:$0xff]
    %v1123 = vld [vmem:[#allocation6 + $0x4d0] sm:$0xff]
    %v1124 = vld [vmem:[#allocation6 + $0x4d8] sm:$0xff]
    %v1125 = vld [vmem:[#allocation6 + $0x4e0] sm:$0xff]
    %v1126 = vld [vmem:[#allocation6 + $0x4e8] sm:$0xff]
    %v1127 = vld [vmem:[#allocation6 + $0x4f0] sm:$0xff]
    %v1128 = vld [vmem:[#allocation6 + $0x4f8] sm:$0xff]
    %v1129 = vld [vmem:[#allocation6 + $0x500] sm:$0xff]
    %v1130 = vld [vmem:[#allocation6 + $0x508] sm:$0xff]
    %v1131 = vld [vmem:[#allocation6 + $0x510] sm:$0xff]
    %v1132 = vld [vmem:[#allocation6 + $0x518] sm:$0xff]
    %v1133 = vld [vmem:[#allocation6 + $0x520] sm:$0xff]
    %v1134 = vld [vmem:[#allocation6 + $0x528] sm:$0xff]
    %v1135 = vld [vmem:[#allocation6 + $0x530] sm:$0xff]
    %v1136 = vld [vmem:[#allocation6 + $0x538] sm:$0xff]
    %v1137 = vld [vmem:[#allocation6 + $0x540] sm:$0xff]
    %v1138 = vld [vmem:[#allocation6 + $0x548] sm:$0xff]
    %v1139 = vld [vmem:[#allocation6 + $0x550] sm:$0xff]
    %v1140 = vld [vmem:[#allocation6 + $0x558] sm:$0xff]
    %v1141 = vld [vmem:[#allocation6 + $0x560] sm:$0xff]
    %v1142 = vld [vmem:[#allocation6 + $0x568] sm:$0xff]
    %v1143 = vld [vmem:[#allocation6 + $0x570] sm:$0xff]
    %v1144 = vld [vmem:[#allocation6 + $0x578] sm:$0xff]
    %v1145 = vld [vmem:[#allocation6 + $0x580] sm:$0xff]
    %v1146 = vld [vmem:[#allocation6 + $0x588] sm:$0xff]
    %v1147 = vld [vmem:[#allocation6 + $0x590] sm:$0xff]
    %v1148 = vld [vmem:[#allocation6 + $0x598] sm:$0xff]
    %v1149 = vld [vmem:[#allocation6 + $0x5a0] sm:$0xff]
    %v1150 = vld [vmem:[#allocation6 + $0x5a8] sm:$0xff]
    %v1151 = vld [vmem:[#allocation6 + $0x5b0] sm:$0xff]
    %v1152 = vld [vmem:[#allocation6 + $0x5b8] sm:$0xff]
    %v1153 = vld [vmem:[#allocation6 + $0x5c0] sm:$0xff]
    %v1154 = vld [vmem:[#allocation6 + $0x5c8] sm:$0xff]
    %v1155 = vld [vmem:[#allocation6 + $0x5d0] sm:$0xff]
    %v1156 = vld [vmem:[#allocation6 + $0x5d8] sm:$0xff]
    %v1157 = vld [vmem:[#allocation6 + $0x5e0] sm:$0xff]
    %v1158 = vld [vmem:[#allocation6 + $0x5e8] sm:$0xff]
    %v1159 = vld [vmem:[#allocation6 + $0x5f0] sm:$0xff]
    %v1160 = vld [vmem:[#allocation6 + $0x5f8] sm:$0xff]
    %v1161 = vld [vmem:[#allocation6 + $0x600] sm:$0xff]
    %v1162 = vld [vmem:[#allocation6 + $0x608] sm:$0xff]
    %v1163 = vld [vmem:[#allocation6 + $0x610] sm:$0xff]
    %v1164 = vld [vmem:[#allocation6 + $0x618] sm:$0xff]
    %v1165 = vld [vmem:[#allocation6 + $0x620] sm:$0xff]
    %v1166 = vld [vmem:[#allocation6 + $0x628] sm:$0xff]
    %v1167 = vld [vmem:[#allocation6 + $0x630] sm:$0xff]
    %v1168 = vld [vmem:[#allocation6 + $0x638] sm:$0xff]
    %v1169 = vld [vmem:[#allocation6 + $0x640] sm:$0xff]
    %v1170 = vld [vmem:[#allocation6 + $0x648] sm:$0xff]
    %v1171 = vld [vmem:[#allocation6 + $0x650] sm:$0xff]
    %v1172 = vld [vmem:[#allocation6 + $0x658] sm:$0xff]
    %v1173 = vld [vmem:[#allocation6 + $0x660] sm:$0xff]
    %v1174 = vld [vmem:[#allocation6 + $0x668] sm:$0xff]
    %v1175 = vld [vmem:[#allocation6 + $0x670] sm:$0xff]
    %v1176 = vld [vmem:[#allocation6 + $0x678] sm:$0xff]
    %v1177 = vld [vmem:[#allocation6 + $0x680] sm:$0xff]
    %v1178 = vld [vmem:[#allocation6 + $0x688] sm:$0xff]
    %v1179 = vld [vmem:[#allocation6 + $0x690] sm:$0xff]
    %v1180 = vld [vmem:[#allocation6 + $0x698] sm:$0xff]
    %v1181 = vld [vmem:[#allocation6 + $0x6a0] sm:$0xff]
    %v1182 = vld [vmem:[#allocation6 + $0x6a8] sm:$0xff]
    %v1183 = vld [vmem:[#allocation6 + $0x6b0] sm:$0xff]
    %v1184 = vld [vmem:[#allocation6 + $0x6b8] sm:$0xff]
    %v1185 = vld [vmem:[#allocation6 + $0x6c0] sm:$0xff]
    %v1186 = vld [vmem:[#allocation6 + $0x6c8] sm:$0xff]
    %v1187 = vld [vmem:[#allocation6 + $0x6d0] sm:$0xff]
    %v1188 = vld [vmem:[#allocation6 + $0x6d8] sm:$0xff]
    %v1189 = vld [vmem:[#allocation6 + $0x6e0] sm:$0xff]
    %v1190 = vld [vmem:[#allocation6 + $0x6e8] sm:$0xff]
    %v1191 = vld [vmem:[#allocation6 + $0x6f0] sm:$0xff]
    %v1192 = vld [vmem:[#allocation6 + $0x6f8] sm:$0xff]
    %v1193 = vld [vmem:[#allocation6 + $0x700] sm:$0xff]
    %v1194 = vld [vmem:[#allocation6 + $0x708] sm:$0xff]
    %v1195 = vld [vmem:[#allocation6 + $0x710] sm:$0xff]
    %v1196 = vld [vmem:[#allocation6 + $0x718] sm:$0xff]
    %v1197 = vld [vmem:[#allocation6 + $0x720] sm:$0xff]
    %v1198 = vld [vmem:[#allocation6 + $0x728] sm:$0xff]
    %v1199 = vld [vmem:[#allocation6 + $0x730] sm:$0xff]
    %v1200 = vld [vmem:[#allocation6 + $0x738] sm:$0xff]
    %v1201 = vld [vmem:[#allocation6 + $0x740] sm:$0xff]
    %v1202 = vld [vmem:[#allocation6 + $0x748] sm:$0xff]
    %v1203 = vld [vmem:[#allocation6 + $0x750] sm:$0xff]
    %v1204 = vld [vmem:[#allocation6 + $0x758] sm:$0xff]
    %v1205 = vld [vmem:[#allocation6 + $0x760] sm:$0xff]
    %v1206 = vld [vmem:[#allocation6 + $0x768] sm:$0xff]
    %v1207 = vld [vmem:[#allocation6 + $0x770] sm:$0xff]
    %v1208 = vld [vmem:[#allocation6 + $0x778] sm:$0xff]
    %v1209 = vld [vmem:[#allocation6 + $0x780] sm:$0xff]
    %v1210 = vld [vmem:[#allocation6 + $0x788] sm:$0xff]
    %v1211 = vld [vmem:[#allocation6 + $0x790] sm:$0xff]
    %v1212 = vld [vmem:[#allocation6 + $0x798] sm:$0xff]
    %v1213 = vld [vmem:[#allocation6 + $0x7a0] sm:$0xff]
    %v1214 = vld [vmem:[#allocation6 + $0x7a8] sm:$0xff]
    %v1215 = vld [vmem:[#allocation6 + $0x7b0] sm:$0xff]
    %v1216 = vld [vmem:[#allocation6 + $0x7b8] sm:$0xff]
    %v1217 = vld [vmem:[#allocation6 + $0x7c0] sm:$0xff]
    %v1218 = vld [vmem:[#allocation6 + $0x7c8] sm:$0xff]
    %v1219 = vld [vmem:[#allocation6 + $0x7d0] sm:$0xff]
    %v1220 = vld [vmem:[#allocation6 + $0x7d8] sm:$0xff]
    %v1221 = vld [vmem:[#allocation6 + $0x7e0] sm:$0xff]
    %v1222 = vld [vmem:[#allocation6 + $0x7e8] sm:$0xff]
    %v1223 = vld [vmem:[#allocation6 + $0x7f0] sm:$0xff]
    %v1224 = vld [vmem:[#allocation6 + $0x7f8] sm:$0xff]
    %1225 = vmatpush.msra.mxu0 %v999
    %1226 = vmatpush.msra.mxu0 %v997
    %1227 = vmatpush.msra.mxu0 %v995
    %1228 = vmatpush.msra.mxu0 %v993
    %1229 = vmatpush.msra.mxu0 %v991
    %1230 = vmatpush.msra.mxu0 %v989
    %1231 = vmatpush.msra.mxu0 %v987
    %1232 = vmatpush.msra.mxu0 %v985
    %1233 = vmatpush.msra.mxu0 %v983
    %1234 = vmatpush.msra.mxu0 %v981
    %1235 = vmatpush.msra.mxu0 %v979
    %1236 = vmatpush.msra.mxu0 %v977
    %1237 = vmatpush.msra.mxu0 %v975
    %1238 = vmatpush.msra.mxu0 %v973
    %1239 = vmatpush.msra.mxu0 %v971
    %1240 = vmatpush.msra.mxu0 %v969
    %1241 = vmatmul.f32.gmra.mxu0 %v833
    %v1242 = vpop.f32.mrf.mxu0
    %v1243 = vadd.f32 0.0, %v1242
    %1244 = vmatmul.f32.gmra.mxu0 %v961
    %v1245 = vpop.f32.mrf.mxu0
    %v1246 = vadd.f32 0.0, %v1245
    %1247 = vmatmul.f32.gmra.mxu0 %v922
    %v1248 = vpop.f32.mrf.mxu0
    %v1249 = vadd.f32 0.0, %v1248
    %1250 = vdwg.mxu0
    %1251 = vmatpush.msra.mxu0 %v1031
    %1252 = vmatpush.msra.mxu0 %v1029
    %1253 = vmatpush.msra.mxu0 %v1027
    %1254 = vmatpush.msra.mxu0 %v1025
    %1255 = vmatpush.msra.mxu0 %v1023
    %1256 = vmatpush.msra.mxu0 %v1021
    %1257 = vmatpush.msra.mxu0 %v1019
    %1258 = vmatpush.msra.mxu0 %v1017
    %1259 = vmatpush.msra.mxu0 %v1015
    %1260 = vmatpush.msra.mxu0 %v1013
    %1261 = vmatpush.msra.mxu0 %v1011
    %1262 = vmatpush.msra.mxu0 %v1009
    %1263 = vmatpush.msra.mxu0 %v1007
    %1264 = vmatpush.msra.mxu0 %v1005
    %1265 = vmatpush.msra.mxu0 %v1003
    %1266 = vmatpush.msra.mxu0 %v1001
    %1267 = vmatmul.f32.gmra.mxu0 %v834
    %v1268 = vpop.f32.mrf.mxu0
    %v1269 = vadd.f32 %v1243, %v1268
    %1270 = vmatmul.f32.gmra.mxu0 %v962
    %v1271 = vpop.f32.mrf.mxu0
    %v1272 = vadd.f32 %v1246, %v1271
    %1273 = vmatmul.f32.gmra.mxu0 %v925
    %v1274 = vpop.f32.mrf.mxu0
    %v1275 = vadd.f32 %v1249, %v1274
    %1276 = vdwg.mxu0
    %1277 = vmatpush.msra.mxu0 %v1063
    %1278 = vmatpush.msra.mxu0 %v1061
    %1279 = vmatpush.msra.mxu0 %v1059
    %1280 = vmatpush.msra.mxu0 %v1057
    %1281 = vmatpush.msra.mxu0 %v1055
    %1282 = vmatpush.msra.mxu0 %v1053
    %1283 = vmatpush.msra.mxu0 %v1051
    %1284 = vmatpush.msra.mxu0 %v1049
    %1285 = vmatpush.msra.mxu0 %v1047
    %1286 = vmatpush.msra.mxu0 %v1045
    %1287 = vmatpush.msra.mxu0 %v1043
    %1288 = vmatpush.msra.mxu0 %v1041
    %1289 = vmatpush.msra.mxu0 %v1039
    %1290 = vmatpush.msra.mxu0 %v1037
    %1291 = vmatpush.msra.mxu0 %v1035
    %1292 = vmatpush.msra.mxu0 %v1033
    %1293 = vmatmul.f32.gmra.mxu0 %v835
    %v1294 = vpop.f32.mrf.mxu0
    %v1295 = vadd.f32 %v1269, %v1294
    %1296 = vmatmul.f32.gmra.mxu0 %v963
    %v1297 = vpop.f32.mrf.mxu0
    %v1298 = vadd.f32 %v1272, %v1297
    %1299 = vmatmul.f32.gmra.mxu0 %v928
    %v1300 = vpop.f32.mrf.mxu0
    %v1301 = vadd.f32 %v1275, %v1300
    %1302 = vdwg.mxu0
    %1303 = vmatpush.msra.mxu0 %v1095
    %1304 = vmatpush.msra.mxu0 %v1093
    %1305 = vmatpush.msra.mxu0 %v1091
    %1306 = vmatpush.msra.mxu0 %v1089
    %1307 = vmatpush.msra.mxu0 %v1087
    %1308 = vmatpush.msra.mxu0 %v1085
    %1309 = vmatpush.msra.mxu0 %v1083
    %1310 = vmatpush.msra.mxu0 %v1081
    %1311 = vmatpush.msra.mxu0 %v1079
    %1312 = vmatpush.msra.mxu0 %v1077
    %1313 = vmatpush.msra.mxu0 %v1075
    %1314 = vmatpush.msra.mxu0 %v1073
    %1315 = vmatpush.msra.mxu0 %v1071
    %1316 = vmatpush.msra.mxu0 %v1069
    %1317 = vmatpush.msra.mxu0 %v1067
    %1318 = vmatpush.msra.mxu0 %v1065
    %1319 = vmatmul.f32.gmra.mxu0 %v836
    %v1320 = vpop.f32.mrf.mxu0
    %v1321 = vadd.f32 %v1295, %v1320
    %1322 = vmatmul.f32.gmra.mxu0 %v964
    %v1323 = vpop.f32.mrf.mxu0
    %v1324 = vadd.f32 %v1298, %v1323
    %1325 = vmatmul.f32.gmra.mxu0 %v931
    %v1326 = vpop.f32.mrf.mxu0
    %v1327 = vadd.f32 %v1301, %v1326
    %1328 = vdwg.mxu0
    %1329 = vmatpush.msra.mxu0 %v1127
    %1330 = vmatpush.msra.mxu0 %v1125
    %1331 = vmatpush.msra.mxu0 %v1123
    %1332 = vmatpush.msra.mxu0 %v1121
    %1333 = vmatpush.msra.mxu0 %v1119
    %1334 = vmatpush.msra.mxu0 %v1117
    %1335 = vmatpush.msra.mxu0 %v1115
    %1336 = vmatpush.msra.mxu0 %v1113
    %1337 = vmatpush.msra.mxu0 %v1111
    %1338 = vmatpush.msra.mxu0 %v1109
    %1339 = vmatpush.msra.mxu0 %v1107
    %1340 = vmatpush.msra.mxu0 %v1105
    %1341 = vmatpush.msra.mxu0 %v1103
    %1342 = vmatpush.msra.mxu0 %v1101
    %1343 = vmatpush.msra.mxu0 %v1099
    %1344 = vmatpush.msra.mxu0 %v1097
    %1345 = vmatmul.f32.gmra.mxu0 %v859
    %v1346 = vpop.f32.mrf.mxu0
    %v1347 = vadd.f32 %v1321, %v1346
    %1348 = vmatmul.f32.gmra.mxu0 %v965
    %v1349 = vpop.f32.mrf.mxu0
    %v1350 = vadd.f32 %v1324, %v1349
    %1351 = vmatmul.f32.gmra.mxu0 %v934
    %v1352 = vpop.f32.mrf.mxu0
    %v1353 = vadd.f32 %v1327, %v1352
    %1354 = vdwg.mxu0
    %1355 = vmatpush.msra.mxu0 %v1159
    %1356 = vmatpush.msra.mxu0 %v1157
    %1357 = vmatpush.msra.mxu0 %v1155
    %1358 = vmatpush.msra.mxu0 %v1153
    %1359 = vmatpush.msra.mxu0 %v1151
    %1360 = vmatpush.msra.mxu0 %v1149
    %1361 = vmatpush.msra.mxu0 %v1147
    %1362 = vmatpush.msra.mxu0 %v1145
    %1363 = vmatpush.msra.mxu0 %v1143
    %1364 = vmatpush.msra.mxu0 %v1141
    %1365 = vmatpush.msra.mxu0 %v1139
    %1366 = vmatpush.msra.mxu0 %v1137
    %1367 = vmatpush.msra.mxu0 %v1135
    %1368 = vmatpush.msra.mxu0 %v1133
    %1369 = vmatpush.msra.mxu0 %v1131
    %1370 = vmatpush.msra.mxu0 %v1129
    %1371 = vmatmul.f32.gmra.mxu0 %v862
    %v1372 = vpop.f32.mrf.mxu0
    %v1373 = vadd.f32 %v1347, %v1372
    %1374 = vmatmul.f32.gmra.mxu0 %v966
    %v1375 = vpop.f32.mrf.mxu0
    %v1376 = vadd.f32 %v1350, %v1375
    %1377 = vmatmul.f32.gmra.mxu0 %v937
    %v1378 = vpop.f32.mrf.mxu0
    %v1379 = vadd.f32 %v1353, %v1378
    %1380 = vdwg.mxu0
    %1381 = vmatpush.msra.mxu0 %v1191
    %1382 = vmatpush.msra.mxu0 %v1189
    %1383 = vmatpush.msra.mxu0 %v1187
    %1384 = vmatpush.msra.mxu0 %v1185
    %1385 = vmatpush.msra.mxu0 %v1183
    %1386 = vmatpush.msra.mxu0 %v1181
    %1387 = vmatpush.msra.mxu0 %v1179
    %1388 = vmatpush.msra.mxu0 %v1177
    %1389 = vmatpush.msra.mxu0 %v1175
    %1390 = vmatpush.msra.mxu0 %v1173
    %1391 = vmatpush.msra.mxu0 %v1171
    %1392 = vmatpush.msra.mxu0 %v1169
    %1393 = vmatpush.msra.mxu0 %v1167
    %1394 = vmatpush.msra.mxu0 %v1165
    %1395 = vmatpush.msra.mxu0 %v1163
    %1396 = vmatpush.msra.mxu0 %v1161
    %1397 = vmatmul.f32.gmra.mxu0 %v865
    %v1398 = vpop.f32.mrf.mxu0
    %v1399 = vadd.f32 %v1373, %v1398
    %1400 = vmatmul.f32.gmra.mxu0 %v967
    %v1401 = vpop.f32.mrf.mxu0
    %v1402 = vadd.f32 %v1376, %v1401
    %1403 = vmatmul.f32.gmra.mxu0 %v940
    %v1404 = vpop.f32.mrf.mxu0
    %v1405 = vadd.f32 %v1379, %v1404
    %1406 = vdwg.mxu0
    %1407 = vmatpush.msra.mxu0 %v1223
    %1408 = vmatpush.msra.mxu0 %v1221
    %1409 = vmatpush.msra.mxu0 %v1219
    %1410 = vmatpush.msra.mxu0 %v1217
    %1411 = vmatpush.msra.mxu0 %v1215
    %1412 = vmatpush.msra.mxu0 %v1213
    %1413 = vmatpush.msra.mxu0 %v1211
    %1414 = vmatpush.msra.mxu0 %v1209
    %1415 = vmatpush.msra.mxu0 %v1207
    %1416 = vmatpush.msra.mxu0 %v1205
    %1417 = vmatpush.msra.mxu0 %v1203
    %1418 = vmatpush.msra.mxu0 %v1201
    %1419 = vmatpush.msra.mxu0 %v1199
    %1420 = vmatpush.msra.mxu0 %v1197
    %1421 = vmatpush.msra.mxu0 %v1195
    %1422 = vmatpush.msra.mxu0 %v1193
    %1423 = vmatmul.f32.gmra.mxu0 %v868
    %v1424 = vpop.f32.mrf.mxu0
    %v1425 = vadd.f32 %v1399, %v1424
    %1426 = vmatmul.f32.gmra.mxu0 %v968
    %v1427 = vpop.f32.mrf.mxu0
    %v1428 = vadd.f32 %v1402, %v1427
    %1429 = vmatmul.f32.gmra.mxu0 %v943
    %v1430 = vpop.f32.mrf.mxu0
    %v1431 = vadd.f32 %v1405, %v1430
    %1432 = vdwg.mxu0
    %1433 = vmatpush.msra.mxu0 %v1000
    %1434 = vmatpush.msra.mxu0 %v998
    %1435 = vmatpush.msra.mxu0 %v996
    %1436 = vmatpush.msra.mxu0 %v994
    %1437 = vmatpush.msra.mxu0 %v992
    %1438 = vmatpush.msra.mxu0 %v990
    %1439 = vmatpush.msra.mxu0 %v988
    %1440 = vmatpush.msra.mxu0 %v986
    %1441 = vmatpush.msra.mxu0 %v984
    %1442 = vmatpush.msra.mxu0 %v982
    %1443 = vmatpush.msra.mxu0 %v980
    %1444 = vmatpush.msra.mxu0 %v978
    %1445 = vmatpush.msra.mxu0 %v976
    %1446 = vmatpush.msra.mxu0 %v974
    %1447 = vmatpush.msra.mxu0 %v972
    %1448 = vmatpush.msra.mxu0 %v970
    %1449 = vmatmul.f32.gmra.mxu0 %v833
    %v1450 = vpop.f32.mrf.mxu0
    %v1451 = vadd.f32 0.0, %v1450
    %1452 = vmatmul.f32.gmra.mxu0 %v961
    %v1453 = vpop.f32.mrf.mxu0
    %v1454 = vadd.f32 0.0, %v1453
    %1455 = vmatmul.f32.gmra.mxu0 %v922
    %v1456 = vpop.f32.mrf.mxu0
    %v1457 = vadd.f32 0.0, %v1456
    %1458 = vdwg.mxu0
    %1459 = vmatpush.msra.mxu0 %v1032
    %1460 = vmatpush.msra.mxu0 %v1030
    %1461 = vmatpush.msra.mxu0 %v1028
    %1462 = vmatpush.msra.mxu0 %v1026
    %1463 = vmatpush.msra.mxu0 %v1024
    %1464 = vmatpush.msra.mxu0 %v1022
    %1465 = vmatpush.msra.mxu0 %v1020
    %1466 = vmatpush.msra.mxu0 %v1018
    %1467 = vmatpush.msra.mxu0 %v1016
    %1468 = vmatpush.msra.mxu0 %v1014
    %1469 = vmatpush.msra.mxu0 %v1012
    %1470 = vmatpush.msra.mxu0 %v1010
    %1471 = vmatpush.msra.mxu0 %v1008
    %1472 = vmatpush.msra.mxu0 %v1006
    %1473 = vmatpush.msra.mxu0 %v1004
    %1474 = vmatpush.msra.mxu0 %v1002
    %1475 = vmatmul.f32.gmra.mxu0 %v834
    %v1476 = vpop.f32.mrf.mxu0
    %v1477 = vadd.f32 %v1451, %v1476
    %1478 = vmatmul.f32.gmra.mxu0 %v962
    %v1479 = vpop.f32.mrf.mxu0
    %v1480 = vadd.f32 %v1454, %v1479
    %1481 = vmatmul.f32.gmra.mxu0 %v925
    %v1482 = vpop.f32.mrf.mxu0
    %v1483 = vadd.f32 %v1457, %v1482
    %1484 = vdwg.mxu0
    %1485 = vmatpush.msra.mxu0 %v1064
    %1486 = vmatpush.msra.mxu0 %v1062
    %1487 = vmatpush.msra.mxu0 %v1060
    %1488 = vmatpush.msra.mxu0 %v1058
    %1489 = vmatpush.msra.mxu0 %v1056
    %1490 = vmatpush.msra.mxu0 %v1054
    %1491 = vmatpush.msra.mxu0 %v1052
    %1492 = vmatpush.msra.mxu0 %v1050
    %1493 = vmatpush.msra.mxu0 %v1048
    %1494 = vmatpush.msra.mxu0 %v1046
    %1495 = vmatpush.msra.mxu0 %v1044
    %1496 = vmatpush.msra.mxu0 %v1042
    %1497 = vmatpush.msra.mxu0 %v1040
    %1498 = vmatpush.msra.mxu0 %v1038
    %1499 = vmatpush.msra.mxu0 %v1036
    %1500 = vmatpush.msra.mxu0 %v1034
    %1501 = vmatmul.f32.gmra.mxu0 %v835
    %v1502 = vpop.f32.mrf.mxu0
    %v1503 = vadd.f32 %v1477, %v1502
    %1504 = vmatmul.f32.gmra.mxu0 %v963
    %v1505 = vpop.f32.mrf.mxu0
    %v1506 = vadd.f32 %v1480, %v1505
    %1507 = vmatmul.f32.gmra.mxu0 %v928
    %v1508 = vpop.f32.mrf.mxu0
    %v1509 = vadd.f32 %v1483, %v1508
    %1510 = vdwg.mxu0
    %1511 = vmatpush.msra.mxu0 %v1096
    %1512 = vmatpush.msra.mxu0 %v1094
    %1513 = vmatpush.msra.mxu0 %v1092
    %1514 = vmatpush.msra.mxu0 %v1090
    %1515 = vmatpush.msra.mxu0 %v1088
    %1516 = vmatpush.msra.mxu0 %v1086
    %1517 = vmatpush.msra.mxu0 %v1084
    %1518 = vmatpush.msra.mxu0 %v1082
    %1519 = vmatpush.msra.mxu0 %v1080
    %1520 = vmatpush.msra.mxu0 %v1078
    %1521 = vmatpush.msra.mxu0 %v1076
    %1522 = vmatpush.msra.mxu0 %v1074
    %1523 = vmatpush.msra.mxu0 %v1072
    %1524 = vmatpush.msra.mxu0 %v1070
    %1525 = vmatpush.msra.mxu0 %v1068
    %1526 = vmatpush.msra.mxu0 %v1066
    %1527 = vmatmul.f32.gmra.mxu0 %v836
    %v1528 = vpop.f32.mrf.mxu0
    %v1529 = vadd.f32 %v1503, %v1528
    %1530 = vmatmul.f32.gmra.mxu0 %v964
    %v1531 = vpop.f32.mrf.mxu0
    %v1532 = vadd.f32 %v1506, %v1531
    %1533 = vmatmul.f32.gmra.mxu0 %v931
    %v1534 = vpop.f32.mrf.mxu0
    %v1535 = vadd.f32 %v1509, %v1534
    %1536 = vdwg.mxu0
    %1537 = vmatpush.msra.mxu0 %v1128
    %1538 = vmatpush.msra.mxu0 %v1126
    %1539 = vmatpush.msra.mxu0 %v1124
    %1540 = vmatpush.msra.mxu0 %v1122
    %1541 = vmatpush.msra.mxu0 %v1120
    %1542 = vmatpush.msra.mxu0 %v1118
    %1543 = vmatpush.msra.mxu0 %v1116
    %1544 = vmatpush.msra.mxu0 %v1114
    %1545 = vmatpush.msra.mxu0 %v1112
    %1546 = vmatpush.msra.mxu0 %v1110
    %1547 = vmatpush.msra.mxu0 %v1108
    %1548 = vmatpush.msra.mxu0 %v1106
    %1549 = vmatpush.msra.mxu0 %v1104
    %1550 = vmatpush.msra.mxu0 %v1102
    %1551 = vmatpush.msra.mxu0 %v1100
    %1552 = vmatpush.msra.mxu0 %v1098
    %1553 = vmatmul.f32.gmra.mxu0 %v859
    %v1554 = vpop.f32.mrf.mxu0
    %v1555 = vadd.f32 %v1529, %v1554
    %1556 = vmatmul.f32.gmra.mxu0 %v965
    %v1557 = vpop.f32.mrf.mxu0
    %v1558 = vadd.f32 %v1532, %v1557
    %1559 = vmatmul.f32.gmra.mxu0 %v934
    %v1560 = vpop.f32.mrf.mxu0
    %v1561 = vadd.f32 %v1535, %v1560
    %1562 = vdwg.mxu0
    %1563 = vmatpush.msra.mxu0 %v1160
    %1564 = vmatpush.msra.mxu0 %v1158
    %1565 = vmatpush.msra.mxu0 %v1156
    %1566 = vmatpush.msra.mxu0 %v1154
    %1567 = vmatpush.msra.mxu0 %v1152
    %1568 = vmatpush.msra.mxu0 %v1150
    %1569 = vmatpush.msra.mxu0 %v1148
    %1570 = vmatpush.msra.mxu0 %v1146
    %1571 = vmatpush.msra.mxu0 %v1144
    %1572 = vmatpush.msra.mxu0 %v1142
    %1573 = vmatpush.msra.mxu0 %v1140
    %1574 = vmatpush.msra.mxu0 %v1138
    %1575 = vmatpush.msra.mxu0 %v1136
    %1576 = vmatpush.msra.mxu0 %v1134
    %1577 = vmatpush.msra.mxu0 %v1132
    %1578 = vmatpush.msra.mxu0 %v1130
    %1579 = vmatmul.f32.gmra.mxu0 %v862
    %v1580 = vpop.f32.mrf.mxu0
    %v1581 = vadd.f32 %v1555, %v1580
    %1582 = vmatmul.f32.gmra.mxu0 %v966
    %v1583 = vpop.f32.mrf.mxu0
    %v1584 = vadd.f32 %v1558, %v1583
    %1585 = vmatmul.f32.gmra.mxu0 %v937
    %v1586 = vpop.f32.mrf.mxu0
    %v1587 = vadd.f32 %v1561, %v1586
    %1588 = vdwg.mxu0
    %1589 = vmatpush.msra.mxu0 %v1192
    %1590 = vmatpush.msra.mxu0 %v1190
    %1591 = vmatpush.msra.mxu0 %v1188
    %1592 = vmatpush.msra.mxu0 %v1186
    %1593 = vmatpush.msra.mxu0 %v1184
    %1594 = vmatpush.msra.mxu0 %v1182
    %1595 = vmatpush.msra.mxu0 %v1180
    %1596 = vmatpush.msra.mxu0 %v1178
    %1597 = vmatpush.msra.mxu0 %v1176
    %1598 = vmatpush.msra.mxu0 %v1174
    %1599 = vmatpush.msra.mxu0 %v1172
    %1600 = vmatpush.msra.mxu0 %v1170
    %1601 = vmatpush.msra.mxu0 %v1168
    %1602 = vmatpush.msra.mxu0 %v1166
    %1603 = vmatpush.msra.mxu0 %v1164
    %1604 = vmatpush.msra.mxu0 %v1162
    %1605 = vmatmul.f32.gmra.mxu0 %v865
    %v1606 = vpop.f32.mrf.mxu0
    %v1607 = vadd.f32 %v1581, %v1606
    %1608 = vmatmul.f32.gmra.mxu0 %v967
    %v1609 = vpop.f32.mrf.mxu0
    %v1610 = vadd.f32 %v1584, %v1609
    %1611 = vmatmul.f32.gmra.mxu0 %v940
    %v1612 = vpop.f32.mrf.mxu0
    %v1613 = vadd.f32 %v1587, %v1612
    %1614 = vdwg.mxu0
    %1615 = vmatpush.msra.mxu0 %v1224
    %1616 = vmatpush.msra.mxu0 %v1222
    %1617 = vmatpush.msra.mxu0 %v1220
    %1618 = vmatpush.msra.mxu0 %v1218
    %1619 = vmatpush.msra.mxu0 %v1216
    %1620 = vmatpush.msra.mxu0 %v1214
    %1621 = vmatpush.msra.mxu0 %v1212
    %1622 = vmatpush.msra.mxu0 %v1210
    %1623 = vmatpush.msra.mxu0 %v1208
    %1624 = vmatpush.msra.mxu0 %v1206
    %1625 = vmatpush.msra.mxu0 %v1204
    %1626 = vmatpush.msra.mxu0 %v1202
    %1627 = vmatpush.msra.mxu0 %v1200
    %1628 = vmatpush.msra.mxu0 %v1198
    %1629 = vmatpush.msra.mxu0 %v1196
    %1630 = vmatpush.msra.mxu0 %v1194
    %1631 = vmatmul.f32.gmra.mxu0 %v868
    %v1632 = vpop.f32.mrf.mxu0
    %v1633 = vadd.f32 %v1607, %v1632
    %1634 = vmatmul.f32.gmra.mxu0 %v968
    %v1635 = vpop.f32.mrf.mxu0
    %v1636 = vadd.f32 %v1610, %v1635
    %1637 = vmatmul.f32.gmra.mxu0 %v943
    %v1638 = vpop.f32.mrf.mxu0
    %v1639 = vadd.f32 %v1613, %v1638
    %1640 = vdwg.mxu0
    %v1641 = vld [vmem:[%s9] sm:$0xff]
    %v1642 = vld [vmem:[%s9 + $0x8] sm:$0xff]
    %v1643 = vld [vmem:[%s9 + $0x10] sm:$0xff]
    %v1644 = vld [vmem:[%s9 + $0x18] sm:$0xff]
    %v1645 = vadd.f32 %v1425, %v1428
    %v1646 = vsel %vm198, %v1431, 0.0
    %v1647 = vadd.f32 %v1645, %v1646
    %v1648 = vrot.slane %v1647, 4
    %v1649 = vadd.f32 %v1647, %v1648
    %v1650 = vrot.slane %v1649, 2
    %v1651 = vadd.f32 %v1649, %v1650
    %v1652 = vrot.slane %v1651, 1
    %v1653 = vadd.f32 %v1651, %v1652
    %v1654 = vadd.f32 %v1633, %v1636
    %v1655 = vsel %vm198, %v1639, 0.0
    %v1656 = vadd.f32 %v1654, %v1655
    %v1657 = vrot.slane %v1656, 4
    %v1658 = vadd.f32 %v1656, %v1657
    %v1659 = vrot.slane %v1658, 2
    %v1660 = vadd.f32 %v1658, %v1659
    %v1661 = vrot.slane %v1660, 1
    %v1662 = vadd.f32 %v1660, %v1661
    %1663 = vmatpush.xpose.msra.mxu0 0.0
    %1664 = vmatpush.xpose.msra.mxu0 0.0
    %1665 = vmatpush.xpose.msra.mxu0 0.0
    %1666 = vmatpush.xpose.msra.mxu0 0.0
    %1667 = vmatpush.xpose.msra.mxu0 0.0
    %1668 = vmatpush.xpose.msra.mxu0 0.0
    %1669 = vmatpush.xpose.msra.mxu0 0.0
    %1670 = vmatpush.xpose.msra.mxu0 0.0
    %1671 = vmatpush.xpose.msra.mxu0 0.0
    %1672 = vmatpush.xpose.msra.mxu0 0.0
    %1673 = vmatpush.xpose.msra.mxu0 0.0
    %1674 = vmatpush.xpose.msra.mxu0 0.0
    %1675 = vmatpush.xpose.msra.mxu0 0.0
    %1676 = vmatpush.xpose.msra.mxu0 0.0
    %1677 = vmatpush.xpose.msra.mxu0 %v1643
    %1678 = vmatpush.xpose.msra.mxu0 %v1641
    %1679 = vmatmul.f32.gmra.mxu0 %v1653
    %v1680 = vpop.f32.mrf.mxu0
    %v1681 = vadd.f32 0.0, %v1680
    %1682 = vdwg.mxu0
    %1683 = vmatpush.xpose.msra.mxu0 0.0
    %1684 = vmatpush.xpose.msra.mxu0 0.0
    %1685 = vmatpush.xpose.msra.mxu0 0.0
    %1686 = vmatpush.xpose.msra.mxu0 0.0
    %1687 = vmatpush.xpose.msra.mxu0 0.0
    %1688 = vmatpush.xpose.msra.mxu0 0.0
    %1689 = vmatpush.xpose.msra.mxu0 0.0
    %1690 = vmatpush.xpose.msra.mxu0 0.0
    %1691 = vmatpush.xpose.msra.mxu0 0.0
    %1692 = vmatpush.xpose.msra.mxu0 0.0
    %1693 = vmatpush.xpose.msra.mxu0 0.0
    %1694 = vmatpush.xpose.msra.mxu0 0.0
    %1695 = vmatpush.xpose.msra.mxu0 0.0
    %1696 = vmatpush.xpose.msra.mxu0 0.0
    %1697 = vmatpush.xpose.msra.mxu0 %v1644
    %1698 = vmatpush.xpose.msra.mxu0 %v1642
    %1699 = vmatmul.f32.gmra.mxu0 %v1662
    %v1700 = vpop.f32.mrf.mxu0
    %v1701 = vadd.f32 %v1681, %v1700
    %1702 = vdwg.mxu0
    %v1703 = vmul.f32 %v1425, %v1425
    %v1704 = vmul.f32 %v1633, %v1633
    %v1705 = vmul.f32 %v1428, %v1428
    %v1706 = vmul.f32 %v1636, %v1636
    %v1707 = vmul.f32 %v1431, %v1431
    %v1708 = vmul.f32 %v1639, %v1639
    %v1709 = vadd.f32 %v1703, %v1705
    %v1710 = vsel %vm198, %v1707, 0.0
    %v1711 = vadd.f32 %v1709, %v1710
    %v1712 = vrot.slane %v1711, 4
    %v1713 = vadd.f32 %v1711, %v1712
    %v1714 = vrot.slane %v1713, 2
    %v1715 = vadd.f32 %v1713, %v1714
    %v1716 = vrot.slane %v1715, 1
    %v1717 = vadd.f32 %v1715, %v1716
    %v1718 = vadd.f32 %v1704, %v1706
    %v1719 = vsel %vm198, %v1708, 0.0
    %v1720 = vadd.f32 %v1718, %v1719
    %v1721 = vrot.slane %v1720, 4
    %v1722 = vadd.f32 %v1720, %v1721
    %v1723 = vrot.slane %v1722, 2
    %v1724 = vadd.f32 %v1722, %v1723
    %v1725 = vrot.slane %v1724, 1
    %v1726 = vadd.f32 %v1724, %v1725
    %1727 = vmatpush.xpose.msra.mxu0 0.0
    %1728 = vmatpush.xpose.msra.mxu0 0.0
    %1729 = vmatpush.xpose.msra.mxu0 0.0
    %1730 = vmatpush.xpose.msra.mxu0 0.0
    %1731 = vmatpush.xpose.msra.mxu0 0.0
    %1732 = vmatpush.xpose.msra.mxu0 0.0
    %1733 = vmatpush.xpose.msra.mxu0 0.0
    %1734 = vmatpush.xpose.msra.mxu0 0.0
    %1735 = vmatpush.xpose.msra.mxu0 0.0
    %1736 = vmatpush.xpose.msra.mxu0 0.0
    %1737 = vmatpush.xpose.msra.mxu0 0.0
    %1738 = vmatpush.xpose.msra.mxu0 0.0
    %1739 = vmatpush.xpose.msra.mxu0 0.0
    %1740 = vmatpush.xpose.msra.mxu0 0.0
    %1741 = vmatpush.xpose.msra.mxu0 %v1643
    %1742 = vmatpush.xpose.msra.mxu0 %v1641
    %1743 = vmatmul.f32.gmra.mxu0 %v1717
    %v1744 = vpop.f32.mrf.mxu0
    %v1745 = vadd.f32 0.0, %v1744
    %1746 = vdwg.mxu0
    %1747 = vmatpush.xpose.msra.mxu0 0.0
    %1748 = vmatpush.xpose.msra.mxu0 0.0
    %1749 = vmatpush.xpose.msra.mxu0 0.0
    %1750 = vmatpush.xpose.msra.mxu0 0.0
    %1751 = vmatpush.xpose.msra.mxu0 0.0
    %1752 = vmatpush.xpose.msra.mxu0 0.0
    %1753 = vmatpush.xpose.msra.mxu0 0.0
    %1754 = vmatpush.xpose.msra.mxu0 0.0
    %1755 = vmatpush.xpose.msra.mxu0 0.0
    %1756 = vmatpush.xpose.msra.mxu0 0.0
    %1757 = vmatpush.xpose.msra.mxu0 0.0
    %1758 = vmatpush.xpose.msra.mxu0 0.0
    %1759 = vmatpush.xpose.msra.mxu0 0.0
    %1760 = vmatpush.xpose.msra.mxu0 0.0
    %1761 = vmatpush.xpose.msra.mxu0 %v1644
    %1762 = vmatpush.xpose.msra.mxu0 %v1642
    %1763 = vmatmul.f32.gmra.mxu0 %v1726
    %v1764 = vpop.f32.mrf.mxu0
    %v1765 = vadd.f32 %v1745, %v1764
    %1766 = vdwg.mxu0
    %v1767 = vrcp.pop 162.0
    %v1768 = vmul.f32 162.0, %v1767
    %v1769 = vsub.f32 1.0, %v1768
    %v1770 = vmul.f32 %v1767, %v1769
    %v1771 = vadd.f32 %v1767, %v1770
    %vm1772 = vweird.f32 %v1767
    %v1773 = vsel %vm1772, %v1767, %v1771
    %v1774 = vmul.f32 %v1701, %v1773
    %v1775 = vmul.f32 %v1765, %v1773
    %v1776 = vmul.f32 %v1774, %v1774
    %v1777 = vsub.f32 %v1775, %v1776
    %v1778 = vld [vmem:[%s5] sm:$0x1]
    %v1779 = vadd.f32 %v1777, 1e-05
    %v1780 = vrsqrt.pop %v1779
    %v1781 = vmul.f32 %v1780, %v1779
    %v1782 = vmul.f32 %v1781, %v1780
    %v1783 = vmul.f32 0.5, %v1782
    %v1784 = vsub.f32 1.5, %v1783
    %v1785 = vmul.f32 %v1780, %v1784
    %vm1786 = vweird.f32 %v1779
    %vm1787 = vweird.f32 %v1780
    %vm1788 = vmor %vm1786, %vm1787
    %v1789 = vsel %vm1788, %v1780, %v1785
    %v1790 = vmul.f32 %v1778, %v1789
    %v1791 = vld [vmem:[%s6] sm:$0x1]
    %v1792 = vmul.f32 %v1774, %v1790
    %v1793 = vsub.f32 %v1791, %v1792
    %vm1794 = vcmask 130048
    %v1796 = vsel %vm1794, %v1790, 0
    %1798 = vmatpush.msra.mxu0 0.0
    %1799 = vmatpush.msra.mxu0 0.0
    %1800 = vmatpush.msra.mxu0 0.0
    %1801 = vmatpush.msra.mxu0 0.0
    %1802 = vmatpush.msra.mxu0 0.0
    %1803 = vmatpush.msra.mxu0 0.0
    %1804 = vmatpush.msra.mxu0 0.0
    %1805 = vmatpush.msra.mxu0 0.0
    %1806 = vmatpush.msra.mxu0 0.0
    %1807 = vmatpush.msra.mxu0 0.0
    %1808 = vmatpush.msra.mxu0 0.0
    %1809 = vmatpush.msra.mxu0 0.0
    %1810 = vmatpush.msra.mxu0 0.0
    %1811 = vmatpush.msra.mxu0 0.0
    %1812 = vmatpush.msra.mxu0 %v1643
    %1813 = vmatpush.msra.mxu0 %v1641
    %1814 = vmatmul.f32.gmra.mxu0 %v1796
    %v1815 = vpop.f32.mrf.mxu0
    %v1816 = vadd.f32 0.0, %v1815
    %1817 = vdwg.mxu0
    %1818 = vmatpush.msra.mxu0 0.0
    %1819 = vmatpush.msra.mxu0 0.0
    %1820 = vmatpush.msra.mxu0 0.0
    %1821 = vmatpush.msra.mxu0 0.0
    %1822 = vmatpush.msra.mxu0 0.0
    %1823 = vmatpush.msra.mxu0 0.0
    %1824 = vmatpush.msra.mxu0 0.0
    %1825 = vmatpush.msra.mxu0 0.0
    %1826 = vmatpush.msra.mxu0 0.0
    %1827 = vmatpush.msra.mxu0 0.0
    %1828 = vmatpush.msra.mxu0 0.0
    %1829 = vmatpush.msra.mxu0 0.0
    %1830 = vmatpush.msra.mxu0 0.0
    %1831 = vmatpush.msra.mxu0 0.0
    %1832 = vmatpush.msra.mxu0 %v1644
    %1833 = vmatpush.msra.mxu0 %v1642
    %1834 = vmatmul.f32.gmra.mxu0 %v1796
    %v1835 = vpop.f32.mrf.mxu0
    %v1836 = vadd.f32 0.0, %v1835
    %1837 = vdwg.mxu0
    %v1839 = vsel %vm1794, %v1793, 0
    %1841 = vmatpush.msra.mxu0 0.0
    %1842 = vmatpush.msra.mxu0 0.0
    %1843 = vmatpush.msra.mxu0 0.0
    %1844 = vmatpush.msra.mxu0 0.0
    %1845 = vmatpush.msra.mxu0 0.0
    %1846 = vmatpush.msra.mxu0 0.0
    %1847 = vmatpush.msra.mxu0 0.0
    %1848 = vmatpush.msra.mxu0 0.0
    %1849 = vmatpush.msra.mxu0 0.0
    %1850 = vmatpush.msra.mxu0 0.0
    %1851 = vmatpush.msra.mxu0 0.0
    %1852 = vmatpush.msra.mxu0 0.0
    %1853 = vmatpush.msra.mxu0 0.0
    %1854 = vmatpush.msra.mxu0 0.0
    %1855 = vmatpush.msra.mxu0 %v1643
    %1856 = vmatpush.msra.mxu0 %v1641
    %1857 = vmatmul.f32.gmra.mxu0 %v1839
    %v1858 = vpop.f32.mrf.mxu0
    %v1859 = vadd.f32 0.0, %v1858
    %1860 = vdwg.mxu0
    %1861 = vmatpush.msra.mxu0 0.0
    %1862 = vmatpush.msra.mxu0 0.0
    %1863 = vmatpush.msra.mxu0 0.0
    %1864 = vmatpush.msra.mxu0 0.0
    %1865 = vmatpush.msra.mxu0 0.0
    %1866 = vmatpush.msra.mxu0 0.0
    %1867 = vmatpush.msra.mxu0 0.0
    %1868 = vmatpush.msra.mxu0 0.0
    %1869 = vmatpush.msra.mxu0 0.0
    %1870 = vmatpush.msra.mxu0 0.0
    %1871 = vmatpush.msra.mxu0 0.0
    %1872 = vmatpush.msra.mxu0 0.0
    %1873 = vmatpush.msra.mxu0 0.0
    %1874 = vmatpush.msra.mxu0 0.0
    %1875 = vmatpush.msra.mxu0 %v1644
    %1876 = vmatpush.msra.mxu0 %v1642
    %1877 = vmatmul.f32.gmra.mxu0 %v1839
    %v1878 = vpop.f32.mrf.mxu0
    %v1879 = vadd.f32 0.0, %v1878
    %1880 = vdwg.mxu0
    %v1881 = vperm.slane %v1816, 0
    %v1882 = vperm.slane %v1836, 0
    %v1883 = vmul.f32 %v1425, %v1881
    %v1884 = vmul.f32 %v1633, %v1882
    %v1885 = vmul.f32 %v1428, %v1881
    %v1886 = vmul.f32 %v1636, %v1882
    %v1887 = vmul.f32 %v1431, %v1881
    %v1888 = vmul.f32 %v1639, %v1882
    %v1889 = vperm.slane %v1859, 0
    %v1890 = vperm.slane %v1879, 0
    %v1891 = vadd.f32 %v1883, %v1889
    %v1892 = vadd.f32 %v1884, %v1890
    %v1893 = vadd.f32 %v1885, %v1889
    %v1894 = vadd.f32 %v1886, %v1890
    %v1895 = vadd.f32 %v1887, %v1889
    %v1896 = vadd.f32 %v1888, %v1890
    %v1897 = vmul.f32 %v1891, 0.2
    %v1898 = vmul.f32 %v1892, 0.2
    %v1899 = vmul.f32 %v1893, 0.2
    %v1900 = vmul.f32 %v1894, 0.2
    %v1901 = vmul.f32 %v1895, 0.2
    %v1902 = vmul.f32 %v1896, 0.2
    %v1903 = vmax.f32 %v1891, %v1897
    %v1904 = vmax.f32 %v1892, %v1898
    %v1905 = vmax.f32 %v1893, %v1899
    %v1906 = vmax.f32 %v1894, %v1900
    %v1907 = vmax.f32 %v1895, %v1901
    %v1908 = vmax.f32 %v1896, %v1902
    %v1911 = vrot.slane %v1903, 6
    %v1912 = vrot.slane %v1904, 5
    %v1913 = vsel %vm615, %v1911, %v1912
    %v1914 = vsel %vm198, %v614, %v1913
    %1916 = vst.msk [vmem:[#allocation3] ss:$8 sm:$0xf] %vm622, %v1914
    %1917 = vst.msk [vmem:[#allocation3] ss:$8 sm:$0x0] %vm622, %v1914
    %v1918 = vrot.slane %v1903, 1
    %v1919 = vrot.slane %v1904, 1
    %1920 = vst [vmem:[#allocation1] sm:$0xff] %v1903
    %1921 = vst [vmem:[#allocation1 + $0x9] sm:$0xff] %v1904
    %1922 = vst [vmem:[#allocation1 + $0x12] sm:$0xff] %v1918
    %1923 = vst [vmem:[#allocation1 + $0x1b] sm:$0xff] %v1919
    %s1924 = scalar_lea.vmem [#allocation1], 1
    %v1925 = vld [vmem:[%s1924] ss:$9 sm:$0xff]
    %s1927 = scalar_lea.vmem [#allocation3], 1
    %1928 = vst.msk [vmem:[%s1927] ss:$8 sm:$0xf] %vm622, %v1925
    %1929 = vst.msk [vmem:[%s1927] ss:$8 sm:$0x0] %vm622, %v1925
    %1930 = vst [vmem:[#allocation1] sm:$0xff] %v1903
    %1931 = vst [vmem:[#allocation1 + $0x9] sm:$0xff] %v1904
    %1932 = vst [vmem:[#allocation1 + $0x12] sm:$0xff] %v1918
    %1933 = vst [vmem:[#allocation1 + $0x1b] sm:$0xff] %v1919
    %s1934 = scalar_lea.vmem [#allocation1], 3
    %v1935 = vld [vmem:[%s1934] ss:$9 sm:$0xff]
    %s1937 = scalar_lea.vmem [#allocation3], 2
    %1938 = vst.msk [vmem:[%s1937] ss:$8 sm:$0xf] %vm622, %v1935
    %1939 = vst.msk [vmem:[%s1937] ss:$8 sm:$0x0] %vm622, %v1935
    %1940 = vst [vmem:[#allocation1] sm:$0xff] %v1903
    %1941 = vst [vmem:[#allocation1 + $0x9] sm:$0xff] %v1904
    %1942 = vst [vmem:[#allocation1 + $0x12] sm:$0xff] %v1918
    %1943 = vst [vmem:[#allocation1 + $0x1b] sm:$0xff] %v1919
    %s1944 = scalar_lea.vmem [#allocation1], 5
    %v1945 = vld [vmem:[%s1944] ss:$9 sm:$0xff]
    %s1947 = scalar_lea.vmem [#allocation3], 3
    %1948 = vst.msk [vmem:[%s1947] ss:$8 sm:$0xf] %vm622, %v1945
    %1949 = vst.msk [vmem:[%s1947] ss:$8 sm:$0x0] %vm622, %v1945
    %v1952 = vrot.slane %v1905, 1
    %v1953 = vrot.slane %v1906, 1
    %1954 = vst [vmem:[#allocation1] sm:$0xff] %v1903
    %1955 = vst [vmem:[#allocation1 + $0x9] sm:$0xff] %v1904
    %1956 = vst [vmem:[#allocation1 + $0x12] sm:$0xff] %v1952
    %1957 = vst [vmem:[#allocation1 + $0x1b] sm:$0xff] %v1953
    %s1958 = scalar_lea.vmem [#allocation1], 7
    %v1959 = vld [vmem:[%s1958] ss:$9 sm:$0xff]
    %s1961 = scalar_lea.vmem [#allocation3], 4
    %1962 = vst.msk [vmem:[%s1961] ss:$8 sm:$0xf] %vm622, %v1959
    %1963 = vst.msk [vmem:[%s1961] ss:$8 sm:$0x0] %vm622, %v1959
    %v1964 = vrot.slane %v1952, 6
    %v1965 = vrot.slane %v1953, 5
    %v1966 = vsel %vm615, %v1964, %v1965
    %v1967 = vsel %vm198, %v614, %v1966
    %s1969 = scalar_lea.vmem [#allocation3], 6
    %1970 = vst.msk [vmem:[%s1969] ss:$8 sm:$0xf] %vm622, %v1967
    %1971 = vst.msk [vmem:[%s1969] ss:$8 sm:$0x0] %vm622, %v1967
    %1972 = vst [vmem:[#allocation1] sm:$0xff] %v1905
    %1973 = vst [vmem:[#allocation1 + $0x9] sm:$0xff] %v1906
    %1974 = vst [vmem:[#allocation1 + $0x12] sm:$0xff] %v1952
    %1975 = vst [vmem:[#allocation1 + $0x1b] sm:$0xff] %v1953
    %s1976 = scalar_lea.vmem [#allocation1], 2
    %v1977 = vld [vmem:[%s1976] ss:$9 sm:$0xff]
    %s1979 = scalar_lea.vmem [#allocation3], 7
    %1980 = vst.msk [vmem:[%s1979] ss:$8 sm:$0xf] %vm622, %v1977
    %1981 = vst.msk [vmem:[%s1979] ss:$8 sm:$0x0] %vm622, %v1977
    %1982 = vst [vmem:[#allocation1] sm:$0xff] %v1905
    %1983 = vst [vmem:[#allocation1 + $0x9] sm:$0xff] %v1906
    %1984 = vst [vmem:[#allocation1 + $0x12] sm:$0xff] %v1952
    %1985 = vst [vmem:[#allocation1 + $0x1b] sm:$0xff] %v1953
    %s1986 = scalar_lea.vmem [#allocation1], 4
    %v1987 = vld [vmem:[%s1986] ss:$9 sm:$0xff]
    %s1989 = scalar_lea.vmem [#allocation3], 32
    %1990 = vst.msk [vmem:[%s1989] ss:$8 sm:$0xf] %vm622, %v1987
    %1991 = vst.msk [vmem:[%s1989] ss:$8 sm:$0x0] %vm622, %v1987
    %1992 = vst [vmem:[#allocation1] sm:$0xff] %v1905
    %1993 = vst [vmem:[#allocation1 + $0x9] sm:$0xff] %v1906
    %1994 = vst [vmem:[#allocation1 + $0x12] sm:$0xff] %v1952
    %1995 = vst [vmem:[#allocation1 + $0x1b] sm:$0xff] %v1953
    %s1996 = scalar_lea.vmem [#allocation1], 6
    %v1997 = vld [vmem:[%s1996] ss:$9 sm:$0xff]
    %s1999 = scalar_lea.vmem [#allocation3], 33
    %2000 = vst.msk [vmem:[%s1999] ss:$8 sm:$0xf] %vm622, %v1997
    %2001 = vst.msk [vmem:[%s1999] ss:$8 sm:$0x0] %vm622, %v1997
    %v2004 = vrot.slane %v1907, 1
    %v2005 = vrot.slane %v1908, 1
    %v2006 = vrot.slane %v1908, 7
    %v2007 = vrot.slane %v2004, 6
    %v2008 = vrot.slane %v2005, 5
    %v2009 = vsel %vm613, %v1907, %v2006
    %v2010 = vsel %vm615, %v2007, %v2008
    %v2011 = vsel %vm198, %v2009, %v2010
    %s2013 = scalar_lea.vmem [#allocation3], 34
    %2014 = vst.msk [vmem:[%s2013] ss:$8 sm:$0xf] %vm622, %v2011
    %2015 = vst.msk [vmem:[%s2013] ss:$8 sm:$0x0] %vm622, %v2011
    %v2016 = vld [vmem:[#allocation3] sm:$0xf]
    %v2017 = vld [vmem:[#allocation3 + $0x8] sm:$0xf]
    %v2018 = vld [vmem:[#allocation3 + $0x10] sm:$0xf]
    %v2019 = vld [vmem:[#allocation3 + $0x18] sm:$0xf]
    %v2020 = vld [vmem:[#allocation3] sm:$0x1e]
    %v2021 = vld [vmem:[#allocation3 + $0x8] sm:$0x1e]
    %v2022 = vld [vmem:[#allocation3 + $0x10] sm:$0x1e]
    %v2023 = vld [vmem:[#allocation3 + $0x18] sm:$0x1e]
    %v2028 = vrot.slane %v2020, 1
    %v2029 = vrot.slane %v2021, 1
    %v2030 = vrot.slane %v2022, 1
    %v2031 = vrot.slane %v2023, 1
    %v2036 = vld [vmem:[#allocation3] sm:$0xc0]
    %v2037 = vld [vmem:[#allocation3 + $0x8] sm:$0xc0]
    %v2038 = vld [vmem:[#allocation3 + $0x10] sm:$0xc0]
    %v2039 = vld [vmem:[#allocation3 + $0x18] sm:$0xc0]
    %v2040 = vld [vmem:[#allocation3 + $0x20] sm:$0x3]
    %v2041 = vld [vmem:[#allocation3 + $0x28] sm:$0x3]
    %v2042 = vld [vmem:[#allocation3 + $0x30] sm:$0x3]
    %v2043 = vld [vmem:[#allocation3 + $0x38] sm:$0x3]
    %v2044 = vld [vmem:[#allocation3] sm:$0x80]
    %v2045 = vld [vmem:[#allocation3 + $0x8] sm:$0x80]
    %v2046 = vld [vmem:[#allocation3 + $0x10] sm:$0x80]
    %v2047 = vld [vmem:[#allocation3 + $0x18] sm:$0x80]
    %v2048 = vld [vmem:[#allocation3 + $0x20] sm:$0x7]
    %v2049 = vld [vmem:[#allocation3 + $0x28] sm:$0x7]
    %v2050 = vld [vmem:[#allocation3 + $0x30] sm:$0x7]
    %v2051 = vld [vmem:[#allocation3 + $0x38] sm:$0x7]
    %v2060 = vrot.slane %v2044, 1
    %v2061 = vrot.slane %v2048, 1
    %v2062 = vsel %vm121, %v2060, %v2061
    %v2063 = vrot.slane %v2045, 1
    %v2064 = vrot.slane %v2049, 1
    %v2065 = vsel %vm121, %v2063, %v2064
    %v2066 = vrot.slane %v2046, 1
    %v2067 = vrot.slane %v2050, 1
    %v2068 = vsel %vm121, %v2066, %v2067
    %v2069 = vrot.slane %v2047, 1
    %v2070 = vrot.slane %v2051, 1
    %v2071 = vsel %vm121, %v2069, %v2070
    %vm2080 = vcmask 1045504
    %v2081 = vrot.slane %v2036, 2
    %v2082 = vrot.slane %v2040, 2
    %v2083 = vsel %vm2080, %v2081, %v2082
    %v2084 = vrot.slane %v2037, 2
    %v2085 = vrot.slane %v2041, 2
    %v2086 = vsel %vm2080, %v2084, %v2085
    %v2087 = vrot.slane %v2038, 2
    %v2088 = vrot.slane %v2042, 2
    %v2089 = vsel %vm2080, %v2087, %v2088
    %v2090 = vrot.slane %v2039, 2
    %v2091 = vrot.slane %v2043, 2
    %v2092 = vsel %vm2080, %v2090, %v2091
    %v2093 = vrot.slane %v2062, 2
    %v2094 = vrot.slane %v2061, 2
    %v2095 = vsel %vm2080, %v2093, %v2094
    %v2096 = vrot.slane %v2065, 2
    %v2097 = vrot.slane %v2064, 2
    %v2098 = vsel %vm2080, %v2096, %v2097
    %v2099 = vrot.slane %v2068, 2
    %v2100 = vrot.slane %v2067, 2
    %v2101 = vsel %vm2080, %v2099, %v2100
    %v2102 = vrot.slane %v2071, 2
    %v2103 = vrot.slane %v2070, 2
    %v2104 = vsel %vm2080, %v2102, %v2103
    %vm2113 = vcmask 1043456
    %v2114 = vsel %vm2113, %v2016, %v2083
    %v2115 = vsel %vm2113, %v2017, %v2086
    %v2116 = vsel %vm2113, %v2018, %v2089
    %v2117 = vsel %vm2113, %v2019, %v2092
    %v2118 = vsel %vm2113, %v2028, %v2095
    %v2119 = vsel %vm2113, %v2029, %v2098
    %v2120 = vsel %vm2113, %v2030, %v2101
    %v2121 = vsel %vm2113, %v2031, %v2104
    %v2122 = vld [vmem:[#allocation8] sm:$0xff]
    %v2123 = vld [vmem:[#allocation8 + $0x8] sm:$0xff]
    %v2124 = vld [vmem:[#allocation8 + $0x10] sm:$0xff]
    %v2125 = vld [vmem:[#allocation8 + $0x18] sm:$0xff]
    %v2126 = vld [vmem:[#allocation8 + $0x20] sm:$0xff]
    %v2127 = vld [vmem:[#allocation8 + $0x28] sm:$0xff]
    %v2128 = vld [vmem:[#allocation8 + $0x30] sm:$0xff]
    %v2129 = vld [vmem:[#allocation8 + $0x38] sm:$0xff]
    %v2130 = vld [vmem:[#allocation8 + $0x40] sm:$0xff]
    %v2131 = vld [vmem:[#allocation8 + $0x48] sm:$0xff]
    %v2132 = vld [vmem:[#allocation8 + $0x50] sm:$0xff]
    %v2133 = vld [vmem:[#allocation8 + $0x58] sm:$0xff]
    %v2134 = vld [vmem:[#allocation8 + $0x60] sm:$0xff]
    %v2135 = vld [vmem:[#allocation8 + $0x68] sm:$0xff]
    %v2136 = vld [vmem:[#allocation8 + $0x70] sm:$0xff]
    %v2137 = vld [vmem:[#allocation8 + $0x78] sm:$0xff]
    %v2138 = vld [vmem:[#allocation8 + $0x80] sm:$0xff]
    %v2139 = vld [vmem:[#allocation8 + $0x88] sm:$0xff]
    %v2140 = vld [vmem:[#allocation8 + $0x90] sm:$0xff]
    %v2141 = vld [vmem:[#allocation8 + $0x98] sm:$0xff]
    %v2142 = vld [vmem:[#allocation8 + $0xa0] sm:$0xff]
    %v2143 = vld [vmem:[#allocation8 + $0xa8] sm:$0xff]
    %v2144 = vld [vmem:[#allocation8 + $0xb0] sm:$0xff]
    %v2145 = vld [vmem:[#allocation8 + $0xb8] sm:$0xff]
    %v2146 = vld [vmem:[#allocation8 + $0xc0] sm:$0xff]
    %v2147 = vld [vmem:[#allocation8 + $0xc8] sm:$0xff]
    %v2148 = vld [vmem:[#allocation8 + $0xd0] sm:$0xff]
    %v2149 = vld [vmem:[#allocation8 + $0xd8] sm:$0xff]
    %v2150 = vld [vmem:[#allocation8 + $0xe0] sm:$0xff]
    %v2151 = vld [vmem:[#allocation8 + $0xe8] sm:$0xff]
    %v2152 = vld [vmem:[#allocation8 + $0xf0] sm:$0xff]
    %v2153 = vld [vmem:[#allocation8 + $0xf8] sm:$0xff]
    %v2154 = vld [vmem:[#allocation8 + $0x100] sm:$0xff]
    %v2155 = vld [vmem:[#allocation8 + $0x108] sm:$0xff]
    %v2156 = vld [vmem:[#allocation8 + $0x110] sm:$0xff]
    %v2157 = vld [vmem:[#allocation8 + $0x118] sm:$0xff]
    %v2158 = vld [vmem:[#allocation8 + $0x120] sm:$0xff]
    %v2159 = vld [vmem:[#allocation8 + $0x128] sm:$0xff]
    %v2160 = vld [vmem:[#allocation8 + $0x130] sm:$0xff]
    %v2161 = vld [vmem:[#allocation8 + $0x138] sm:$0xff]
    %v2162 = vld [vmem:[#allocation8 + $0x140] sm:$0xff]
    %v2163 = vld [vmem:[#allocation8 + $0x148] sm:$0xff]
    %v2164 = vld [vmem:[#allocation8 + $0x150] sm:$0xff]
    %v2165 = vld [vmem:[#allocation8 + $0x158] sm:$0xff]
    %v2166 = vld [vmem:[#allocation8 + $0x160] sm:$0xff]
    %v2167 = vld [vmem:[#allocation8 + $0x168] sm:$0xff]
    %v2168 = vld [vmem:[#allocation8 + $0x170] sm:$0xff]
    %v2169 = vld [vmem:[#allocation8 + $0x178] sm:$0xff]
    %v2170 = vld [vmem:[#allocation8 + $0x180] sm:$0xff]
    %v2171 = vld [vmem:[#allocation8 + $0x188] sm:$0xff]
    %v2172 = vld [vmem:[#allocation8 + $0x190] sm:$0xff]
    %v2173 = vld [vmem:[#allocation8 + $0x198] sm:$0xff]
    %v2174 = vld [vmem:[#allocation8 + $0x1a0] sm:$0xff]
    %v2175 = vld [vmem:[#allocation8 + $0x1a8] sm:$0xff]
    %v2176 = vld [vmem:[#allocation8 + $0x1b0] sm:$0xff]
    %v2177 = vld [vmem:[#allocation8 + $0x1b8] sm:$0xff]
    %v2178 = vld [vmem:[#allocation8 + $0x1c0] sm:$0xff]
    %v2179 = vld [vmem:[#allocation8 + $0x1c8] sm:$0xff]
    %v2180 = vld [vmem:[#allocation8 + $0x1d0] sm:$0xff]
    %v2181 = vld [vmem:[#allocation8 + $0x1d8] sm:$0xff]
    %v2182 = vld [vmem:[#allocation8 + $0x1e0] sm:$0xff]
    %v2183 = vld [vmem:[#allocation8 + $0x1e8] sm:$0xff]
    %v2184 = vld [vmem:[#allocation8 + $0x1f0] sm:$0xff]
    %v2185 = vld [vmem:[#allocation8 + $0x1f8] sm:$0xff]
    %v2186 = vld [vmem:[#allocation8 + $0x200] sm:$0xff]
    %v2187 = vld [vmem:[#allocation8 + $0x208] sm:$0xff]
    %v2188 = vld [vmem:[#allocation8 + $0x210] sm:$0xff]
    %v2189 = vld [vmem:[#allocation8 + $0x218] sm:$0xff]
    %v2190 = vld [vmem:[#allocation8 + $0x220] sm:$0xff]
    %v2191 = vld [vmem:[#allocation8 + $0x228] sm:$0xff]
    %v2192 = vld [vmem:[#allocation8 + $0x230] sm:$0xff]
    %v2193 = vld [vmem:[#allocation8 + $0x238] sm:$0xff]
    %v2194 = vld [vmem:[#allocation8 + $0x240] sm:$0xff]
    %v2195 = vld [vmem:[#allocation8 + $0x248] sm:$0xff]
    %v2196 = vld [vmem:[#allocation8 + $0x250] sm:$0xff]
    %v2197 = vld [vmem:[#allocation8 + $0x258] sm:$0xff]
    %v2198 = vld [vmem:[#allocation8 + $0x260] sm:$0xff]
    %v2199 = vld [vmem:[#allocation8 + $0x268] sm:$0xff]
    %v2200 = vld [vmem:[#allocation8 + $0x270] sm:$0xff]
    %v2201 = vld [vmem:[#allocation8 + $0x278] sm:$0xff]
    %v2202 = vld [vmem:[#allocation8 + $0x280] sm:$0xff]
    %v2203 = vld [vmem:[#allocation8 + $0x288] sm:$0xff]
    %v2204 = vld [vmem:[#allocation8 + $0x290] sm:$0xff]
    %v2205 = vld [vmem:[#allocation8 + $0x298] sm:$0xff]
    %v2206 = vld [vmem:[#allocation8 + $0x2a0] sm:$0xff]
    %v2207 = vld [vmem:[#allocation8 + $0x2a8] sm:$0xff]
    %v2208 = vld [vmem:[#allocation8 + $0x2b0] sm:$0xff]
    %v2209 = vld [vmem:[#allocation8 + $0x2b8] sm:$0xff]
    %v2210 = vld [vmem:[#allocation8 + $0x2c0] sm:$0xff]
    %v2211 = vld [vmem:[#allocation8 + $0x2c8] sm:$0xff]
    %v2212 = vld [vmem:[#allocation8 + $0x2d0] sm:$0xff]
    %v2213 = vld [vmem:[#allocation8 + $0x2d8] sm:$0xff]
    %v2214 = vld [vmem:[#allocation8 + $0x2e0] sm:$0xff]
    %v2215 = vld [vmem:[#allocation8 + $0x2e8] sm:$0xff]
    %v2216 = vld [vmem:[#allocation8 + $0x2f0] sm:$0xff]
    %v2217 = vld [vmem:[#allocation8 + $0x2f8] sm:$0xff]
    %v2218 = vld [vmem:[#allocation8 + $0x300] sm:$0xff]
    %v2219 = vld [vmem:[#allocation8 + $0x308] sm:$0xff]
    %v2220 = vld [vmem:[#allocation8 + $0x310] sm:$0xff]
    %v2221 = vld [vmem:[#allocation8 + $0x318] sm:$0xff]
    %v2222 = vld [vmem:[#allocation8 + $0x320] sm:$0xff]
    %v2223 = vld [vmem:[#allocation8 + $0x328] sm:$0xff]
    %v2224 = vld [vmem:[#allocation8 + $0x330] sm:$0xff]
    %v2225 = vld [vmem:[#allocation8 + $0x338] sm:$0xff]
    %v2226 = vld [vmem:[#allocation8 + $0x340] sm:$0xff]
    %v2227 = vld [vmem:[#allocation8 + $0x348] sm:$0xff]
    %v2228 = vld [vmem:[#allocation8 + $0x350] sm:$0xff]
    %v2229 = vld [vmem:[#allocation8 + $0x358] sm:$0xff]
    %v2230 = vld [vmem:[#allocation8 + $0x360] sm:$0xff]
    %v2231 = vld [vmem:[#allocation8 + $0x368] sm:$0xff]
    %v2232 = vld [vmem:[#allocation8 + $0x370] sm:$0xff]
    %v2233 = vld [vmem:[#allocation8 + $0x378] sm:$0xff]
    %v2234 = vld [vmem:[#allocation8 + $0x380] sm:$0xff]
    %v2235 = vld [vmem:[#allocation8 + $0x388] sm:$0xff]
    %v2236 = vld [vmem:[#allocation8 + $0x390] sm:$0xff]
    %v2237 = vld [vmem:[#allocation8 + $0x398] sm:$0xff]
    %v2238 = vld [vmem:[#allocation8 + $0x3a0] sm:$0xff]
    %v2239 = vld [vmem:[#allocation8 + $0x3a8] sm:$0xff]
    %v2240 = vld [vmem:[#allocation8 + $0x3b0] sm:$0xff]
    %v2241 = vld [vmem:[#allocation8 + $0x3b8] sm:$0xff]
    %v2242 = vld [vmem:[#allocation8 + $0x3c0] sm:$0xff]
    %v2243 = vld [vmem:[#allocation8 + $0x3c8] sm:$0xff]
    %v2244 = vld [vmem:[#allocation8 + $0x3d0] sm:$0xff]
    %v2245 = vld [vmem:[#allocation8 + $0x3d8] sm:$0xff]
    %v2246 = vld [vmem:[#allocation8 + $0x3e0] sm:$0xff]
    %v2247 = vld [vmem:[#allocation8 + $0x3e8] sm:$0xff]
    %v2248 = vld [vmem:[#allocation8 + $0x3f0] sm:$0xff]
    %v2249 = vld [vmem:[#allocation8 + $0x3f8] sm:$0xff]
    %2250 = vmatpush.msra.mxu0 %v2137
    %2251 = vmatpush.msra.mxu0 %v2136
    %2252 = vmatpush.msra.mxu0 %v2135
    %2253 = vmatpush.msra.mxu0 %v2134
    %2254 = vmatpush.msra.mxu0 %v2133
    %2255 = vmatpush.msra.mxu0 %v2132
    %2256 = vmatpush.msra.mxu0 %v2131
    %2257 = vmatpush.msra.mxu0 %v2130
    %2258 = vmatpush.msra.mxu0 %v2129
    %2259 = vmatpush.msra.mxu0 %v2128
    %2260 = vmatpush.msra.mxu0 %v2127
    %2261 = vmatpush.msra.mxu0 %v2126
    %2262 = vmatpush.msra.mxu0 %v2125
    %2263 = vmatpush.msra.mxu0 %v2124
    %2264 = vmatpush.msra.mxu0 %v2123
    %2265 = vmatpush.msra.mxu0 %v2122
    %2266 = vmatmul.f32.gmra.mxu0 %v2114
    %v2267 = vpop.f32.mrf.mxu0
    %v2268 = vadd.f32 0.0, %v2267
    %2269 = vdwg.mxu0
    %2270 = vmatpush.msra.mxu0 %v2153
    %2271 = vmatpush.msra.mxu0 %v2152
    %2272 = vmatpush.msra.mxu0 %v2151
    %2273 = vmatpush.msra.mxu0 %v2150
    %2274 = vmatpush.msra.mxu0 %v2149
    %2275 = vmatpush.msra.mxu0 %v2148
    %2276 = vmatpush.msra.mxu0 %v2147
    %2277 = vmatpush.msra.mxu0 %v2146
    %2278 = vmatpush.msra.mxu0 %v2145
    %2279 = vmatpush.msra.mxu0 %v2144
    %2280 = vmatpush.msra.mxu0 %v2143
    %2281 = vmatpush.msra.mxu0 %v2142
    %2282 = vmatpush.msra.mxu0 %v2141
    %2283 = vmatpush.msra.mxu0 %v2140
    %2284 = vmatpush.msra.mxu0 %v2139
    %2285 = vmatpush.msra.mxu0 %v2138
    %2286 = vmatmul.f32.gmra.mxu0 %v2115
    %v2287 = vpop.f32.mrf.mxu0
    %v2288 = vadd.f32 %v2268, %v2287
    %2289 = vdwg.mxu0
    %2290 = vmatpush.msra.mxu0 %v2169
    %2291 = vmatpush.msra.mxu0 %v2168
    %2292 = vmatpush.msra.mxu0 %v2167
    %2293 = vmatpush.msra.mxu0 %v2166
    %2294 = vmatpush.msra.mxu0 %v2165
    %2295 = vmatpush.msra.mxu0 %v2164
    %2296 = vmatpush.msra.mxu0 %v2163
    %2297 = vmatpush.msra.mxu0 %v2162
    %2298 = vmatpush.msra.mxu0 %v2161
    %2299 = vmatpush.msra.mxu0 %v2160
    %2300 = vmatpush.msra.mxu0 %v2159
    %2301 = vmatpush.msra.mxu0 %v2158
    %2302 = vmatpush.msra.mxu0 %v2157
    %2303 = vmatpush.msra.mxu0 %v2156
    %2304 = vmatpush.msra.mxu0 %v2155
    %2305 = vmatpush.msra.mxu0 %v2154
    %2306 = vmatmul.f32.gmra.mxu0 %v2116
    %v2307 = vpop.f32.mrf.mxu0
    %v2308 = vadd.f32 %v2288, %v2307
    %2309 = vdwg.mxu0
    %2310 = vmatpush.msra.mxu0 %v2185
    %2311 = vmatpush.msra.mxu0 %v2184
    %2312 = vmatpush.msra.mxu0 %v2183
    %2313 = vmatpush.msra.mxu0 %v2182
    %2314 = vmatpush.msra.mxu0 %v2181
    %2315 = vmatpush.msra.mxu0 %v2180
    %2316 = vmatpush.msra.mxu0 %v2179
    %2317 = vmatpush.msra.mxu0 %v2178
    %2318 = vmatpush.msra.mxu0 %v2177
    %2319 = vmatpush.msra.mxu0 %v2176
    %2320 = vmatpush.msra.mxu0 %v2175
    %2321 = vmatpush.msra.mxu0 %v2174
    %2322 = vmatpush.msra.mxu0 %v2173
    %2323 = vmatpush.msra.mxu0 %v2172
    %2324 = vmatpush.msra.mxu0 %v2171
    %2325 = vmatpush.msra.mxu0 %v2170
    %2326 = vmatmul.f32.gmra.mxu0 %v2117
    %v2327 = vpop.f32.mrf.mxu0
    %v2328 = vadd.f32 %v2308, %v2327
    %2329 = vdwg.mxu0
    %2330 = vmatpush.msra.mxu0 %v2201
    %2331 = vmatpush.msra.mxu0 %v2200
    %2332 = vmatpush.msra.mxu0 %v2199
    %2333 = vmatpush.msra.mxu0 %v2198
    %2334 = vmatpush.msra.mxu0 %v2197
    %2335 = vmatpush.msra.mxu0 %v2196
    %2336 = vmatpush.msra.mxu0 %v2195
    %2337 = vmatpush.msra.mxu0 %v2194
    %2338 = vmatpush.msra.mxu0 %v2193
    %2339 = vmatpush.msra.mxu0 %v2192
    %2340 = vmatpush.msra.mxu0 %v2191
    %2341 = vmatpush.msra.mxu0 %v2190
    %2342 = vmatpush.msra.mxu0 %v2189
    %2343 = vmatpush.msra.mxu0 %v2188
    %2344 = vmatpush.msra.mxu0 %v2187
    %2345 = vmatpush.msra.mxu0 %v2186
    %2346 = vmatmul.f32.gmra.mxu0 %v2118
    %v2347 = vpop.f32.mrf.mxu0
    %v2348 = vadd.f32 %v2328, %v2347
    %2349 = vdwg.mxu0
    %2350 = vmatpush.msra.mxu0 %v2217
    %2351 = vmatpush.msra.mxu0 %v2216
    %2352 = vmatpush.msra.mxu0 %v2215
    %2353 = vmatpush.msra.mxu0 %v2214
    %2354 = vmatpush.msra.mxu0 %v2213
    %2355 = vmatpush.msra.mxu0 %v2212
    %2356 = vmatpush.msra.mxu0 %v2211
    %2357 = vmatpush.msra.mxu0 %v2210
    %2358 = vmatpush.msra.mxu0 %v2209
    %2359 = vmatpush.msra.mxu0 %v2208
    %2360 = vmatpush.msra.mxu0 %v2207
    %2361 = vmatpush.msra.mxu0 %v2206
    %2362 = vmatpush.msra.mxu0 %v2205
    %2363 = vmatpush.msra.mxu0 %v2204
    %2364 = vmatpush.msra.mxu0 %v2203
    %2365 = vmatpush.msra.mxu0 %v2202
    %2366 = vmatmul.f32.gmra.mxu0 %v2119
    %v2367 = vpop.f32.mrf.mxu0
    %v2368 = vadd.f32 %v2348, %v2367
    %2369 = vdwg.mxu0
    %2370 = vmatpush.msra.mxu0 %v2233
    %2371 = vmatpush.msra.mxu0 %v2232
    %2372 = vmatpush.msra.mxu0 %v2231
    %2373 = vmatpush.msra.mxu0 %v2230
    %2374 = vmatpush.msra.mxu0 %v2229
    %2375 = vmatpush.msra.mxu0 %v2228
    %2376 = vmatpush.msra.mxu0 %v2227
    %2377 = vmatpush.msra.mxu0 %v2226
    %2378 = vmatpush.msra.mxu0 %v2225
    %2379 = vmatpush.msra.mxu0 %v2224
    %2380 = vmatpush.msra.mxu0 %v2223
    %2381 = vmatpush.msra.mxu0 %v2222
    %2382 = vmatpush.msra.mxu0 %v2221
    %2383 = vmatpush.msra.mxu0 %v2220
    %2384 = vmatpush.msra.mxu0 %v2219
    %2385 = vmatpush.msra.mxu0 %v2218
    %2386 = vmatmul.f32.gmra.mxu0 %v2120
    %v2387 = vpop.f32.mrf.mxu0
    %v2388 = vadd.f32 %v2368, %v2387
    %2389 = vdwg.mxu0
    %2390 = vmatpush.msra.mxu0 %v2249
    %2391 = vmatpush.msra.mxu0 %v2248
    %2392 = vmatpush.msra.mxu0 %v2247
    %2393 = vmatpush.msra.mxu0 %v2246
    %2394 = vmatpush.msra.mxu0 %v2245
    %2395 = vmatpush.msra.mxu0 %v2244
    %2396 = vmatpush.msra.mxu0 %v2243
    %2397 = vmatpush.msra.mxu0 %v2242
    %2398 = vmatpush.msra.mxu0 %v2241
    %2399 = vmatpush.msra.mxu0 %v2240
    %2400 = vmatpush.msra.mxu0 %v2239
    %2401 = vmatpush.msra.mxu0 %v2238
    %2402 = vmatpush.msra.mxu0 %v2237
    %2403 = vmatpush.msra.mxu0 %v2236
    %2404 = vmatpush.msra.mxu0 %v2235
    %2405 = vmatpush.msra.mxu0 %v2234
    %2406 = vmatmul.f32.gmra.mxu0 %v2121
    %v2407 = vpop.f32.mrf.mxu0
    %v2408 = vadd.f32 %v2388, %v2407
    %2409 = vdwg.mxu0
    %v2410 = vld [vmem:[%s10] sm:$0xff]
    %v2411 = vld [vmem:[%s10 + $0x8] sm:$0xff]
    %v2412 = vld [vmem:[%s10 + $0x10] sm:$0xff]
    %v2413 = vld [vmem:[%s10 + $0x18] sm:$0xff]
    %v2414 = vrot.slane %v2408, 4
    %v2415 = vadd.f32 %v2408, %v2414
    %v2416 = vrot.slane %v2415, 2
    %v2417 = vadd.f32 %v2415, %v2416
    %v2418 = vrot.slane %v2417, 1
    %v2419 = vadd.f32 %v2417, %v2418
    %2420 = vmatpush.xpose.msra.mxu0 0.0
    %2421 = vmatpush.xpose.msra.mxu0 0.0
    %2422 = vmatpush.xpose.msra.mxu0 0.0
    %2423 = vmatpush.xpose.msra.mxu0 0.0
    %2424 = vmatpush.xpose.msra.mxu0 0.0
    %2425 = vmatpush.xpose.msra.mxu0 0.0
    %2426 = vmatpush.xpose.msra.mxu0 0.0
    %2427 = vmatpush.xpose.msra.mxu0 0.0
    %2428 = vmatpush.xpose.msra.mxu0 0.0
    %2429 = vmatpush.xpose.msra.mxu0 0.0
    %2430 = vmatpush.xpose.msra.mxu0 0.0
    %2431 = vmatpush.xpose.msra.mxu0 0.0
    %2432 = vmatpush.xpose.msra.mxu0 %v2413
    %2433 = vmatpush.xpose.msra.mxu0 %v2412
    %2434 = vmatpush.xpose.msra.mxu0 %v2411
    %2435 = vmatpush.xpose.msra.mxu0 %v2410
    %2436 = vmatmul.f32.gmra.mxu0 %v2419
    %v2437 = vpop.f32.mrf.mxu0
    %v2438 = vadd.f32 0.0, %v2437
    %2439 = vdwg.mxu0
    %v2440 = vmul.f32 %v2408, %v2408
    %v2441 = vrot.slane %v2440, 4
    %v2442 = vadd.f32 %v2440, %v2441
    %v2443 = vrot.slane %v2442, 2
    %v2444 = vadd.f32 %v2442, %v2443
    %v2445 = vrot.slane %v2444, 1
    %v2446 = vadd.f32 %v2444, %v2445
    %2447 = vmatpush.xpose.msra.mxu0 0.0
    %2448 = vmatpush.xpose.msra.mxu0 0.0
    %2449 = vmatpush.xpose.msra.mxu0 0.0
    %2450 = vmatpush.xpose.msra.mxu0 0.0
    %2451 = vmatpush.xpose.msra.mxu0 0.0
    %2452 = vmatpush.xpose.msra.mxu0 0.0
    %2453 = vmatpush.xpose.msra.mxu0 0.0
    %2454 = vmatpush.xpose.msra.mxu0 0.0
    %2455 = vmatpush.xpose.msra.mxu0 0.0
    %2456 = vmatpush.xpose.msra.mxu0 0.0
    %2457 = vmatpush.xpose.msra.mxu0 0.0
    %2458 = vmatpush.xpose.msra.mxu0 0.0
    %2459 = vmatpush.xpose.msra.mxu0 %v2413
    %2460 = vmatpush.xpose.msra.mxu0 %v2412
    %2461 = vmatpush.xpose.msra.mxu0 %v2411
    %2462 = vmatpush.xpose.msra.mxu0 %v2410
    %2463 = vmatmul.f32.gmra.mxu0 %v2446
    %v2464 = vpop.f32.mrf.mxu0
    %v2465 = vadd.f32 0.0, %v2464
    %2466 = vdwg.mxu0
    %v2467 = vrcp.pop 32.0
    %v2468 = vmul.f32 32.0, %v2467
    %v2469 = vsub.f32 1.0, %v2468
    %v2470 = vmul.f32 %v2467, %v2469
    %v2471 = vadd.f32 %v2467, %v2470
    %vm2472 = vweird.f32 %v2467
    %v2473 = vsel %vm2472, %v2467, %v2471
    %v2474 = vmul.f32 %v2438, %v2473
    %v2475 = vmul.f32 %v2465, %v2473
    %v2476 = vmul.f32 %v2474, %v2474
    %v2477 = vsub.f32 %v2475, %v2476
    %v2478 = vld [vmem:[%s7] sm:$0x1]
    %v2479 = vadd.f32 %v2477, 1e-05
    %v2480 = vrsqrt.pop %v2479
    %v2481 = vmul.f32 %v2480, %v2479
    %v2482 = vmul.f32 %v2481, %v2480
    %v2483 = vmul.f32 0.5, %v2482
    %v2484 = vsub.f32 1.5, %v2483
    %v2485 = vmul.f32 %v2480, %v2484
    %vm2486 = vweird.f32 %v2479
    %vm2487 = vweird.f32 %v2480
    %vm2488 = vmor %vm2486, %vm2487
    %v2489 = vsel %vm2488, %v2480, %v2485
    %v2490 = vmul.f32 %v2478, %v2489
    %v2491 = vld [vmem:[%s8] sm:$0x1]
    %v2492 = vmul.f32 %v2474, %v2490
    %v2493 = vsub.f32 %v2491, %v2492
    %vm2494 = vcmask 261120
    %v2496 = vsel %vm2494, %v2490, 0
    %2498 = vmatpush.msra.mxu0 0.0
    %2499 = vmatpush.msra.mxu0 0.0
    %2500 = vmatpush.msra.mxu0 0.0
    %2501 = vmatpush.msra.mxu0 0.0
    %2502 = vmatpush.msra.mxu0 0.0
    %2503 = vmatpush.msra.mxu0 0.0
    %2504 = vmatpush.msra.mxu0 0.0
    %2505 = vmatpush.msra.mxu0 0.0
    %2506 = vmatpush.msra.mxu0 0.0
    %2507 = vmatpush.msra.mxu0 0.0
    %2508 = vmatpush.msra.mxu0 0.0
    %2509 = vmatpush.msra.mxu0 0.0
    %2510 = vmatpush.msra.mxu0 %v2413
    %2511 = vmatpush.msra.mxu0 %v2412
    %2512 = vmatpush.msra.mxu0 %v2411
    %2513 = vmatpush.msra.mxu0 %v2410
    %2514 = vmatmul.f32.gmra.mxu0 %v2496
    %v2515 = vpop.f32.mrf.mxu0
    %v2516 = vadd.f32 0.0, %v2515
    %2517 = vdwg.mxu0
    %v2519 = vsel %vm2494, %v2493, 0
    %2521 = vmatpush.msra.mxu0 0.0
    %2522 = vmatpush.msra.mxu0 0.0
    %2523 = vmatpush.msra.mxu0 0.0
    %2524 = vmatpush.msra.mxu0 0.0
    %2525 = vmatpush.msra.mxu0 0.0
    %2526 = vmatpush.msra.mxu0 0.0
    %2527 = vmatpush.msra.mxu0 0.0
    %2528 = vmatpush.msra.mxu0 0.0
    %2529 = vmatpush.msra.mxu0 0.0
    %2530 = vmatpush.msra.mxu0 0.0
    %2531 = vmatpush.msra.mxu0 0.0
    %2532 = vmatpush.msra.mxu0 0.0
    %2533 = vmatpush.msra.mxu0 %v2413
    %2534 = vmatpush.msra.mxu0 %v2412
    %2535 = vmatpush.msra.mxu0 %v2411
    %2536 = vmatpush.msra.mxu0 %v2410
    %2537 = vmatmul.f32.gmra.mxu0 %v2519
    %v2538 = vpop.f32.mrf.mxu0
    %v2539 = vadd.f32 0.0, %v2538
    %2540 = vdwg.mxu0
    %v2541 = vperm.slane %v2516, 0
    %v2542 = vmul.f32 %v2408, %v2541
    %v2543 = vperm.slane %v2539, 0
    %v2544 = vadd.f32 %v2542, %v2543
    %v2545 = vmul.f32 %v2544, 0.2
    %v2546 = vmax.f32 %v2544, %v2545
    %v2548 = vrot.slane %v2546, 1
    %v2550 = vrot.slane %v2546, 2
    %v2552 = vrot.slane %v2546, 3
    %v2554 = vrot.slane %v2548, 3
    %v2555 = vrot.slane %v2550, 3
    %v2556 = vrot.slane %v2552, 3
    %v2560 = vsel %vm613, %v2546, %v2552
    %v2561 = vsel %vm613, %v2548, %v2554
    %v2562 = vsel %vm613, %v2550, %v2555
    %v2563 = vsel %vm613, %v2552, %v2556
    %v2564 = vld [vmem:[%s4] sm:$0xff]
    %v2565 = vld [vmem:[%s4 + $0x8] sm:$0xff]
    %v2566 = vld [vmem:[%s4 + $0x10] sm:$0xff]
    %v2567 = vld [vmem:[%s4 + $0x18] sm:$0xff]
    %v2568 = vld [vmem:[%s4 + $0x20] sm:$0xff]
    %v2569 = vld [vmem:[%s4 + $0x28] sm:$0xff]
    %v2570 = vld [vmem:[%s4 + $0x30] sm:$0xff]
    %v2571 = vld [vmem:[%s4 + $0x38] sm:$0xff]
    %v2572 = vld [vmem:[%s4 + $0x40] sm:$0xff]
    %v2573 = vld [vmem:[%s4 + $0x48] sm:$0xff]
    %v2574 = vld [vmem:[%s4 + $0x50] sm:$0xff]
    %v2575 = vld [vmem:[%s4 + $0x58] sm:$0xff]
    %v2576 = vld [vmem:[%s4 + $0x60] sm:$0xff]
    %v2577 = vld [vmem:[%s4 + $0x68] sm:$0xff]
    %v2578 = vld [vmem:[%s4 + $0x70] sm:$0xff]
    %v2579 = vld [vmem:[%s4 + $0x78] sm:$0xff]
    %v2580 = vld [vmem:[%s4 + $0x80] sm:$0xff]
    %v2581 = vld [vmem:[%s4 + $0x88] sm:$0xff]
    %v2582 = vld [vmem:[%s4 + $0x90] sm:$0xff]
    %v2583 = vld [vmem:[%s4 + $0x98] sm:$0xff]
    %v2584 = vld [vmem:[%s4 + $0xa0] sm:$0xff]
    %v2585 = vld [vmem:[%s4 + $0xa8] sm:$0xff]
    %v2586 = vld [vmem:[%s4 + $0xb0] sm:$0xff]
    %v2587 = vld [vmem:[%s4 + $0xb8] sm:$0xff]
    %v2588 = vld [vmem:[%s4 + $0xc0] sm:$0xff]
    %v2589 = vld [vmem:[%s4 + $0xc8] sm:$0xff]
    %v2590 = vld [vmem:[%s4 + $0xd0] sm:$0xff]
    %v2591 = vld [vmem:[%s4 + $0xd8] sm:$0xff]
    %v2592 = vld [vmem:[%s4 + $0xe0] sm:$0xff]
    %v2593 = vld [vmem:[%s4 + $0xe8] sm:$0xff]
    %v2594 = vld [vmem:[%s4 + $0xf0] sm:$0xff]
    %v2595 = vld [vmem:[%s4 + $0xf8] sm:$0xff]
    %v2596 = vld [vmem:[%s4 + $0x100] sm:$0xff]
    %v2597 = vld [vmem:[%s4 + $0x108] sm:$0xff]
    %v2598 = vld [vmem:[%s4 + $0x110] sm:$0xff]
    %v2599 = vld [vmem:[%s4 + $0x118] sm:$0xff]
    %v2600 = vld [vmem:[%s4 + $0x120] sm:$0xff]
    %v2601 = vld [vmem:[%s4 + $0x128] sm:$0xff]
    %v2602 = vld [vmem:[%s4 + $0x130] sm:$0xff]
    %v2603 = vld [vmem:[%s4 + $0x138] sm:$0xff]
    %v2604 = vld [vmem:[%s4 + $0x140] sm:$0xff]
    %v2605 = vld [vmem:[%s4 + $0x148] sm:$0xff]
    %v2606 = vld [vmem:[%s4 + $0x150] sm:$0xff]
    %v2607 = vld [vmem:[%s4 + $0x158] sm:$0xff]
    %v2608 = vld [vmem:[%s4 + $0x160] sm:$0xff]
    %v2609 = vld [vmem:[%s4 + $0x168] sm:$0xff]
    %v2610 = vld [vmem:[%s4 + $0x170] sm:$0xff]
    %v2611 = vld [vmem:[%s4 + $0x178] sm:$0xff]
    %v2612 = vld [vmem:[%s4 + $0x180] sm:$0xff]
    %v2613 = vld [vmem:[%s4 + $0x188] sm:$0xff]
    %v2614 = vld [vmem:[%s4 + $0x190] sm:$0xff]
    %v2615 = vld [vmem:[%s4 + $0x198] sm:$0xff]
    %v2616 = vld [vmem:[%s4 + $0x1a0] sm:$0xff]
    %v2617 = vld [vmem:[%s4 + $0x1a8] sm:$0xff]
    %v2618 = vld [vmem:[%s4 + $0x1b0] sm:$0xff]
    %v2619 = vld [vmem:[%s4 + $0x1b8] sm:$0xff]
    %v2620 = vld [vmem:[%s4 + $0x1c0] sm:$0xff]
    %v2621 = vld [vmem:[%s4 + $0x1c8] sm:$0xff]
    %v2622 = vld [vmem:[%s4 + $0x1d0] sm:$0xff]
    %v2623 = vld [vmem:[%s4 + $0x1d8] sm:$0xff]
    %v2624 = vld [vmem:[%s4 + $0x1e0] sm:$0xff]
    %v2625 = vld [vmem:[%s4 + $0x1e8] sm:$0xff]
    %v2626 = vld [vmem:[%s4 + $0x1f0] sm:$0xff]
    %v2627 = vld [vmem:[%s4 + $0x1f8] sm:$0xff]
    %2628 = vmatpush.msra.mxu0 %v2579
    %2629 = vmatpush.msra.mxu0 %v2578
    %2630 = vmatpush.msra.mxu0 %v2577
    %2631 = vmatpush.msra.mxu0 %v2576
    %2632 = vmatpush.msra.mxu0 %v2575
    %2633 = vmatpush.msra.mxu0 %v2574
    %2634 = vmatpush.msra.mxu0 %v2573
    %2635 = vmatpush.msra.mxu0 %v2572
    %2636 = vmatpush.msra.mxu0 %v2571
    %2637 = vmatpush.msra.mxu0 %v2570
    %2638 = vmatpush.msra.mxu0 %v2569
    %2639 = vmatpush.msra.mxu0 %v2568
    %2640 = vmatpush.msra.mxu0 %v2567
    %2641 = vmatpush.msra.mxu0 %v2566
    %2642 = vmatpush.msra.mxu0 %v2565
    %2643 = vmatpush.msra.mxu0 %v2564
    %2644 = vmatmul.f32.gmra.mxu0 %v2560
    %v2645 = vpop.f32.mrf.mxu0
    %v2646 = vadd.f32 0.0, %v2645
    %2647 = vdwg.mxu0
    %2648 = vmatpush.msra.mxu0 %v2595
    %2649 = vmatpush.msra.mxu0 %v2594
    %2650 = vmatpush.msra.mxu0 %v2593
    %2651 = vmatpush.msra.mxu0 %v2592
    %2652 = vmatpush.msra.mxu0 %v2591
    %2653 = vmatpush.msra.mxu0 %v2590
    %2654 = vmatpush.msra.mxu0 %v2589
    %2655 = vmatpush.msra.mxu0 %v2588
    %2656 = vmatpush.msra.mxu0 %v2587
    %2657 = vmatpush.msra.mxu0 %v2586
    %2658 = vmatpush.msra.mxu0 %v2585
    %2659 = vmatpush.msra.mxu0 %v2584
    %2660 = vmatpush.msra.mxu0 %v2583
    %2661 = vmatpush.msra.mxu0 %v2582
    %2662 = vmatpush.msra.mxu0 %v2581
    %2663 = vmatpush.msra.mxu0 %v2580
    %2664 = vmatmul.f32.gmra.mxu0 %v2561
    %v2665 = vpop.f32.mrf.mxu0
    %v2666 = vadd.f32 %v2646, %v2665
    %2667 = vdwg.mxu0
    %2668 = vmatpush.msra.mxu0 %v2611
    %2669 = vmatpush.msra.mxu0 %v2610
    %2670 = vmatpush.msra.mxu0 %v2609
    %2671 = vmatpush.msra.mxu0 %v2608
    %2672 = vmatpush.msra.mxu0 %v2607
    %2673 = vmatpush.msra.mxu0 %v2606
    %2674 = vmatpush.msra.mxu0 %v2605
    %2675 = vmatpush.msra.mxu0 %v2604
    %2676 = vmatpush.msra.mxu0 %v2603
    %2677 = vmatpush.msra.mxu0 %v2602
    %2678 = vmatpush.msra.mxu0 %v2601
    %2679 = vmatpush.msra.mxu0 %v2600
    %2680 = vmatpush.msra.mxu0 %v2599
    %2681 = vmatpush.msra.mxu0 %v2598
    %2682 = vmatpush.msra.mxu0 %v2597
    %2683 = vmatpush.msra.mxu0 %v2596
    %2684 = vmatmul.f32.gmra.mxu0 %v2562
    %v2685 = vpop.f32.mrf.mxu0
    %v2686 = vadd.f32 %v2666, %v2685
    %2687 = vdwg.mxu0
    %2688 = vmatpush.msra.mxu0 %v2627
    %2689 = vmatpush.msra.mxu0 %v2626
    %2690 = vmatpush.msra.mxu0 %v2625
    %2691 = vmatpush.msra.mxu0 %v2624
    %2692 = vmatpush.msra.mxu0 %v2623
    %2693 = vmatpush.msra.mxu0 %v2622
    %2694 = vmatpush.msra.mxu0 %v2621
    %2695 = vmatpush.msra.mxu0 %v2620
    %2696 = vmatpush.msra.mxu0 %v2619
    %2697 = vmatpush.msra.mxu0 %v2618
    %2698 = vmatpush.msra.mxu0 %v2617
    %2699 = vmatpush.msra.mxu0 %v2616
    %2700 = vmatpush.msra.mxu0 %v2615
    %2701 = vmatpush.msra.mxu0 %v2614
    %2702 = vmatpush.msra.mxu0 %v2613
    %2703 = vmatpush.msra.mxu0 %v2612
    %2704 = vmatmul.f32.gmra.mxu0 %v2563
    %v2705 = vpop.f32.mrf.mxu0
    %v2706 = vadd.f32 %v2686, %v2705
    %2707 = vdwg.mxu0
    %v2708 = vsub.f32 0.0, %v2706
    %v2709 = vmul.f32 %v2708, 1.442695
    %v2710 = vpow.pop %v2709
    %v2711 = vadd.f32 %v2710, 1.0
    %v2712 = vrcp.pop %v2711
    %v2713 = vmul.f32 %v2711, %v2712
    %v2714 = vsub.f32 1.0, %v2713
    %v2715 = vmul.f32 %v2712, %v2714
    %v2716 = vadd.f32 %v2712, %v2715
    %vm2717 = vweird.f32 %v2711
    %vm2718 = vweird.f32 %v2712
    %vm2719 = vmor %vm2717, %vm2718
    %v2720 = vsel %vm2719, %v2712, %v2716
    %v2721 = vand.u32 2147483647, %v2711
    %vm2722 = vcmp.eq.f32.partialorder %v2721, 8.507059e+37
    %v2723 = vand.u32 %v2711, 2147483648
    %v2724 = vor.u32 1.1754944e-38, %v2723
    %v2725 = vsel %vm2722, %v2724, %v2720
    %v2726 = vmul.f32 1.0, %v2725
    %2727 = vst [vmem:[%s11] sm:$0x3] %v2726
    // Predicated region
    $region58: #{discriminator_forward.1} parent=1 // pred_check
      _
    $region59: #{discriminator_forward.1} parent=1 // pred_check_branch
      %2729 = sbr.rel (0) target = $region61
    $region60: #{discriminator_forward.1} parent=1 // pred_region
      _
    $region61: #{discriminator_forward.1} parent=1 // pred_fallthru
      _
    // Predicated region
    $region62: #{discriminator_forward.1} parent=1 // pred_check
      _
    $region63: #{discriminator_forward.1} parent=1 // pred_check_branch
      %2731 = sbr.rel (0) target = $region65
    $region64: #{discriminator_forward.1} parent=1 // pred_region
      _
    $region65: #{discriminator_forward.1} parent=1 // pred_fallthru
      _
    %2732 = vsyncpa [#allocation5], 1
    %2733 = vsyncpa [#allocation7], 1

</llo_original>
